<compile_context>
chip_gen: v5e
topology: v5e:2x2
jax: 0.10.0
libtpu: 0.0.40
codegen_flags: <defaults>
</compile_context>

<pallas_src>
import numpy as np
import jax
import jax.numpy as jnp
from jax import lax
from jax.experimental import pallas as pl
from jax.experimental.pallas import tpu as pltpu

BATCH = 2
SEQ = 14                    # hardcoded by __reshape_after_conv__
IMG_H, IMG_W = 16, 8        # hardcoded by __reshape_before_conv__
EMBED = IMG_H * IMG_W       # 128
NUM_LABELS = 26
L_SUB = 32                  # label dim padded for sublane axes
L_LANE = 128                # label dim padded for lane axes
TPAD = 16                   # per-batch time axis padded to 16 (bp row = b*16 + t)
NEG = -1e30                 # "minus infinity" for padded labels (finite: no inf-inf NaNs)

# constant-slab row offsets (all sublane-aligned multiples of 8)
R_WF = 0            # (128,128) fused emission operator, label cols >= 26 zero
R_WFT = 128         # (32,128)  its transpose restricted to 32 label rows
R_TC = 160          # (32,128)  transitions  Tc[i_prev, j_cur]
R_TR = 192          # (32,128)  transitions  Tr[j_cur, i_prev]
R_BROW = 224        # (1,128)   emission bias, labels >= 26 set to NEG (rows 225..231 unused)
R_BCOL = 232        # (32,128)  emission bias broadcast across lanes (rows = labels)
CONST_ROWS = 264


def conv_operator_matrix(w: np.ndarray, H: int, W: int) -> np.ndarray:
    """Dense (H*W, H*W) matrix equivalent to a same-padded single-channel 2D conv."""
    k = w.shape[0]
    p = k // 2
    M = np.zeros((H * W, H * W), dtype=np.float32)
    for r in range(H):
        for c in range(W):
            o = r * W + c
            for di in range(k):
                for dj in range(k):
                    rr, cc = r + di - p, c + dj - p
                    if 0 <= rr < H and 0 <= cc < W:
                        M[o, rr * W + cc] += float(w[di, dj])
    return M


def build_crf_constants(conv_w1, conv_b1, conv_w2, conv_b2, params) -> jnp.ndarray:
    """Build the single (264,128) f32 constant slab ONCE (pure numpy, cache and reuse)."""
    w1 = np.asarray(conv_w1, np.float32)
    w2 = np.asarray(conv_w2, np.float32)
    b1 = float(np.asarray(conv_b1).reshape(-1)[0])
    b2 = float(np.asarray(conv_b2).reshape(-1)[0])
    p = np.asarray(params, np.float32)

    M1 = conv_operator_matrix(w1, IMG_H, IMG_W)
    M2 = conv_operator_matrix(w2, IMG_H, IMG_W)
    Wx = p[:NUM_LABELS * EMBED].reshape(NUM_LABELS, EMBED)
    Tm = p[NUM_LABELS * EMBED:].reshape(NUM_LABELS, NUM_LABELS)

    # fuse conv1 -> conv2 -> emission projection into one (128, 26) operator + bias
    Wf = M1.T @ (M2.T @ Wx.T)                                  # (128, 26)
    ones = np.ones((EMBED,), np.float32)
    bf = b1 * (Wx @ (M2 @ ones)) + b2 * (Wx @ ones)            # (26,)

    slab = np.zeros((CONST_ROWS, L_LANE), np.float32)
    slab[R_WF:R_WF + EMBED, :NUM_LABELS] = Wf                              # Wf_pad
    slab[R_WFT:R_WFT + NUM_LABELS, :] = Wf.T                               # WfT (rows 26..31 zero)
    slab[R_TC:R_TC + NUM_LABELS, :NUM_LABELS] = Tm                         # Tc[i, j] = T[i, j]
    slab[R_TR:R_TR + NUM_LABELS, :NUM_LABELS] = Tm.T                       # Tr[j, i] = T[i, j]
    slab[R_BROW, :] = NEG
    slab[R_BROW, :NUM_LABELS] = bf                                         # bias (labels on lanes)
    slab[R_BCOL:R_BCOL + L_SUB, :] = NEG
    slab[R_BCOL:R_BCOL + NUM_LABELS, :] = bf[:, None]                      # bias (labels on sublanes)
    return jnp.asarray(slab)


def crf_fused_kernel(x_ref, xT_ref, const_ref, out_ref, bp_vmem, bp_smem, dma_sem):
    """Fused emission matmuls + Viterbi forward recursion + scalar SMEM backtrack.

    x_ref   : (B*16, 128) flattened word images, row n = b*16 + t (t >= SEQ rows are padding)
    xT_ref  : (128, B*16) transpose of x
    const_ref: (264, 128) constant slab (see R_* offsets)
    out_ref : (B, 16)    int32 SMEM output, decoded labels in columns 0..SEQ-1
    bp_vmem : (B*16, 128) int32 VMEM scratch: backpointer rows (+ terminal argmax in row b*16)
    bp_smem : (B*16, 128) int32 SMEM scratch: DMA'd copy of bp_vmem for the scalar backtrack
    dma_sem : DMA semaphore for the VMEM->SMEM copy
    """
    B = out_ref.shape[0]

    # ---- constant operands: static sublane slices of the single slab ----
    Wf = const_ref[R_WF:R_WF + EMBED, :]                       # (128, 128)
    WfT = const_ref[R_WFT:R_WFT + L_SUB, :]                    # (32, 128)
    Tc = const_ref[R_TC:R_TC + L_SUB, :]                       # (32, 128)
    Tr = const_ref[R_TR:R_TR + L_SUB, :]                       # (32, 128)
    brow = const_ref[R_BROW:R_BROW + 1, :]                     # (1, 128)
    bcol = const_ref[R_BCOL:R_BCOL + L_SUB, :][:, 0:1]         # (32, 1)

    # ---- emissions in both layouts (MXU is otherwise idle; both matmuls are tiny) ----
    emis = jnp.dot(x_ref[...], Wf,
                   preferred_element_type=jnp.float32) + brow          # (B*16, 128) labels on lanes
    emisT = jnp.dot(WfT, xT_ref[...],
                    preferred_element_type=jnp.float32) + bcol         # (32, B*16)  labels on sublanes

    sub_iota = lax.broadcasted_iota(jnp.int32, (L_SUB, L_LANE), 0)     # prev-label ids
    lane_iota = lax.broadcasted_iota(jnp.int32, (1, L_LANE), 1)        # label ids

    # ---- forward max-plus recursion: the B independent chains interleaved per step ----
    delta_row = [emis[b * TPAD:b * TPAD + 1, :] for b in range(B)]     # (1,128) labels on lanes
    delta_col = [emisT[:, b * TPAD:b * TPAD + 1] for b in range(B)]    # (32,1)  labels on sublanes

    for t in range(1, SEQ):
        for b in range(B):
            n = b * TPAD + t
            # column-input form: cand[i, j] = delta[i] + T[i, j]; reduce over sublanes (i)
            cand_c = delta_col[b] + Tc                                  # (32, 128)
            best_row = jnp.max(cand_c, axis=0, keepdims=True)           # (1, 128)
            arg_row = jnp.min(jnp.where(cand_c == best_row, sub_iota, L_SUB),
                              axis=0, keepdims=True)                    # (1, 128) int32
            bp_vmem[n:n + 1, :] = arg_row
            # row-input form: cand[j, i] = delta[i] + T[i, j]; reduce over lanes (i)
            cand_r = delta_row[b] + Tr                                   # (32, 128)
            best_col = jnp.max(cand_r, axis=1, keepdims=True)            # (32, 1)

            delta_row[b] = best_row + emis[n:n + 1, :]
            delta_col[b] = best_col + emisT[:, n:n + 1]

    # ---- terminal argmax per chain, staged into the (unused) row b*16 of the bp buffer ----
    for b in range(B):
        fin = jnp.max(delta_row[b], axis=1, keepdims=True)               # (1, 1)
        y0 = jnp.min(jnp.where(delta_row[b] == fin, lane_iota, L_LANE),
                     axis=1, keepdims=True)                              # (1, 1) int32
        bp_vmem[b * TPAD:b * TPAD + 1, :] = jnp.broadcast_to(y0, (1, L_LANE))

    # ---- one DMA moves all backpointers VMEM -> SMEM; backtrack is pure scalar work ----
    cp = pltpu.make_async_copy(bp_vmem, bp_smem, dma_sem)
    cp.start()
    cp.wait()
    for b in range(B):
        y = bp_smem[b * TPAD, 0]                 # terminal argmax
        out_ref[b, SEQ - 1] = y
        for t in range(SEQ - 1, 0, -1):
            y = bp_smem[b * TPAD + t, y]         # scalar dynamic-indexed load
            out_ref[b, t - 1] = y
        for t in range(SEQ, TPAD):               # keep the padded tail defined
            out_ref[b, t] = 0


def _crf_forward(X, const_slab):
    """X: (B, 14, 128) word-image features; const_slab: prebuilt (264, 128) constant slab."""
    B = X.shape[0]
    NP = B * TPAD
    # glue: torch.reshape(X, (B*14, 1, 16, 8)) == row-major flatten of each word image;
    # pad the time axis to 16 so row index is b*16 + t.
    xp = jnp.zeros((B, TPAD, EMBED), jnp.float32).at[:, :SEQ, :].set(X.astype(jnp.float32))
    xp = xp.reshape(NP, EMBED)
    xT = xp.T

    vm = pl.BlockSpec(memory_space=pltpu.MemorySpace.VMEM)
    pred = pl.pallas_call(
        crf_fused_kernel,
        out_shape=jax.ShapeDtypeStruct((B, TPAD), jnp.int32),
        in_specs=[vm, vm, vm],
        out_specs=pl.BlockSpec(memory_space=pltpu.MemorySpace.SMEM),
        scratch_shapes=[
            pltpu.VMEM((NP, L_LANE), jnp.int32),     # backpointer rows (vector stores)
            pltpu.SMEM((NP, L_LANE), jnp.int32),     # backpointers for the scalar backtrack
            pltpu.SemaphoreType.DMA,                 # VMEM -> SMEM copy completion
        ],
        cost_estimate=pl.CostEstimate(
            flops=2 * NP * EMBED * L_LANE + 2 * L_SUB * EMBED * NP,
            transcendentals=0,
            bytes_accessed=2 * NP * EMBED * 4 + CONST_ROWS * L_LANE * 4 + B * TPAD * 4,
        ),
    )(xp, xT, const_slab)
    return pred[:, :SEQ]


crf_forward = jax.jit(_crf_forward)


if __name__ == "__main__":
    key = jax.random.PRNGKey(0)
    kx, k1, k2, k3, k4, k5 = jax.random.split(key, 6)

    # input X: (batch, 14, 128) — what CRF.forward's reshapes imply
    X = jax.random.normal(kx, (BATCH, SEQ, EMBED), jnp.float32)

    # deterministic parameter init (module's nn.Parameter is zeros -> degenerate decode,
    # so use small random values instead; shapes follow __init__)
    conv_w1 = jax.random.normal(k1, (5, 5), jnp.float32) * 0.2
    conv_b1 = jax.random.normal(k2, (1,), jnp.float32) * 0.1
    conv_w2 = jax.random.normal(k3, (3, 3), jnp.float32) * 0.2
    conv_b2 = jax.random.normal(k4, (1,), jnp.float32) * 0.1
    params = jax.random.normal(
        k5, (NUM_LABELS * EMBED + NUM_LABELS ** 2,), jnp.float32) * 0.1

    # constant operand slab is built ONCE and reused across calls
    const_slab = build_crf_constants(conv_w1, conv_b1, conv_w2, conv_b2, params)

    pred = crf_forward(X, const_slab)
    pred = jax.block_until_ready(pred)

    assert pred.shape == (BATCH, SEQ) and pred.dtype == jnp.int32
    assert bool(jnp.all((pred >= 0) & (pred < NUM_LABELS)))
    print("KERNEL_OK")
</pallas_src>

<mosaic_0001>
module attributes {stable_mosaic.version = 11 : i64} {
  func.func @crf_fused_kernel(%arg0: memref<32x128xf32, #tpu.memory_space<vmem>>, %arg1: memref<128x32xf32, #tpu.memory_space<vmem>>, %arg2: memref<264x128xf32, #tpu.memory_space<vmem>>, %arg3: memref<2x16xi32, #tpu.memory_space<smem>>, %arg4: memref<32x128xi32, #tpu.memory_space<vmem>>, %arg5: memref<32x128xi32, #tpu.memory_space<smem>>, %arg6: memref<!tpu.dma_semaphore, #tpu.memory_space<semaphore_mem>>) attributes {dimension_semantics = [], scalar_prefetch = 0 : i64, scratch_operands = 3 : i64, tpu.core_type = #tpu.core_type<tc>} {
    %c0 = arith.constant 0 : index
    %c0_0 = arith.constant 0 : index
    %0 = vector.load %arg2[%c0, %c0_0] : memref<264x128xf32, #tpu.memory_space<vmem>>, vector<128x128xf32>
    %c128 = arith.constant 128 : index
    %c0_1 = arith.constant 0 : index
    %1 = vector.load %arg2[%c128, %c0_1] : memref<264x128xf32, #tpu.memory_space<vmem>>, vector<32x128xf32>
    %c160 = arith.constant 160 : index
    %c0_2 = arith.constant 0 : index
    %2 = vector.load %arg2[%c160, %c0_2] : memref<264x128xf32, #tpu.memory_space<vmem>>, vector<32x128xf32>
    %c192 = arith.constant 192 : index
    %c0_3 = arith.constant 0 : index
    %3 = vector.load %arg2[%c192, %c0_3] : memref<264x128xf32, #tpu.memory_space<vmem>>, vector<32x128xf32>
    %c224 = arith.constant 224 : index
    %c0_4 = arith.constant 0 : index
    %4 = vector.load %arg2[%c224, %c0_4] : memref<264x128xf32, #tpu.memory_space<vmem>>, vector<1x128xf32>
    %c232 = arith.constant 232 : index
    %c0_5 = arith.constant 0 : index
    %5 = vector.load %arg2[%c232, %c0_5] : memref<264x128xf32, #tpu.memory_space<vmem>>, vector<32x128xf32>
    %6 = vector.extract_strided_slice %5 {offsets = [0, 0], sizes = [32, 1], strides = [1, 1]} : vector<32x128xf32> to vector<32x1xf32>
    %c0_6 = arith.constant 0 : index
    %c0_7 = arith.constant 0 : index
    %7 = vector.load %arg0[%c0_6, %c0_7] : memref<32x128xf32, #tpu.memory_space<vmem>>, vector<32x128xf32>
    %cst = arith.constant dense<0.000000e+00> : vector<32x128xf32>
    %8 = tpu.matmul %7, %0, %cst {dimension_numbers = #tpu.dot_dimension_numbers<[1], [0], [0], [1], [0, 0, 1, 1], [], []>} : vector<32x128xf32>, vector<128x128xf32>, vector<32x128xf32> -> vector<32x128xf32>
    %9 = vector.broadcast %4 : vector<1x128xf32> to vector<32x128xf32>
    %10 = arith.addf %8, %9 : vector<32x128xf32>
    %c0_8 = arith.constant 0 : index
    %c0_9 = arith.constant 0 : index
    %11 = vector.load %arg1[%c0_8, %c0_9] : memref<128x32xf32, #tpu.memory_space<vmem>>, vector<128x32xf32>
    %cst_10 = arith.constant dense<0.000000e+00> : vector<32x32xf32>
    %12 = tpu.matmul %1, %11, %cst_10 {dimension_numbers = #tpu.dot_dimension_numbers<[1], [0], [0], [1], [0, 0, 1, 1], [], []>} : vector<32x128xf32>, vector<128x32xf32>, vector<32x32xf32> -> vector<32x32xf32>
    %13 = vector.broadcast %6 : vector<32x1xf32> to vector<32x32xf32>
    %14 = arith.addf %12, %13 : vector<32x32xf32>
    %15 = tpu.iota {dimensions = array<i32: 0>} : vector<32x128xi32>
    %16 = tpu.iota {dimensions = array<i32: 1>} : vector<1x128xi32>
    %17 = vector.extract_strided_slice %10 {offsets = [0, 0], sizes = [1, 128], strides = [1, 1]} : vector<32x128xf32> to vector<1x128xf32>
    %18 = vector.extract_strided_slice %10 {offsets = [16, 0], sizes = [1, 128], strides = [1, 1]} : vector<32x128xf32> to vector<1x128xf32>
    %19 = vector.extract_strided_slice %14 {offsets = [0, 0], sizes = [32, 1], strides = [1, 1]} : vector<32x32xf32> to vector<32x1xf32>
    %20 = vector.extract_strided_slice %14 {offsets = [0, 16], sizes = [32, 1], strides = [1, 1]} : vector<32x32xf32> to vector<32x1xf32>
    %21 = vector.broadcast %19 : vector<32x1xf32> to vector<32x128xf32>
    %22 = arith.addf %21, %2 : vector<32x128xf32>
    %cst_11 = arith.constant dense<0xFF800000> : vector<128xf32>
    %23 = vector.multi_reduction <maximumf>, %22, %cst_11 [0] : vector<32x128xf32> to vector<128xf32>
    %24 = vector.shape_cast %23 : vector<128xf32> to vector<1x128xf32>
    %25 = vector.broadcast %24 : vector<1x128xf32> to vector<32x128xf32>
    %26 = arith.cmpf oeq, %22, %25 : vector<32x128xf32>
    %c32_i32 = arith.constant 32 : i32
    %27 = vector.broadcast %c32_i32 : i32 to vector<32x128xi32>
    %28 = arith.select %26, %15, %27 : vector<32x128xi1>, vector<32x128xi32>
    %cst_12 = arith.constant dense<2147483647> : vector<128xi32>
    %29 = vector.multi_reduction <minsi>, %28, %cst_12 [0] : vector<32x128xi32> to vector<128xi32>
    %30 = vector.shape_cast %29 : vector<128xi32> to vector<1x128xi32>
    %c1 = arith.constant 1 : index
    %c0_13 = arith.constant 0 : index
    %31 = vector.load %arg4[%c1, %c0_13] : memref<32x128xi32, #tpu.memory_space<vmem>>, vector<1x128xi32>
    tpu.vector_store %arg4[%c1, %c0_13], %30 {strides = array<i32>} : memref<32x128xi32, #tpu.memory_space<vmem>>, vector<1x128xi32>,
    %32 = vector.broadcast %17 : vector<1x128xf32> to vector<32x128xf32>
    %33 = arith.addf %32, %3 : vector<32x128xf32>
    %cst_14 = arith.constant dense<0xFF800000> : vector<32xf32>
    %34 = vector.multi_reduction <maximumf>, %33, %cst_14 [1] : vector<32x128xf32> to vector<32xf32>
    %35 = vector.shape_cast %34 : vector<32xf32> to vector<32x1xf32>
    %36 = vector.extract_strided_slice %10 {offsets = [1, 0], sizes = [1, 128], strides = [1, 1]} : vector<32x128xf32> to vector<1x128xf32>
    %37 = arith.addf %24, %36 : vector<1x128xf32>
    %38 = vector.extract_strided_slice %14 {offsets = [0, 1], sizes = [32, 1], strides = [1, 1]} : vector<32x32xf32> to vector<32x1xf32>
    %39 = arith.addf %35, %38 : vector<32x1xf32>
    %40 = vector.broadcast %20 : vector<32x1xf32> to vector<32x128xf32>
    %41 = arith.addf %40, %2 : vector<32x128xf32>
    %cst_15 = arith.constant dense<0xFF800000> : vector<128xf32>
    %42 = vector.multi_reduction <maximumf>, %41, %cst_15 [0] : vector<32x128xf32> to vector<128xf32>
    %43 = vector.shape_cast %42 : vector<128xf32> to vector<1x128xf32>
    %44 = vector.broadcast %43 : vector<1x128xf32> to vector<32x128xf32>
    %45 = arith.cmpf oeq, %41, %44 : vector<32x128xf32>
    %c32_i32_16 = arith.constant 32 : i32
    %46 = vector.broadcast %c32_i32_16 : i32 to vector<32x128xi32>
    %47 = arith.select %45, %15, %46 : vector<32x128xi1>, vector<32x128xi32>
    %cst_17 = arith.constant dense<2147483647> : vector<128xi32>
    %48 = vector.multi_reduction <minsi>, %47, %cst_17 [0] : vector<32x128xi32> to vector<128xi32>
    %49 = vector.shape_cast %48 : vector<128xi32> to vector<1x128xi32>
    %c17 = arith.constant 17 : index
    %c0_18 = arith.constant 0 : index
    %50 = vector.load %arg4[%c17, %c0_18] : memref<32x128xi32, #tpu.memory_space<vmem>>, vector<1x128xi32>
    tpu.vector_store %arg4[%c17, %c0_18], %49 {strides = array<i32>} : memref<32x128xi32, #tpu.memory_space<vmem>>, vector<1x128xi32>,
    %51 = vector.broadcast %18 : vector<1x128xf32> to vector<32x128xf32>
    %52 = arith.addf %51, %3 : vector<32x128xf32>
    %cst_19 = arith.constant dense<0xFF800000> : vector<32xf32>
    %53 = vector.multi_reduction <maximumf>, %52, %cst_19 [1] : vector<32x128xf32> to vector<32xf32>
    %54 = vector.shape_cast %53 : vector<32xf32> to vector<32x1xf32>
    %55 = vector.extract_strided_slice %10 {offsets = [17, 0], sizes = [1, 128], strides = [1, 1]} : vector<32x128xf32> to vector<1x128xf32>
    %56 = arith.addf %43, %55 : vector<1x128xf32>
    %57 = vector.extract_strided_slice %14 {offsets = [0, 17], sizes = [32, 1], strides = [1, 1]} : vector<32x32xf32> to vector<32x1xf32>
    %58 = arith.addf %54, %57 : vector<32x1xf32>
    %59 = vector.broadcast %39 : vector<32x1xf32> to vector<32x128xf32>
    %60 = arith.addf %59, %2 : vector<32x128xf32>
    %cst_20 = arith.constant dense<0xFF800000> : vector<128xf32>
    %61 = vector.multi_reduction <maximumf>, %60, %cst_20 [0] : vector<32x128xf32> to vector<128xf32>
    %62 = vector.shape_cast %61 : vector<128xf32> to vector<1x128xf32>
    %63 = vector.broadcast %62 : vector<1x128xf32> to vector<32x128xf32>
    %64 = arith.cmpf oeq, %60, %63 : vector<32x128xf32>
    %c32_i32_21 = arith.constant 32 : i32
    %65 = vector.broadcast %c32_i32_21 : i32 to vector<32x128xi32>
    %66 = arith.select %64, %15, %65 : vector<32x128xi1>, vector<32x128xi32>
    %cst_22 = arith.constant dense<2147483647> : vector<128xi32>
    %67 = vector.multi_reduction <minsi>, %66, %cst_22 [0] : vector<32x128xi32> to vector<128xi32>
    %68 = vector.shape_cast %67 : vector<128xi32> to vector<1x128xi32>
    %c2 = arith.constant 2 : index
    %c0_23 = arith.constant 0 : index
    %69 = vector.load %arg4[%c2, %c0_23] : memref<32x128xi32, #tpu.memory_space<vmem>>, vector<1x128xi32>
    tpu.vector_store %arg4[%c2, %c0_23], %68 {strides = array<i32>} : memref<32x128xi32, #tpu.memory_space<vmem>>, vector<1x128xi32>,
    %70 = vector.broadcast %37 : vector<1x128xf32> to vector<32x128xf32>
    %71 = arith.addf %70, %3 : vector<32x128xf32>
    %cst_24 = arith.constant dense<0xFF800000> : vector<32xf32>
    %72 = vector.multi_reduction <maximumf>, %71, %cst_24 [1] : vector<32x128xf32> to vector<32xf32>
    %73 = vector.shape_cast %72 : vector<32xf32> to vector<32x1xf32>
    %74 = vector.extract_strided_slice %10 {offsets = [2, 0], sizes = [1, 128], strides = [1, 1]} : vector<32x128xf32> to vector<1x128xf32>
    %75 = arith.addf %62, %74 : vector<1x128xf32>
    %76 = vector.extract_strided_slice %14 {offsets = [0, 2], sizes = [32, 1], strides = [1, 1]} : vector<32x32xf32> to vector<32x1xf32>
    %77 = arith.addf %73, %76 : vector<32x1xf32>
    %78 = vector.broadcast %58 : vector<32x1xf32> to vector<32x128xf32>
    %79 = arith.addf %78, %2 : vector<32x128xf32>
    %cst_25 = arith.constant dense<0xFF800000> : vector<128xf32>
    %80 = vector.multi_reduction <maximumf>, %79, %cst_25 [0] : vector<32x128xf32> to vector<128xf32>
    %81 = vector.shape_cast %80 : vector<128xf32> to vector<1x128xf32>
    %82 = vector.broadcast %81 : vector<1x128xf32> to vector<32x128xf32>
    %83 = arith.cmpf oeq, %79, %82 : vector<32x128xf32>
    %c32_i32_26 = arith.constant 32 : i32
    %84 = vector.broadcast %c32_i32_26 : i32 to vector<32x128xi32>
    %85 = arith.select %83, %15, %84 : vector<32x128xi1>, vector<32x128xi32>
    %cst_27 = arith.constant dense<2147483647> : vector<128xi32>
    %86 = vector.multi_reduction <minsi>, %85, %cst_27 [0] : vector<32x128xi32> to vector<128xi32>
    %87 = vector.shape_cast %86 : vector<128xi32> to vector<1x128xi32>
    %c18 = arith.constant 18 : index
    %c0_28 = arith.constant 0 : index
    %88 = vector.load %arg4[%c18, %c0_28] : memref<32x128xi32, #tpu.memory_space<vmem>>, vector<1x128xi32>
    tpu.vector_store %arg4[%c18, %c0_28], %87 {strides = array<i32>} : memref<32x128xi32, #tpu.memory_space<vmem>>, vector<1x128xi32>,
    %89 = vector.broadcast %56 : vector<1x128xf32> to vector<32x128xf32>
    %90 = arith.addf %89, %3 : vector<32x128xf32>
    %cst_29 = arith.constant dense<0xFF800000> : vector<32xf32>
    %91 = vector.multi_reduction <maximumf>, %90, %cst_29 [1] : vector<32x128xf32> to vector<32xf32>
    %92 = vector.shape_cast %91 : vector<32xf32> to vector<32x1xf32>
    %93 = vector.extract_strided_slice %10 {offsets = [18, 0], sizes = [1, 128], strides = [1, 1]} : vector<32x128xf32> to vector<1x128xf32>
    %94 = arith.addf %81, %93 : vector<1x128xf32>
    %95 = vector.extract_strided_slice %14 {offsets = [0, 18], sizes = [32, 1], strides = [1, 1]} : vector<32x32xf32> to vector<32x1xf32>
    %96 = arith.addf %92, %95 : vector<32x1xf32>
    %97 = vector.broadcast %77 : vector<32x1xf32> to vector<32x128xf32>
    %98 = arith.addf %97, %2 : vector<32x128xf32>
    %cst_30 = arith.constant dense<0xFF800000> : vector<128xf32>
    %99 = vector.multi_reduction <maximumf>, %98, %cst_30 [0] : vector<32x128xf32> to vector<128xf32>
    %100 = vector.shape_cast %99 : vector<128xf32> to vector<1x128xf32>
    %101 = vector.broadcast %100 : vector<1x128xf32> to vector<32x128xf32>
    %102 = arith.cmpf oeq, %98, %101 : vector<32x128xf32>
    %c32_i32_31 = arith.constant 32 : i32
    %103 = vector.broadcast %c32_i32_31 : i32 to vector<32x128xi32>
    %104 = arith.select %102, %15, %103 : vector<32x128xi1>, vector<32x128xi32>
    %cst_32 = arith.constant dense<2147483647> : vector<128xi32>
    %105 = vector.multi_reduction <minsi>, %104, %cst_32 [0] : vector<32x128xi32> to vector<128xi32>
    %106 = vector.shape_cast %105 : vector<128xi32> to vector<1x128xi32>
    %c3 = arith.constant 3 : index
    %c0_33 = arith.constant 0 : index
    %107 = vector.load %arg4[%c3, %c0_33] : memref<32x128xi32, #tpu.memory_space<vmem>>, vector<1x128xi32>
    tpu.vector_store %arg4[%c3, %c0_33], %106 {strides = array<i32>} : memref<32x128xi32, #tpu.memory_space<vmem>>, vector<1x128xi32>,
    %108 = vector.broadcast %75 : vector<1x128xf32> to vector<32x128xf32>
    %109 = arith.addf %108, %3 : vector<32x128xf32>
    %cst_34 = arith.constant dense<0xFF800000> : vector<32xf32>
    %110 = vector.multi_reduction <maximumf>, %109, %cst_34 [1] : vector<32x128xf32> to vector<32xf32>
    %111 = vector.shape_cast %110 : vector<32xf32> to vector<32x1xf32>
    %112 = vector.extract_strided_slice %10 {offsets = [3, 0], sizes = [1, 128], strides = [1, 1]} : vector<32x128xf32> to vector<1x128xf32>
    %113 = arith.addf %100, %112 : vector<1x128xf32>
    %114 = vector.extract_strided_slice %14 {offsets = [0, 3], sizes = [32, 1], strides = [1, 1]} : vector<32x32xf32> to vector<32x1xf32>
    %115 = arith.addf %111, %114 : vector<32x1xf32>
    %116 = vector.broadcast %96 : vector<32x1xf32> to vector<32x128xf32>
    %117 = arith.addf %116, %2 : vector<32x128xf32>
    %cst_35 = arith.constant dense<0xFF800000> : vector<128xf32>
    %118 = vector.multi_reduction <maximumf>, %117, %cst_35 [0] : vector<32x128xf32> to vector<128xf32>
    %119 = vector.shape_cast %118 : vector<128xf32> to vector<1x128xf32>
    %120 = vector.broadcast %119 : vector<1x128xf32> to vector<32x128xf32>
    %121 = arith.cmpf oeq, %117, %120 : vector<32x128xf32>
    %c32_i32_36 = arith.constant 32 : i32
    %122 = vector.broadcast %c32_i32_36 : i32 to vector<32x128xi32>
    %123 = arith.select %121, %15, %122 : vector<32x128xi1>, vector<32x128xi32>
    %cst_37 = arith.constant dense<2147483647> : vector<128xi32>
    %124 = vector.multi_reduction <minsi>, %123, %cst_37 [0] : vector<32x128xi32> to vector<128xi32>
    %125 = vector.shape_cast %124 : vector<128xi32> to vector<1x128xi32>
    %c19 = arith.constant 19 : index
    %c0_38 = arith.constant 0 : index
    %126 = vector.load %arg4[%c19, %c0_38] : memref<32x128xi32, #tpu.memory_space<vmem>>, vector<1x128xi32>
    tpu.vector_store %arg4[%c19, %c0_38], %125 {strides = array<i32>} : memref<32x128xi32, #tpu.memory_space<vmem>>, vector<1x128xi32>,
    %127 = vector.broadcast %94 : vector<1x128xf32> to vector<32x128xf32>
    %128 = arith.addf %127, %3 : vector<32x128xf32>
    %cst_39 = arith.constant dense<0xFF800000> : vector<32xf32>
    %129 = vector.multi_reduction <maximumf>, %128, %cst_39 [1] : vector<32x128xf32> to vector<32xf32>
    %130 = vector.shape_cast %129 : vector<32xf32> to vector<32x1xf32>
    %131 = vector.extract_strided_slice %10 {offsets = [19, 0], sizes = [1, 128], strides = [1, 1]} : vector<32x128xf32> to vector<1x128xf32>
    %132 = arith.addf %119, %131 : vector<1x128xf32>
    %133 = vector.extract_strided_slice %14 {offsets = [0, 19], sizes = [32, 1], strides = [1, 1]} : vector<32x32xf32> to vector<32x1xf32>
    %134 = arith.addf %130, %133 : vector<32x1xf32>
    %135 = vector.broadcast %115 : vector<32x1xf32> to vector<32x128xf32>
    %136 = arith.addf %135, %2 : vector<32x128xf32>
    %cst_40 = arith.constant dense<0xFF800000> : vector<128xf32>
    %137 = vector.multi_reduction <maximumf>, %136, %cst_40 [0] : vector<32x128xf32> to vector<128xf32>
    %138 = vector.shape_cast %137 : vector<128xf32> to vector<1x128xf32>
    %139 = vector.broadcast %138 : vector<1x128xf32> to vector<32x128xf32>
    %140 = arith.cmpf oeq, %136, %139 : vector<32x128xf32>
    %c32_i32_41 = arith.constant 32 : i32
    %141 = vector.broadcast %c32_i32_41 : i32 to vector<32x128xi32>
    %142 = arith.select %140, %15, %141 : vector<32x128xi1>, vector<32x128xi32>
    %cst_42 = arith.constant dense<2147483647> : vector<128xi32>
    %143 = vector.multi_reduction <minsi>, %142, %cst_42 [0] : vector<32x128xi32> to vector<128xi32>
    %144 = vector.shape_cast %143 : vector<128xi32> to vector<1x128xi32>
    %c4 = arith.constant 4 : index
    %c0_43 = arith.constant 0 : index
    %145 = vector.load %arg4[%c4, %c0_43] : memref<32x128xi32, #tpu.memory_space<vmem>>, vector<1x128xi32>
    tpu.vector_store %arg4[%c4, %c0_43], %144 {strides = array<i32>} : memref<32x128xi32, #tpu.memory_space<vmem>>, vector<1x128xi32>,
    %146 = vector.broadcast %113 : vector<1x128xf32> to vector<32x128xf32>
    %147 = arith.addf %146, %3 : vector<32x128xf32>
    %cst_44 = arith.constant dense<0xFF800000> : vector<32xf32>
    %148 = vector.multi_reduction <maximumf>, %147, %cst_44 [1] : vector<32x128xf32> to vector<32xf32>
    %149 = vector.shape_cast %148 : vector<32xf32> to vector<32x1xf32>
    %150 = vector.extract_strided_slice %10 {offsets = [4, 0], sizes = [1, 128], strides = [1, 1]} : vector<32x128xf32> to vector<1x128xf32>
    %151 = arith.addf %138, %150 : vector<1x128xf32>
    %152 = vector.extract_strided_slice %14 {offsets = [0, 4], sizes = [32, 1], strides = [1, 1]} : vector<32x32xf32> to vector<32x1xf32>
    %153 = arith.addf %149, %152 : vector<32x1xf32>
    %154 = vector.broadcast %134 : vector<32x1xf32> to vector<32x128xf32>
    %155 = arith.addf %154, %2 : vector<32x128xf32>
    %cst_45 = arith.constant dense<0xFF800000> : vector<128xf32>
    %156 = vector.multi_reduction <maximumf>, %155, %cst_45 [0] : vector<32x128xf32> to vector<128xf32>
    %157 = vector.shape_cast %156 : vector<128xf32> to vector<1x128xf32>
    %158 = vector.broadcast %157 : vector<1x128xf32> to vector<32x128xf32>
    %159 = arith.cmpf oeq, %155, %158 : vector<32x128xf32>
    %c32_i32_46 = arith.constant 32 : i32
    %160 = vector.broadcast %c32_i32_46 : i32 to vector<32x128xi32>
    %161 = arith.select %159, %15, %160 : vector<32x128xi1>, vector<32x128xi32>
    %cst_47 = arith.constant dense<2147483647> : vector<128xi32>
    %162 = vector.multi_reduction <minsi>, %161, %cst_47 [0] : vector<32x128xi32> to vector<128xi32>
    %163 = vector.shape_cast %162 : vector<128xi32> to vector<1x128xi32>
    %c20 = arith.constant 20 : index
    %c0_48 = arith.constant 0 : index
    %164 = vector.load %arg4[%c20, %c0_48] : memref<32x128xi32, #tpu.memory_space<vmem>>, vector<1x128xi32>
    tpu.vector_store %arg4[%c20, %c0_48], %163 {strides = array<i32>} : memref<32x128xi32, #tpu.memory_space<vmem>>, vector<1x128xi32>,
    %165 = vector.broadcast %132 : vector<1x128xf32> to vector<32x128xf32>
    %166 = arith.addf %165, %3 : vector<32x128xf32>
    %cst_49 = arith.constant dense<0xFF800000> : vector<32xf32>
    %167 = vector.multi_reduction <maximumf>, %166, %cst_49 [1] : vector<32x128xf32> to vector<32xf32>
    %168 = vector.shape_cast %167 : vector<32xf32> to vector<32x1xf32>
    %169 = vector.extract_strided_slice %10 {offsets = [20, 0], sizes = [1, 128], strides = [1, 1]} : vector<32x128xf32> to vector<1x128xf32>
    %170 = arith.addf %157, %169 : vector<1x128xf32>
    %171 = vector.extract_strided_slice %14 {offsets = [0, 20], sizes = [32, 1], strides = [1, 1]} : vector<32x32xf32> to vector<32x1xf32>
    %172 = arith.addf %168, %171 : vector<32x1xf32>
    %173 = vector.broadcast %153 : vector<32x1xf32> to vector<32x128xf32>
    %174 = arith.addf %173, %2 : vector<32x128xf32>
    %cst_50 = arith.constant dense<0xFF800000> : vector<128xf32>
    %175 = vector.multi_reduction <maximumf>, %174, %cst_50 [0] : vector<32x128xf32> to vector<128xf32>
    %176 = vector.shape_cast %175 : vector<128xf32> to vector<1x128xf32>
    %177 = vector.broadcast %176 : vector<1x128xf32> to vector<32x128xf32>
    %178 = arith.cmpf oeq, %174, %177 : vector<32x128xf32>
    %c32_i32_51 = arith.constant 32 : i32
    %179 = vector.broadcast %c32_i32_51 : i32 to vector<32x128xi32>
    %180 = arith.select %178, %15, %179 : vector<32x128xi1>, vector<32x128xi32>
    %cst_52 = arith.constant dense<2147483647> : vector<128xi32>
    %181 = vector.multi_reduction <minsi>, %180, %cst_52 [0] : vector<32x128xi32> to vector<128xi32>
    %182 = vector.shape_cast %181 : vector<128xi32> to vector<1x128xi32>
    %c5 = arith.constant 5 : index
    %c0_53 = arith.constant 0 : index
    %183 = vector.load %arg4[%c5, %c0_53] : memref<32x128xi32, #tpu.memory_space<vmem>>, vector<1x128xi32>
    tpu.vector_store %arg4[%c5, %c0_53], %182 {strides = array<i32>} : memref<32x128xi32, #tpu.memory_space<vmem>>, vector<1x128xi32>,
    %184 = vector.broadcast %151 : vector<1x128xf32> to vector<32x128xf32>
    %185 = arith.addf %184, %3 : vector<32x128xf32>
    %cst_54 = arith.constant dense<0xFF800000> : vector<32xf32>
    %186 = vector.multi_reduction <maximumf>, %185, %cst_54 [1] : vector<32x128xf32> to vector<32xf32>
    %187 = vector.shape_cast %186 : vector<32xf32> to vector<32x1xf32>
    %188 = vector.extract_strided_slice %10 {offsets = [5, 0], sizes = [1, 128], strides = [1, 1]} : vector<32x128xf32> to vector<1x128xf32>
    %189 = arith.addf %176, %188 : vector<1x128xf32>
    %190 = vector.extract_strided_slice %14 {offsets = [0, 5], sizes = [32, 1], strides = [1, 1]} : vector<32x32xf32> to vector<32x1xf32>
    %191 = arith.addf %187, %190 : vector<32x1xf32>
    %192 = vector.broadcast %172 : vector<32x1xf32> to vector<32x128xf32>
    %193 = arith.addf %192, %2 : vector<32x128xf32>
    %cst_55 = arith.constant dense<0xFF800000> : vector<128xf32>
    %194 = vector.multi_reduction <maximumf>, %193, %cst_55 [0] : vector<32x128xf32> to vector<128xf32>
    %195 = vector.shape_cast %194 : vector<128xf32> to vector<1x128xf32>
    %196 = vector.broadcast %195 : vector<1x128xf32> to vector<32x128xf32>
    %197 = arith.cmpf oeq, %193, %196 : vector<32x128xf32>
    %c32_i32_56 = arith.constant 32 : i32
    %198 = vector.broadcast %c32_i32_56 : i32 to vector<32x128xi32>
    %199 = arith.select %197, %15, %198 : vector<32x128xi1>, vector<32x128xi32>
    %cst_57 = arith.constant dense<2147483647> : vector<128xi32>
    %200 = vector.multi_reduction <minsi>, %199, %cst_57 [0] : vector<32x128xi32> to vector<128xi32>
    %201 = vector.shape_cast %200 : vector<128xi32> to vector<1x128xi32>
    %c21 = arith.constant 21 : index
    %c0_58 = arith.constant 0 : index
    %202 = vector.load %arg4[%c21, %c0_58] : memref<32x128xi32, #tpu.memory_space<vmem>>, vector<1x128xi32>
    tpu.vector_store %arg4[%c21, %c0_58], %201 {strides = array<i32>} : memref<32x128xi32, #tpu.memory_space<vmem>>, vector<1x128xi32>,
    %203 = vector.broadcast %170 : vector<1x128xf32> to vector<32x128xf32>
    %204 = arith.addf %203, %3 : vector<32x128xf32>
    %cst_59 = arith.constant dense<0xFF800000> : vector<32xf32>
    %205 = vector.multi_reduction <maximumf>, %204, %cst_59 [1] : vector<32x128xf32> to vector<32xf32>
    %206 = vector.shape_cast %205 : vector<32xf32> to vector<32x1xf32>
    %207 = vector.extract_strided_slice %10 {offsets = [21, 0], sizes = [1, 128], strides = [1, 1]} : vector<32x128xf32> to vector<1x128xf32>
    %208 = arith.addf %195, %207 : vector<1x128xf32>
    %209 = vector.extract_strided_slice %14 {offsets = [0, 21], sizes = [32, 1], strides = [1, 1]} : vector<32x32xf32> to vector<32x1xf32>
    %210 = arith.addf %206, %209 : vector<32x1xf32>
    %211 = vector.broadcast %191 : vector<32x1xf32> to vector<32x128xf32>
    %212 = arith.addf %211, %2 : vector<32x128xf32>
    %cst_60 = arith.constant dense<0xFF800000> : vector<128xf32>
    %213 = vector.multi_reduction <maximumf>, %212, %cst_60 [0] : vector<32x128xf32> to vector<128xf32>
    %214 = vector.shape_cast %213 : vector<128xf32> to vector<1x128xf32>
    %215 = vector.broadcast %214 : vector<1x128xf32> to vector<32x128xf32>
    %216 = arith.cmpf oeq, %212, %215 : vector<32x128xf32>
    %c32_i32_61 = arith.constant 32 : i32
    %217 = vector.broadcast %c32_i32_61 : i32 to vector<32x128xi32>
    %218 = arith.select %216, %15, %217 : vector<32x128xi1>, vector<32x128xi32>
    %cst_62 = arith.constant dense<2147483647> : vector<128xi32>
    %219 = vector.multi_reduction <minsi>, %218, %cst_62 [0] : vector<32x128xi32> to vector<128xi32>
    %220 = vector.shape_cast %219 : vector<128xi32> to vector<1x128xi32>
    %c6 = arith.constant 6 : index
    %c0_63 = arith.constant 0 : index
    %221 = vector.load %arg4[%c6, %c0_63] : memref<32x128xi32, #tpu.memory_space<vmem>>, vector<1x128xi32>
    tpu.vector_store %arg4[%c6, %c0_63], %220 {strides = array<i32>} : memref<32x128xi32, #tpu.memory_space<vmem>>, vector<1x128xi32>,
    %222 = vector.broadcast %189 : vector<1x128xf32> to vector<32x128xf32>
    %223 = arith.addf %222, %3 : vector<32x128xf32>
    %cst_64 = arith.constant dense<0xFF800000> : vector<32xf32>
    %224 = vector.multi_reduction <maximumf>, %223, %cst_64 [1] : vector<32x128xf32> to vector<32xf32>
    %225 = vector.shape_cast %224 : vector<32xf32> to vector<32x1xf32>
    %226 = vector.extract_strided_slice %10 {offsets = [6, 0], sizes = [1, 128], strides = [1, 1]} : vector<32x128xf32> to vector<1x128xf32>
    %227 = arith.addf %214, %226 : vector<1x128xf32>
    %228 = vector.extract_strided_slice %14 {offsets = [0, 6], sizes = [32, 1], strides = [1, 1]} : vector<32x32xf32> to vector<32x1xf32>
    %229 = arith.addf %225, %228 : vector<32x1xf32>
    %230 = vector.broadcast %210 : vector<32x1xf32> to vector<32x128xf32>
    %231 = arith.addf %230, %2 : vector<32x128xf32>
    %cst_65 = arith.constant dense<0xFF800000> : vector<128xf32>
    %232 = vector.multi_reduction <maximumf>, %231, %cst_65 [0] : vector<32x128xf32> to vector<128xf32>
    %233 = vector.shape_cast %232 : vector<128xf32> to vector<1x128xf32>
    %234 = vector.broadcast %233 : vector<1x128xf32> to vector<32x128xf32>
    %235 = arith.cmpf oeq, %231, %234 : vector<32x128xf32>
    %c32_i32_66 = arith.constant 32 : i32
    %236 = vector.broadcast %c32_i32_66 : i32 to vector<32x128xi32>
    %237 = arith.select %235, %15, %236 : vector<32x128xi1>, vector<32x128xi32>
    %cst_67 = arith.constant dense<2147483647> : vector<128xi32>
    %238 = vector.multi_reduction <minsi>, %237, %cst_67 [0] : vector<32x128xi32> to vector<128xi32>
    %239 = vector.shape_cast %238 : vector<128xi32> to vector<1x128xi32>
    %c22 = arith.constant 22 : index
    %c0_68 = arith.constant 0 : index
    %240 = vector.load %arg4[%c22, %c0_68] : memref<32x128xi32, #tpu.memory_space<vmem>>, vector<1x128xi32>
    tpu.vector_store %arg4[%c22, %c0_68], %239 {strides = array<i32>} : memref<32x128xi32, #tpu.memory_space<vmem>>, vector<1x128xi32>,
    %241 = vector.broadcast %208 : vector<1x128xf32> to vector<32x128xf32>
    %242 = arith.addf %241, %3 : vector<32x128xf32>
    %cst_69 = arith.constant dense<0xFF800000> : vector<32xf32>
    %243 = vector.multi_reduction <maximumf>, %242, %cst_69 [1] : vector<32x128xf32> to vector<32xf32>
    %244 = vector.shape_cast %243 : vector<32xf32> to vector<32x1xf32>
    %245 = vector.extract_strided_slice %10 {offsets = [22, 0], sizes = [1, 128], strides = [1, 1]} : vector<32x128xf32> to vector<1x128xf32>
    %246 = arith.addf %233, %245 : vector<1x128xf32>
    %247 = vector.extract_strided_slice %14 {offsets = [0, 22], sizes = [32, 1], strides = [1, 1]} : vector<32x32xf32> to vector<32x1xf32>
    %248 = arith.addf %244, %247 : vector<32x1xf32>
    %249 = vector.broadcast %229 : vector<32x1xf32> to vector<32x128xf32>
    %250 = arith.addf %249, %2 : vector<32x128xf32>
    %cst_70 = arith.constant dense<0xFF800000> : vector<128xf32>
    %251 = vector.multi_reduction <maximumf>, %250, %cst_70 [0] : vector<32x128xf32> to vector<128xf32>
    %252 = vector.shape_cast %251 : vector<128xf32> to vector<1x128xf32>
    %253 = vector.broadcast %252 : vector<1x128xf32> to vector<32x128xf32>
    %254 = arith.cmpf oeq, %250, %253 : vector<32x128xf32>
    %c32_i32_71 = arith.constant 32 : i32
    %255 = vector.broadcast %c32_i32_71 : i32 to vector<32x128xi32>
    %256 = arith.select %254, %15, %255 : vector<32x128xi1>, vector<32x128xi32>
    %cst_72 = arith.constant dense<2147483647> : vector<128xi32>
    %257 = vector.multi_reduction <minsi>, %256, %cst_72 [0] : vector<32x128xi32> to vector<128xi32>
    %258 = vector.shape_cast %257 : vector<128xi32> to vector<1x128xi32>
    %c7 = arith.constant 7 : index
    %c0_73 = arith.constant 0 : index
    %259 = vector.load %arg4[%c7, %c0_73] : memref<32x128xi32, #tpu.memory_space<vmem>>, vector<1x128xi32>
    tpu.vector_store %arg4[%c7, %c0_73], %258 {strides = array<i32>} : memref<32x128xi32, #tpu.memory_space<vmem>>, vector<1x128xi32>,
    %260 = vector.broadcast %227 : vector<1x128xf32> to vector<32x128xf32>
    %261 = arith.addf %260, %3 : vector<32x128xf32>
    %cst_74 = arith.constant dense<0xFF800000> : vector<32xf32>
    %262 = vector.multi_reduction <maximumf>, %261, %cst_74 [1] : vector<32x128xf32> to vector<32xf32>
    %263 = vector.shape_cast %262 : vector<32xf32> to vector<32x1xf32>
    %264 = vector.extract_strided_slice %10 {offsets = [7, 0], sizes = [1, 128], strides = [1, 1]} : vector<32x128xf32> to vector<1x128xf32>
    %265 = arith.addf %252, %264 : vector<1x128xf32>
    %266 = vector.extract_strided_slice %14 {offsets = [0, 7], sizes = [32, 1], strides = [1, 1]} : vector<32x32xf32> to vector<32x1xf32>
    %267 = arith.addf %263, %266 : vector<32x1xf32>
    %268 = vector.broadcast %248 : vector<32x1xf32> to vector<32x128xf32>
    %269 = arith.addf %268, %2 : vector<32x128xf32>
    %cst_75 = arith.constant dense<0xFF800000> : vector<128xf32>
    %270 = vector.multi_reduction <maximumf>, %269, %cst_75 [0] : vector<32x128xf32> to vector<128xf32>
    %271 = vector.shape_cast %270 : vector<128xf32> to vector<1x128xf32>
    %272 = vector.broadcast %271 : vector<1x128xf32> to vector<32x128xf32>
    %273 = arith.cmpf oeq, %269, %272 : vector<32x128xf32>
    %c32_i32_76 = arith.constant 32 : i32
    %274 = vector.broadcast %c32_i32_76 : i32 to vector<32x128xi32>
    %275 = arith.select %273, %15, %274 : vector<32x128xi1>, vector<32x128xi32>
    %cst_77 = arith.constant dense<2147483647> : vector<128xi32>
    %276 = vector.multi_reduction <minsi>, %275, %cst_77 [0] : vector<32x128xi32> to vector<128xi32>
    %277 = vector.shape_cast %276 : vector<128xi32> to vector<1x128xi32>
    %c23 = arith.constant 23 : index
    %c0_78 = arith.constant 0 : index
    %278 = vector.load %arg4[%c23, %c0_78] : memref<32x128xi32, #tpu.memory_space<vmem>>, vector<1x128xi32>
    tpu.vector_store %arg4[%c23, %c0_78], %277 {strides = array<i32>} : memref<32x128xi32, #tpu.memory_space<vmem>>, vector<1x128xi32>,
    %279 = vector.broadcast %246 : vector<1x128xf32> to vector<32x128xf32>
    %280 = arith.addf %279, %3 : vector<32x128xf32>
    %cst_79 = arith.constant dense<0xFF800000> : vector<32xf32>
    %281 = vector.multi_reduction <maximumf>, %280, %cst_79 [1] : vector<32x128xf32> to vector<32xf32>
    %282 = vector.shape_cast %281 : vector<32xf32> to vector<32x1xf32>
    %283 = vector.extract_strided_slice %10 {offsets = [23, 0], sizes = [1, 128], strides = [1, 1]} : vector<32x128xf32> to vector<1x128xf32>
    %284 = arith.addf %271, %283 : vector<1x128xf32>
    %285 = vector.extract_strided_slice %14 {offsets = [0, 23], sizes = [32, 1], strides = [1, 1]} : vector<32x32xf32> to vector<32x1xf32>
    %286 = arith.addf %282, %285 : vector<32x1xf32>
    %287 = vector.broadcast %267 : vector<32x1xf32> to vector<32x128xf32>
    %288 = arith.addf %287, %2 : vector<32x128xf32>
    %cst_80 = arith.constant dense<0xFF800000> : vector<128xf32>
    %289 = vector.multi_reduction <maximumf>, %288, %cst_80 [0] : vector<32x128xf32> to vector<128xf32>
    %290 = vector.shape_cast %289 : vector<128xf32> to vector<1x128xf32>
    %291 = vector.broadcast %290 : vector<1x128xf32> to vector<32x128xf32>
    %292 = arith.cmpf oeq, %288, %291 : vector<32x128xf32>
    %c32_i32_81 = arith.constant 32 : i32
    %293 = vector.broadcast %c32_i32_81 : i32 to vector<32x128xi32>
    %294 = arith.select %292, %15, %293 : vector<32x128xi1>, vector<32x128xi32>
    %cst_82 = arith.constant dense<2147483647> : vector<128xi32>
    %295 = vector.multi_reduction <minsi>, %294, %cst_82 [0] : vector<32x128xi32> to vector<128xi32>
    %296 = vector.shape_cast %295 : vector<128xi32> to vector<1x128xi32>
    %c8 = arith.constant 8 : index
    %c0_83 = arith.constant 0 : index
    %297 = vector.load %arg4[%c8, %c0_83] : memref<32x128xi32, #tpu.memory_space<vmem>>, vector<1x128xi32>
    tpu.vector_store %arg4[%c8, %c0_83], %296 {strides = array<i32>} : memref<32x128xi32, #tpu.memory_space<vmem>>, vector<1x128xi32>,
    %298 = vector.broadcast %265 : vector<1x128xf32> to vector<32x128xf32>
    %299 = arith.addf %298, %3 : vector<32x128xf32>
    %cst_84 = arith.constant dense<0xFF800000> : vector<32xf32>
    %300 = vector.multi_reduction <maximumf>, %299, %cst_84 [1] : vector<32x128xf32> to vector<32xf32>
    %301 = vector.shape_cast %300 : vector<32xf32> to vector<32x1xf32>
    %302 = vector.extract_strided_slice %10 {offsets = [8, 0], sizes = [1, 128], strides = [1, 1]} : vector<32x128xf32> to vector<1x128xf32>
    %303 = arith.addf %290, %302 : vector<1x128xf32>
    %304 = vector.extract_strided_slice %14 {offsets = [0, 8], sizes = [32, 1], strides = [1, 1]} : vector<32x32xf32> to vector<32x1xf32>
    %305 = arith.addf %301, %304 : vector<32x1xf32>
    %306 = vector.broadcast %286 : vector<32x1xf32> to vector<32x128xf32>
    %307 = arith.addf %306, %2 : vector<32x128xf32>
    %cst_85 = arith.constant dense<0xFF800000> : vector<128xf32>
    %308 = vector.multi_reduction <maximumf>, %307, %cst_85 [0] : vector<32x128xf32> to vector<128xf32>
    %309 = vector.shape_cast %308 : vector<128xf32> to vector<1x128xf32>
    %310 = vector.broadcast %309 : vector<1x128xf32> to vector<32x128xf32>
    %311 = arith.cmpf oeq, %307, %310 : vector<32x128xf32>
    %c32_i32_86 = arith.constant 32 : i32
    %312 = vector.broadcast %c32_i32_86 : i32 to vector<32x128xi32>
    %313 = arith.select %311, %15, %312 : vector<32x128xi1>, vector<32x128xi32>
    %cst_87 = arith.constant dense<2147483647> : vector<128xi32>
    %314 = vector.multi_reduction <minsi>, %313, %cst_87 [0] : vector<32x128xi32> to vector<128xi32>
    %315 = vector.shape_cast %314 : vector<128xi32> to vector<1x128xi32>
    %c24 = arith.constant 24 : index
    %c0_88 = arith.constant 0 : index
    %316 = vector.load %arg4[%c24, %c0_88] : memref<32x128xi32, #tpu.memory_space<vmem>>, vector<1x128xi32>
    tpu.vector_store %arg4[%c24, %c0_88], %315 {strides = array<i32>} : memref<32x128xi32, #tpu.memory_space<vmem>>, vector<1x128xi32>,
    %317 = vector.broadcast %284 : vector<1x128xf32> to vector<32x128xf32>
    %318 = arith.addf %317, %3 : vector<32x128xf32>
    %cst_89 = arith.constant dense<0xFF800000> : vector<32xf32>
    %319 = vector.multi_reduction <maximumf>, %318, %cst_89 [1] : vector<32x128xf32> to vector<32xf32>
    %320 = vector.shape_cast %319 : vector<32xf32> to vector<32x1xf32>
    %321 = vector.extract_strided_slice %10 {offsets = [24, 0], sizes = [1, 128], strides = [1, 1]} : vector<32x128xf32> to vector<1x128xf32>
    %322 = arith.addf %309, %321 : vector<1x128xf32>
    %323 = vector.extract_strided_slice %14 {offsets = [0, 24], sizes = [32, 1], strides = [1, 1]} : vector<32x32xf32> to vector<32x1xf32>
    %324 = arith.addf %320, %323 : vector<32x1xf32>
    %325 = vector.broadcast %305 : vector<32x1xf32> to vector<32x128xf32>
    %326 = arith.addf %325, %2 : vector<32x128xf32>
    %cst_90 = arith.constant dense<0xFF800000> : vector<128xf32>
    %327 = vector.multi_reduction <maximumf>, %326, %cst_90 [0] : vector<32x128xf32> to vector<128xf32>
    %328 = vector.shape_cast %327 : vector<128xf32> to vector<1x128xf32>
    %329 = vector.broadcast %328 : vector<1x128xf32> to vector<32x128xf32>
    %330 = arith.cmpf oeq, %326, %329 : vector<32x128xf32>
    %c32_i32_91 = arith.constant 32 : i32
    %331 = vector.broadcast %c32_i32_91 : i32 to vector<32x128xi32>
    %332 = arith.select %330, %15, %331 : vector<32x128xi1>, vector<32x128xi32>
    %cst_92 = arith.constant dense<2147483647> : vector<128xi32>
    %333 = vector.multi_reduction <minsi>, %332, %cst_92 [0] : vector<32x128xi32> to vector<128xi32>
    %334 = vector.shape_cast %333 : vector<128xi32> to vector<1x128xi32>
    %c9 = arith.constant 9 : index
    %c0_93 = arith.constant 0 : index
    %335 = vector.load %arg4[%c9, %c0_93] : memref<32x128xi32, #tpu.memory_space<vmem>>, vector<1x128xi32>
    tpu.vector_store %arg4[%c9, %c0_93], %334 {strides = array<i32>} : memref<32x128xi32, #tpu.memory_space<vmem>>, vector<1x128xi32>,
    %336 = vector.broadcast %303 : vector<1x128xf32> to vector<32x128xf32>
    %337 = arith.addf %336, %3 : vector<32x128xf32>
    %cst_94 = arith.constant dense<0xFF800000> : vector<32xf32>
    %338 = vector.multi_reduction <maximumf>, %337, %cst_94 [1] : vector<32x128xf32> to vector<32xf32>
    %339 = vector.shape_cast %338 : vector<32xf32> to vector<32x1xf32>
    %340 = vector.extract_strided_slice %10 {offsets = [9, 0], sizes = [1, 128], strides = [1, 1]} : vector<32x128xf32> to vector<1x128xf32>
    %341 = arith.addf %328, %340 : vector<1x128xf32>
    %342 = vector.extract_strided_slice %14 {offsets = [0, 9], sizes = [32, 1], strides = [1, 1]} : vector<32x32xf32> to vector<32x1xf32>
    %343 = arith.addf %339, %342 : vector<32x1xf32>
    %344 = vector.broadcast %324 : vector<32x1xf32> to vector<32x128xf32>
    %345 = arith.addf %344, %2 : vector<32x128xf32>
    %cst_95 = arith.constant dense<0xFF800000> : vector<128xf32>
    %346 = vector.multi_reduction <maximumf>, %345, %cst_95 [0] : vector<32x128xf32> to vector<128xf32>
    %347 = vector.shape_cast %346 : vector<128xf32> to vector<1x128xf32>
    %348 = vector.broadcast %347 : vector<1x128xf32> to vector<32x128xf32>
    %349 = arith.cmpf oeq, %345, %348 : vector<32x128xf32>
    %c32_i32_96 = arith.constant 32 : i32
    %350 = vector.broadcast %c32_i32_96 : i32 to vector<32x128xi32>
    %351 = arith.select %349, %15, %350 : vector<32x128xi1>, vector<32x128xi32>
    %cst_97 = arith.constant dense<2147483647> : vector<128xi32>
    %352 = vector.multi_reduction <minsi>, %351, %cst_97 [0] : vector<32x128xi32> to vector<128xi32>
    %353 = vector.shape_cast %352 : vector<128xi32> to vector<1x128xi32>
    %c25 = arith.constant 25 : index
    %c0_98 = arith.constant 0 : index
    %354 = vector.load %arg4[%c25, %c0_98] : memref<32x128xi32, #tpu.memory_space<vmem>>, vector<1x128xi32>
    tpu.vector_store %arg4[%c25, %c0_98], %353 {strides = array<i32>} : memref<32x128xi32, #tpu.memory_space<vmem>>, vector<1x128xi32>,
    %355 = vector.broadcast %322 : vector<1x128xf32> to vector<32x128xf32>
    %356 = arith.addf %355, %3 : vector<32x128xf32>
    %cst_99 = arith.constant dense<0xFF800000> : vector<32xf32>
    %357 = vector.multi_reduction <maximumf>, %356, %cst_99 [1] : vector<32x128xf32> to vector<32xf32>
    %358 = vector.shape_cast %357 : vector<32xf32> to vector<32x1xf32>
    %359 = vector.extract_strided_slice %10 {offsets = [25, 0], sizes = [1, 128], strides = [1, 1]} : vector<32x128xf32> to vector<1x128xf32>
    %360 = arith.addf %347, %359 : vector<1x128xf32>
    %361 = vector.extract_strided_slice %14 {offsets = [0, 25], sizes = [32, 1], strides = [1, 1]} : vector<32x32xf32> to vector<32x1xf32>
    %362 = arith.addf %358, %361 : vector<32x1xf32>
    %363 = vector.broadcast %343 : vector<32x1xf32> to vector<32x128xf32>
    %364 = arith.addf %363, %2 : vector<32x128xf32>
    %cst_100 = arith.constant dense<0xFF800000> : vector<128xf32>
    %365 = vector.multi_reduction <maximumf>, %364, %cst_100 [0] : vector<32x128xf32> to vector<128xf32>
    %366 = vector.shape_cast %365 : vector<128xf32> to vector<1x128xf32>
    %367 = vector.broadcast %366 : vector<1x128xf32> to vector<32x128xf32>
    %368 = arith.cmpf oeq, %364, %367 : vector<32x128xf32>
    %c32_i32_101 = arith.constant 32 : i32
    %369 = vector.broadcast %c32_i32_101 : i32 to vector<32x128xi32>
    %370 = arith.select %368, %15, %369 : vector<32x128xi1>, vector<32x128xi32>
    %cst_102 = arith.constant dense<2147483647> : vector<128xi32>
    %371 = vector.multi_reduction <minsi>, %370, %cst_102 [0] : vector<32x128xi32> to vector<128xi32>
    %372 = vector.shape_cast %371 : vector<128xi32> to vector<1x128xi32>
    %c10 = arith.constant 10 : index
    %c0_103 = arith.constant 0 : index
    %373 = vector.load %arg4[%c10, %c0_103] : memref<32x128xi32, #tpu.memory_space<vmem>>, vector<1x128xi32>
    tpu.vector_store %arg4[%c10, %c0_103], %372 {strides = array<i32>} : memref<32x128xi32, #tpu.memory_space<vmem>>, vector<1x128xi32>,
    %374 = vector.broadcast %341 : vector<1x128xf32> to vector<32x128xf32>
    %375 = arith.addf %374, %3 : vector<32x128xf32>
    %cst_104 = arith.constant dense<0xFF800000> : vector<32xf32>
    %376 = vector.multi_reduction <maximumf>, %375, %cst_104 [1] : vector<32x128xf32> to vector<32xf32>
    %377 = vector.shape_cast %376 : vector<32xf32> to vector<32x1xf32>
    %378 = vector.extract_strided_slice %10 {offsets = [10, 0], sizes = [1, 128], strides = [1, 1]} : vector<32x128xf32> to vector<1x128xf32>
    %379 = arith.addf %366, %378 : vector<1x128xf32>
    %380 = vector.extract_strided_slice %14 {offsets = [0, 10], sizes = [32, 1], strides = [1, 1]} : vector<32x32xf32> to vector<32x1xf32>
    %381 = arith.addf %377, %380 : vector<32x1xf32>
    %382 = vector.broadcast %362 : vector<32x1xf32> to vector<32x128xf32>
    %383 = arith.addf %382, %2 : vector<32x128xf32>
    %cst_105 = arith.constant dense<0xFF800000> : vector<128xf32>
    %384 = vector.multi_reduction <maximumf>, %383, %cst_105 [0] : vector<32x128xf32> to vector<128xf32>
    %385 = vector.shape_cast %384 : vector<128xf32> to vector<1x128xf32>
    %386 = vector.broadcast %385 : vector<1x128xf32> to vector<32x128xf32>
    %387 = arith.cmpf oeq, %383, %386 : vector<32x128xf32>
    %c32_i32_106 = arith.constant 32 : i32
    %388 = vector.broadcast %c32_i32_106 : i32 to vector<32x128xi32>
    %389 = arith.select %387, %15, %388 : vector<32x128xi1>, vector<32x128xi32>
    %cst_107 = arith.constant dense<2147483647> : vector<128xi32>
    %390 = vector.multi_reduction <minsi>, %389, %cst_107 [0] : vector<32x128xi32> to vector<128xi32>
    %391 = vector.shape_cast %390 : vector<128xi32> to vector<1x128xi32>
    %c26 = arith.constant 26 : index
    %c0_108 = arith.constant 0 : index
    %392 = vector.load %arg4[%c26, %c0_108] : memref<32x128xi32, #tpu.memory_space<vmem>>, vector<1x128xi32>
    tpu.vector_store %arg4[%c26, %c0_108], %391 {strides = array<i32>} : memref<32x128xi32, #tpu.memory_space<vmem>>, vector<1x128xi32>,
    %393 = vector.broadcast %360 : vector<1x128xf32> to vector<32x128xf32>
    %394 = arith.addf %393, %3 : vector<32x128xf32>
    %cst_109 = arith.constant dense<0xFF800000> : vector<32xf32>
    %395 = vector.multi_reduction <maximumf>, %394, %cst_109 [1] : vector<32x128xf32> to vector<32xf32>
    %396 = vector.shape_cast %395 : vector<32xf32> to vector<32x1xf32>
    %397 = vector.extract_strided_slice %10 {offsets = [26, 0], sizes = [1, 128], strides = [1, 1]} : vector<32x128xf32> to vector<1x128xf32>
    %398 = arith.addf %385, %397 : vector<1x128xf32>
    %399 = vector.extract_strided_slice %14 {offsets = [0, 26], sizes = [32, 1], strides = [1, 1]} : vector<32x32xf32> to vector<32x1xf32>
    %400 = arith.addf %396, %399 : vector<32x1xf32>
    %401 = vector.broadcast %381 : vector<32x1xf32> to vector<32x128xf32>
    %402 = arith.addf %401, %2 : vector<32x128xf32>
    %cst_110 = arith.constant dense<0xFF800000> : vector<128xf32>
    %403 = vector.multi_reduction <maximumf>, %402, %cst_110 [0] : vector<32x128xf32> to vector<128xf32>
    %404 = vector.shape_cast %403 : vector<128xf32> to vector<1x128xf32>
    %405 = vector.broadcast %404 : vector<1x128xf32> to vector<32x128xf32>
    %406 = arith.cmpf oeq, %402, %405 : vector<32x128xf32>
    %c32_i32_111 = arith.constant 32 : i32
    %407 = vector.broadcast %c32_i32_111 : i32 to vector<32x128xi32>
    %408 = arith.select %406, %15, %407 : vector<32x128xi1>, vector<32x128xi32>
    %cst_112 = arith.constant dense<2147483647> : vector<128xi32>
    %409 = vector.multi_reduction <minsi>, %408, %cst_112 [0] : vector<32x128xi32> to vector<128xi32>
    %410 = vector.shape_cast %409 : vector<128xi32> to vector<1x128xi32>
    %c11 = arith.constant 11 : index
    %c0_113 = arith.constant 0 : index
    %411 = vector.load %arg4[%c11, %c0_113] : memref<32x128xi32, #tpu.memory_space<vmem>>, vector<1x128xi32>
    tpu.vector_store %arg4[%c11, %c0_113], %410 {strides = array<i32>} : memref<32x128xi32, #tpu.memory_space<vmem>>, vector<1x128xi32>,
    %412 = vector.broadcast %379 : vector<1x128xf32> to vector<32x128xf32>
    %413 = arith.addf %412, %3 : vector<32x128xf32>
    %cst_114 = arith.constant dense<0xFF800000> : vector<32xf32>
    %414 = vector.multi_reduction <maximumf>, %413, %cst_114 [1] : vector<32x128xf32> to vector<32xf32>
    %415 = vector.shape_cast %414 : vector<32xf32> to vector<32x1xf32>
    %416 = vector.extract_strided_slice %10 {offsets = [11, 0], sizes = [1, 128], strides = [1, 1]} : vector<32x128xf32> to vector<1x128xf32>
    %417 = arith.addf %404, %416 : vector<1x128xf32>
    %418 = vector.extract_strided_slice %14 {offsets = [0, 11], sizes = [32, 1], strides = [1, 1]} : vector<32x32xf32> to vector<32x1xf32>
    %419 = arith.addf %415, %418 : vector<32x1xf32>
    %420 = vector.broadcast %400 : vector<32x1xf32> to vector<32x128xf32>
    %421 = arith.addf %420, %2 : vector<32x128xf32>
    %cst_115 = arith.constant dense<0xFF800000> : vector<128xf32>
    %422 = vector.multi_reduction <maximumf>, %421, %cst_115 [0] : vector<32x128xf32> to vector<128xf32>
    %423 = vector.shape_cast %422 : vector<128xf32> to vector<1x128xf32>
    %424 = vector.broadcast %423 : vector<1x128xf32> to vector<32x128xf32>
    %425 = arith.cmpf oeq, %421, %424 : vector<32x128xf32>
    %c32_i32_116 = arith.constant 32 : i32
    %426 = vector.broadcast %c32_i32_116 : i32 to vector<32x128xi32>
    %427 = arith.select %425, %15, %426 : vector<32x128xi1>, vector<32x128xi32>
    %cst_117 = arith.constant dense<2147483647> : vector<128xi32>
    %428 = vector.multi_reduction <minsi>, %427, %cst_117 [0] : vector<32x128xi32> to vector<128xi32>
    %429 = vector.shape_cast %428 : vector<128xi32> to vector<1x128xi32>
    %c27 = arith.constant 27 : index
    %c0_118 = arith.constant 0 : index
    %430 = vector.load %arg4[%c27, %c0_118] : memref<32x128xi32, #tpu.memory_space<vmem>>, vector<1x128xi32>
    tpu.vector_store %arg4[%c27, %c0_118], %429 {strides = array<i32>} : memref<32x128xi32, #tpu.memory_space<vmem>>, vector<1x128xi32>,
    %431 = vector.broadcast %398 : vector<1x128xf32> to vector<32x128xf32>
    %432 = arith.addf %431, %3 : vector<32x128xf32>
    %cst_119 = arith.constant dense<0xFF800000> : vector<32xf32>
    %433 = vector.multi_reduction <maximumf>, %432, %cst_119 [1] : vector<32x128xf32> to vector<32xf32>
    %434 = vector.shape_cast %433 : vector<32xf32> to vector<32x1xf32>
    %435 = vector.extract_strided_slice %10 {offsets = [27, 0], sizes = [1, 128], strides = [1, 1]} : vector<32x128xf32> to vector<1x128xf32>
    %436 = arith.addf %423, %435 : vector<1x128xf32>
    %437 = vector.extract_strided_slice %14 {offsets = [0, 27], sizes = [32, 1], strides = [1, 1]} : vector<32x32xf32> to vector<32x1xf32>
    %438 = arith.addf %434, %437 : vector<32x1xf32>
    %439 = vector.broadcast %419 : vector<32x1xf32> to vector<32x128xf32>
    %440 = arith.addf %439, %2 : vector<32x128xf32>
    %cst_120 = arith.constant dense<0xFF800000> : vector<128xf32>
    %441 = vector.multi_reduction <maximumf>, %440, %cst_120 [0] : vector<32x128xf32> to vector<128xf32>
    %442 = vector.shape_cast %441 : vector<128xf32> to vector<1x128xf32>
    %443 = vector.broadcast %442 : vector<1x128xf32> to vector<32x128xf32>
    %444 = arith.cmpf oeq, %440, %443 : vector<32x128xf32>
    %c32_i32_121 = arith.constant 32 : i32
    %445 = vector.broadcast %c32_i32_121 : i32 to vector<32x128xi32>
    %446 = arith.select %444, %15, %445 : vector<32x128xi1>, vector<32x128xi32>
    %cst_122 = arith.constant dense<2147483647> : vector<128xi32>
    %447 = vector.multi_reduction <minsi>, %446, %cst_122 [0] : vector<32x128xi32> to vector<128xi32>
    %448 = vector.shape_cast %447 : vector<128xi32> to vector<1x128xi32>
    %c12 = arith.constant 12 : index
    %c0_123 = arith.constant 0 : index
    %449 = vector.load %arg4[%c12, %c0_123] : memref<32x128xi32, #tpu.memory_space<vmem>>, vector<1x128xi32>
    tpu.vector_store %arg4[%c12, %c0_123], %448 {strides = array<i32>} : memref<32x128xi32, #tpu.memory_space<vmem>>, vector<1x128xi32>,
    %450 = vector.broadcast %417 : vector<1x128xf32> to vector<32x128xf32>
    %451 = arith.addf %450, %3 : vector<32x128xf32>
    %cst_124 = arith.constant dense<0xFF800000> : vector<32xf32>
    %452 = vector.multi_reduction <maximumf>, %451, %cst_124 [1] : vector<32x128xf32> to vector<32xf32>
    %453 = vector.shape_cast %452 : vector<32xf32> to vector<32x1xf32>
    %454 = vector.extract_strided_slice %14 {offsets = [0, 12], sizes = [32, 1], strides = [1, 1]} : vector<32x32xf32> to vector<32x1xf32>
    %455 = arith.addf %453, %454 : vector<32x1xf32>
    %456 = vector.broadcast %438 : vector<32x1xf32> to vector<32x128xf32>
    %457 = arith.addf %456, %2 : vector<32x128xf32>
    %cst_125 = arith.constant dense<0xFF800000> : vector<128xf32>
    %458 = vector.multi_reduction <maximumf>, %457, %cst_125 [0] : vector<32x128xf32> to vector<128xf32>
    %459 = vector.shape_cast %458 : vector<128xf32> to vector<1x128xf32>
    %460 = vector.broadcast %459 : vector<1x128xf32> to vector<32x128xf32>
    %461 = arith.cmpf oeq, %457, %460 : vector<32x128xf32>
    %c32_i32_126 = arith.constant 32 : i32
    %462 = vector.broadcast %c32_i32_126 : i32 to vector<32x128xi32>
    %463 = arith.select %461, %15, %462 : vector<32x128xi1>, vector<32x128xi32>
    %cst_127 = arith.constant dense<2147483647> : vector<128xi32>
    %464 = vector.multi_reduction <minsi>, %463, %cst_127 [0] : vector<32x128xi32> to vector<128xi32>
    %465 = vector.shape_cast %464 : vector<128xi32> to vector<1x128xi32>
    %c28 = arith.constant 28 : index
    %c0_128 = arith.constant 0 : index
    %466 = vector.load %arg4[%c28, %c0_128] : memref<32x128xi32, #tpu.memory_space<vmem>>, vector<1x128xi32>
    tpu.vector_store %arg4[%c28, %c0_128], %465 {strides = array<i32>} : memref<32x128xi32, #tpu.memory_space<vmem>>, vector<1x128xi32>,
    %467 = vector.broadcast %436 : vector<1x128xf32> to vector<32x128xf32>
    %468 = arith.addf %467, %3 : vector<32x128xf32>
    %cst_129 = arith.constant dense<0xFF800000> : vector<32xf32>
    %469 = vector.multi_reduction <maximumf>, %468, %cst_129 [1] : vector<32x128xf32> to vector<32xf32>
    %470 = vector.shape_cast %469 : vector<32xf32> to vector<32x1xf32>
    %471 = vector.extract_strided_slice %14 {offsets = [0, 28], sizes = [32, 1], strides = [1, 1]} : vector<32x32xf32> to vector<32x1xf32>
    %472 = arith.addf %470, %471 : vector<32x1xf32>
    %473 = vector.broadcast %455 : vector<32x1xf32> to vector<32x128xf32>
    %474 = arith.addf %473, %2 : vector<32x128xf32>
    %cst_130 = arith.constant dense<0xFF800000> : vector<128xf32>
    %475 = vector.multi_reduction <maximumf>, %474, %cst_130 [0] : vector<32x128xf32> to vector<128xf32>
    %476 = vector.shape_cast %475 : vector<128xf32> to vector<1x128xf32>
    %477 = vector.broadcast %476 : vector<1x128xf32> to vector<32x128xf32>
    %478 = arith.cmpf oeq, %474, %477 : vector<32x128xf32>
    %c32_i32_131 = arith.constant 32 : i32
    %479 = vector.broadcast %c32_i32_131 : i32 to vector<32x128xi32>
    %480 = arith.select %478, %15, %479 : vector<32x128xi1>, vector<32x128xi32>
    %cst_132 = arith.constant dense<2147483647> : vector<128xi32>
    %481 = vector.multi_reduction <minsi>, %480, %cst_132 [0] : vector<32x128xi32> to vector<128xi32>
    %482 = vector.shape_cast %481 : vector<128xi32> to vector<1x128xi32>
    %c13 = arith.constant 13 : index
    %c0_133 = arith.constant 0 : index
    %483 = vector.load %arg4[%c13, %c0_133] : memref<32x128xi32, #tpu.memory_space<vmem>>, vector<1x128xi32>
    tpu.vector_store %arg4[%c13, %c0_133], %482 {strides = array<i32>} : memref<32x128xi32, #tpu.memory_space<vmem>>, vector<1x128xi32>,
    %484 = vector.extract_strided_slice %10 {offsets = [13, 0], sizes = [1, 128], strides = [1, 1]} : vector<32x128xf32> to vector<1x128xf32>
    %485 = arith.addf %476, %484 : vector<1x128xf32>
    %486 = vector.broadcast %472 : vector<32x1xf32> to vector<32x128xf32>
    %487 = arith.addf %486, %2 : vector<32x128xf32>
    %cst_134 = arith.constant dense<0xFF800000> : vector<128xf32>
    %488 = vector.multi_reduction <maximumf>, %487, %cst_134 [0] : vector<32x128xf32> to vector<128xf32>
    %489 = vector.shape_cast %488 : vector<128xf32> to vector<1x128xf32>
    %490 = vector.broadcast %489 : vector<1x128xf32> to vector<32x128xf32>
    %491 = arith.cmpf oeq, %487, %490 : vector<32x128xf32>
    %c32_i32_135 = arith.constant 32 : i32
    %492 = vector.broadcast %c32_i32_135 : i32 to vector<32x128xi32>
    %493 = arith.select %491, %15, %492 : vector<32x128xi1>, vector<32x128xi32>
    %cst_136 = arith.constant dense<2147483647> : vector<128xi32>
    %494 = vector.multi_reduction <minsi>, %493, %cst_136 [0] : vector<32x128xi32> to vector<128xi32>
    %495 = vector.shape_cast %494 : vector<128xi32> to vector<1x128xi32>
    %c29 = arith.constant 29 : index
    %c0_137 = arith.constant 0 : index
    %496 = vector.load %arg4[%c29, %c0_137] : memref<32x128xi32, #tpu.memory_space<vmem>>, vector<1x128xi32>
    tpu.vector_store %arg4[%c29, %c0_137], %495 {strides = array<i32>} : memref<32x128xi32, #tpu.memory_space<vmem>>, vector<1x128xi32>,
    %497 = vector.extract_strided_slice %10 {offsets = [29, 0], sizes = [1, 128], strides = [1, 1]} : vector<32x128xf32> to vector<1x128xf32>
    %498 = arith.addf %489, %497 : vector<1x128xf32>
    %cst_138 = arith.constant dense<0xFF800000> : vector<1xf32>
    %499 = vector.multi_reduction <maximumf>, %485, %cst_138 [1] : vector<1x128xf32> to vector<1xf32>
    %500 = vector.shape_cast %499 : vector<1xf32> to vector<1x1xf32>
    %501 = vector.broadcast %500 : vector<1x1xf32> to vector<1x128xf32>
    %502 = arith.cmpf oeq, %485, %501 : vector<1x128xf32>
    %c128_i32 = arith.constant 128 : i32
    %503 = vector.broadcast %c128_i32 : i32 to vector<1x128xi32>
    %504 = arith.select %502, %16, %503 : vector<1x128xi1>, vector<1x128xi32>
    %cst_139 = arith.constant dense<2147483647> : vector<1xi32>
    %505 = vector.multi_reduction <minsi>, %504, %cst_139 [1] : vector<1x128xi32> to vector<1xi32>
    %506 = vector.shape_cast %505 : vector<1xi32> to vector<1x1xi32>
    %507 = vector.shape_cast %506 : vector<1x1xi32> to vector<1x1xi32>
    %508 = vector.broadcast %507 : vector<1x1xi32> to vector<1x128xi32>
    %c0_140 = arith.constant 0 : index
    %c0_141 = arith.constant 0 : index
    %509 = vector.load %arg4[%c0_140, %c0_141] : memref<32x128xi32, #tpu.memory_space<vmem>>, vector<1x128xi32>
    tpu.vector_store %arg4[%c0_140, %c0_141], %508 {strides = array<i32>} : memref<32x128xi32, #tpu.memory_space<vmem>>, vector<1x128xi32>,
    %cst_142 = arith.constant dense<0xFF800000> : vector<1xf32>
    %510 = vector.multi_reduction <maximumf>, %498, %cst_142 [1] : vector<1x128xf32> to vector<1xf32>
    %511 = vector.shape_cast %510 : vector<1xf32> to vector<1x1xf32>
    %512 = vector.broadcast %511 : vector<1x1xf32> to vector<1x128xf32>
    %513 = arith.cmpf oeq, %498, %512 : vector<1x128xf32>
    %c128_i32_143 = arith.constant 128 : i32
    %514 = vector.broadcast %c128_i32_143 : i32 to vector<1x128xi32>
    %515 = arith.select %513, %16, %514 : vector<1x128xi1>, vector<1x128xi32>
    %cst_144 = arith.constant dense<2147483647> : vector<1xi32>
    %516 = vector.multi_reduction <minsi>, %515, %cst_144 [1] : vector<1x128xi32> to vector<1xi32>
    %517 = vector.shape_cast %516 : vector<1xi32> to vector<1x1xi32>
    %518 = vector.shape_cast %517 : vector<1x1xi32> to vector<1x1xi32>
    %519 = vector.broadcast %518 : vector<1x1xi32> to vector<1x128xi32>
    %c16 = arith.constant 16 : index
    %c0_145 = arith.constant 0 : index
    %520 = vector.load %arg4[%c16, %c0_145] : memref<32x128xi32, #tpu.memory_space<vmem>>, vector<1x128xi32>
    tpu.vector_store %arg4[%c16, %c0_145], %519 {strides = array<i32>} : memref<32x128xi32, #tpu.memory_space<vmem>>, vector<1x128xi32>,
    tpu.enqueue_dma source(%arg4 : memref<32x128xi32, #tpu.memory_space<vmem>>) target(%arg5 : memref<32x128xi32, #tpu.memory_space<smem>>) target_semaphore(%arg6 : memref<!tpu.dma_semaphore, #tpu.memory_space<semaphore_mem>>)
    tpu.wait_dma2 semaphore(%arg6 : memref<!tpu.dma_semaphore, #tpu.memory_space<semaphore_mem>>) src(%arg4 : memref<32x128xi32, #tpu.memory_space<vmem>>) dst(%arg5 : memref<32x128xi32, #tpu.memory_space<smem>>)
    %c0_146 = arith.constant 0 : index
    %c0_147 = arith.constant 0 : index
    %521 = memref.load %arg5[%c0_146, %c0_147] : memref<32x128xi32, #tpu.memory_space<smem>>
    %c0_148 = arith.constant 0 : index
    %c13_149 = arith.constant 13 : index
    %522 = memref.load %arg3[%c0_148, %c13_149] : memref<2x16xi32, #tpu.memory_space<smem>>
    memref.store %521, %arg3[%c0_148, %c13_149] : memref<2x16xi32, #tpu.memory_space<smem>>
    %c13_150 = arith.constant 13 : index
    %523 = arith.index_cast %521 : i32 to index
    %524 = memref.load %arg5[%c13_150, %523] : memref<32x128xi32, #tpu.memory_space<smem>>
    %c0_151 = arith.constant 0 : index
    %c12_152 = arith.constant 12 : index
    %525 = memref.load %arg3[%c0_151, %c12_152] : memref<2x16xi32, #tpu.memory_space<smem>>
    memref.store %524, %arg3[%c0_151, %c12_152] : memref<2x16xi32, #tpu.memory_space<smem>>
    %c12_153 = arith.constant 12 : index
    %526 = arith.index_cast %524 : i32 to index
    %527 = memref.load %arg5[%c12_153, %526] : memref<32x128xi32, #tpu.memory_space<smem>>
    %c0_154 = arith.constant 0 : index
    %c11_155 = arith.constant 11 : index
    %528 = memref.load %arg3[%c0_154, %c11_155] : memref<2x16xi32, #tpu.memory_space<smem>>
    memref.store %527, %arg3[%c0_154, %c11_155] : memref<2x16xi32, #tpu.memory_space<smem>>
    %c11_156 = arith.constant 11 : index
    %529 = arith.index_cast %527 : i32 to index
    %530 = memref.load %arg5[%c11_156, %529] : memref<32x128xi32, #tpu.memory_space<smem>>
    %c0_157 = arith.constant 0 : index
    %c10_158 = arith.constant 10 : index
    %531 = memref.load %arg3[%c0_157, %c10_158] : memref<2x16xi32, #tpu.memory_space<smem>>
    memref.store %530, %arg3[%c0_157, %c10_158] : memref<2x16xi32, #tpu.memory_space<smem>>
    %c10_159 = arith.constant 10 : index
    %532 = arith.index_cast %530 : i32 to index
    %533 = memref.load %arg5[%c10_159, %532] : memref<32x128xi32, #tpu.memory_space<smem>>
    %c0_160 = arith.constant 0 : index
    %c9_161 = arith.constant 9 : index
    %534 = memref.load %arg3[%c0_160, %c9_161] : memref<2x16xi32, #tpu.memory_space<smem>>
    memref.store %533, %arg3[%c0_160, %c9_161] : memref<2x16xi32, #tpu.memory_space<smem>>
    %c9_162 = arith.constant 9 : index
    %535 = arith.index_cast %533 : i32 to index
    %536 = memref.load %arg5[%c9_162, %535] : memref<32x128xi32, #tpu.memory_space<smem>>
    %c0_163 = arith.constant 0 : index
    %c8_164 = arith.constant 8 : index
    %537 = memref.load %arg3[%c0_163, %c8_164] : memref<2x16xi32, #tpu.memory_space<smem>>
    memref.store %536, %arg3[%c0_163, %c8_164] : memref<2x16xi32, #tpu.memory_space<smem>>
    %c8_165 = arith.constant 8 : index
    %538 = arith.index_cast %536 : i32 to index
    %539 = memref.load %arg5[%c8_165, %538] : memref<32x128xi32, #tpu.memory_space<smem>>
    %c0_166 = arith.constant 0 : index
    %c7_167 = arith.constant 7 : index
    %540 = memref.load %arg3[%c0_166, %c7_167] : memref<2x16xi32, #tpu.memory_space<smem>>
    memref.store %539, %arg3[%c0_166, %c7_167] : memref<2x16xi32, #tpu.memory_space<smem>>
    %c7_168 = arith.constant 7 : index
    %541 = arith.index_cast %539 : i32 to index
    %542 = memref.load %arg5[%c7_168, %541] : memref<32x128xi32, #tpu.memory_space<smem>>
    %c0_169 = arith.constant 0 : index
    %c6_170 = arith.constant 6 : index
    %543 = memref.load %arg3[%c0_169, %c6_170] : memref<2x16xi32, #tpu.memory_space<smem>>
    memref.store %542, %arg3[%c0_169, %c6_170] : memref<2x16xi32, #tpu.memory_space<smem>>
    %c6_171 = arith.constant 6 : index
    %544 = arith.index_cast %542 : i32 to index
    %545 = memref.load %arg5[%c6_171, %544] : memref<32x128xi32, #tpu.memory_space<smem>>
    %c0_172 = arith.constant 0 : index
    %c5_173 = arith.constant 5 : index
    %546 = memref.load %arg3[%c0_172, %c5_173] : memref<2x16xi32, #tpu.memory_space<smem>>
    memref.store %545, %arg3[%c0_172, %c5_173] : memref<2x16xi32, #tpu.memory_space<smem>>
    %c5_174 = arith.constant 5 : index
    %547 = arith.index_cast %545 : i32 to index
    %548 = memref.load %arg5[%c5_174, %547] : memref<32x128xi32, #tpu.memory_space<smem>>
    %c0_175 = arith.constant 0 : index
    %c4_176 = arith.constant 4 : index
    %549 = memref.load %arg3[%c0_175, %c4_176] : memref<2x16xi32, #tpu.memory_space<smem>>
    memref.store %548, %arg3[%c0_175, %c4_176] : memref<2x16xi32, #tpu.memory_space<smem>>
    %c4_177 = arith.constant 4 : index
    %550 = arith.index_cast %548 : i32 to index
    %551 = memref.load %arg5[%c4_177, %550] : memref<32x128xi32, #tpu.memory_space<smem>>
    %c0_178 = arith.constant 0 : index
    %c3_179 = arith.constant 3 : index
    %552 = memref.load %arg3[%c0_178, %c3_179] : memref<2x16xi32, #tpu.memory_space<smem>>
    memref.store %551, %arg3[%c0_178, %c3_179] : memref<2x16xi32, #tpu.memory_space<smem>>
    %c3_180 = arith.constant 3 : index
    %553 = arith.index_cast %551 : i32 to index
    %554 = memref.load %arg5[%c3_180, %553] : memref<32x128xi32, #tpu.memory_space<smem>>
    %c0_181 = arith.constant 0 : index
    %c2_182 = arith.constant 2 : index
    %555 = memref.load %arg3[%c0_181, %c2_182] : memref<2x16xi32, #tpu.memory_space<smem>>
    memref.store %554, %arg3[%c0_181, %c2_182] : memref<2x16xi32, #tpu.memory_space<smem>>
    %c2_183 = arith.constant 2 : index
    %556 = arith.index_cast %554 : i32 to index
    %557 = memref.load %arg5[%c2_183, %556] : memref<32x128xi32, #tpu.memory_space<smem>>
    %c0_184 = arith.constant 0 : index
    %c1_185 = arith.constant 1 : index
    %558 = memref.load %arg3[%c0_184, %c1_185] : memref<2x16xi32, #tpu.memory_space<smem>>
    memref.store %557, %arg3[%c0_184, %c1_185] : memref<2x16xi32, #tpu.memory_space<smem>>
    %c1_186 = arith.constant 1 : index
    %559 = arith.index_cast %557 : i32 to index
    %560 = memref.load %arg5[%c1_186, %559] : memref<32x128xi32, #tpu.memory_space<smem>>
    %c0_187 = arith.constant 0 : index
    %c0_188 = arith.constant 0 : index
    %561 = memref.load %arg3[%c0_187, %c0_188] : memref<2x16xi32, #tpu.memory_space<smem>>
    memref.store %560, %arg3[%c0_187, %c0_188] : memref<2x16xi32, #tpu.memory_space<smem>>
    %c0_i32 = arith.constant 0 : i32
    %c0_189 = arith.constant 0 : index
    %c14 = arith.constant 14 : index
    %562 = memref.load %arg3[%c0_189, %c14] : memref<2x16xi32, #tpu.memory_space<smem>>
    memref.store %c0_i32, %arg3[%c0_189, %c14] : memref<2x16xi32, #tpu.memory_space<smem>>
    %c0_i32_190 = arith.constant 0 : i32
    %c0_191 = arith.constant 0 : index
    %c15 = arith.constant 15 : index
    %563 = memref.load %arg3[%c0_191, %c15] : memref<2x16xi32, #tpu.memory_space<smem>>
    memref.store %c0_i32_190, %arg3[%c0_191, %c15] : memref<2x16xi32, #tpu.memory_space<smem>>
    %c16_192 = arith.constant 16 : index
    %c0_193 = arith.constant 0 : index
    %564 = memref.load %arg5[%c16_192, %c0_193] : memref<32x128xi32, #tpu.memory_space<smem>>
    %c1_194 = arith.constant 1 : index
    %c13_195 = arith.constant 13 : index
    %565 = memref.load %arg3[%c1_194, %c13_195] : memref<2x16xi32, #tpu.memory_space<smem>>
    memref.store %564, %arg3[%c1_194, %c13_195] : memref<2x16xi32, #tpu.memory_space<smem>>
    %c29_196 = arith.constant 29 : index
    %566 = arith.index_cast %564 : i32 to index
    %567 = memref.load %arg5[%c29_196, %566] : memref<32x128xi32, #tpu.memory_space<smem>>
    %c1_197 = arith.constant 1 : index
    %c12_198 = arith.constant 12 : index
    %568 = memref.load %arg3[%c1_197, %c12_198] : memref<2x16xi32, #tpu.memory_space<smem>>
    memref.store %567, %arg3[%c1_197, %c12_198] : memref<2x16xi32, #tpu.memory_space<smem>>
    %c28_199 = arith.constant 28 : index
    %569 = arith.index_cast %567 : i32 to index
    %570 = memref.load %arg5[%c28_199, %569] : memref<32x128xi32, #tpu.memory_space<smem>>
    %c1_200 = arith.constant 1 : index
    %c11_201 = arith.constant 11 : index
    %571 = memref.load %arg3[%c1_200, %c11_201] : memref<2x16xi32, #tpu.memory_space<smem>>
    memref.store %570, %arg3[%c1_200, %c11_201] : memref<2x16xi32, #tpu.memory_space<smem>>
    %c27_202 = arith.constant 27 : index
    %572 = arith.index_cast %570 : i32 to index
    %573 = memref.load %arg5[%c27_202, %572] : memref<32x128xi32, #tpu.memory_space<smem>>
    %c1_203 = arith.constant 1 : index
    %c10_204 = arith.constant 10 : index
    %574 = memref.load %arg3[%c1_203, %c10_204] : memref<2x16xi32, #tpu.memory_space<smem>>
    memref.store %573, %arg3[%c1_203, %c10_204] : memref<2x16xi32, #tpu.memory_space<smem>>
    %c26_205 = arith.constant 26 : index
    %575 = arith.index_cast %573 : i32 to index
    %576 = memref.load %arg5[%c26_205, %575] : memref<32x128xi32, #tpu.memory_space<smem>>
    %c1_206 = arith.constant 1 : index
    %c9_207 = arith.constant 9 : index
    %577 = memref.load %arg3[%c1_206, %c9_207] : memref<2x16xi32, #tpu.memory_space<smem>>
    memref.store %576, %arg3[%c1_206, %c9_207] : memref<2x16xi32, #tpu.memory_space<smem>>
    %c25_208 = arith.constant 25 : index
    %578 = arith.index_cast %576 : i32 to index
    %579 = memref.load %arg5[%c25_208, %578] : memref<32x128xi32, #tpu.memory_space<smem>>
    %c1_209 = arith.constant 1 : index
    %c8_210 = arith.constant 8 : index
    %580 = memref.load %arg3[%c1_209, %c8_210] : memref<2x16xi32, #tpu.memory_space<smem>>
    memref.store %579, %arg3[%c1_209, %c8_210] : memref<2x16xi32, #tpu.memory_space<smem>>
    %c24_211 = arith.constant 24 : index
    %581 = arith.index_cast %579 : i32 to index
    %582 = memref.load %arg5[%c24_211, %581] : memref<32x128xi32, #tpu.memory_space<smem>>
    %c1_212 = arith.constant 1 : index
    %c7_213 = arith.constant 7 : index
    %583 = memref.load %arg3[%c1_212, %c7_213] : memref<2x16xi32, #tpu.memory_space<smem>>
    memref.store %582, %arg3[%c1_212, %c7_213] : memref<2x16xi32, #tpu.memory_space<smem>>
    %c23_214 = arith.constant 23 : index
    %584 = arith.index_cast %582 : i32 to index
    %585 = memref.load %arg5[%c23_214, %584] : memref<32x128xi32, #tpu.memory_space<smem>>
    %c1_215 = arith.constant 1 : index
    %c6_216 = arith.constant 6 : index
    %586 = memref.load %arg3[%c1_215, %c6_216] : memref<2x16xi32, #tpu.memory_space<smem>>
    memref.store %585, %arg3[%c1_215, %c6_216] : memref<2x16xi32, #tpu.memory_space<smem>>
    %c22_217 = arith.constant 22 : index
    %587 = arith.index_cast %585 : i32 to index
    %588 = memref.load %arg5[%c22_217, %587] : memref<32x128xi32, #tpu.memory_space<smem>>
    %c1_218 = arith.constant 1 : index
    %c5_219 = arith.constant 5 : index
    %589 = memref.load %arg3[%c1_218, %c5_219] : memref<2x16xi32, #tpu.memory_space<smem>>
    memref.store %588, %arg3[%c1_218, %c5_219] : memref<2x16xi32, #tpu.memory_space<smem>>
    %c21_220 = arith.constant 21 : index
    %590 = arith.index_cast %588 : i32 to index
    %591 = memref.load %arg5[%c21_220, %590] : memref<32x128xi32, #tpu.memory_space<smem>>
    %c1_221 = arith.constant 1 : index
    %c4_222 = arith.constant 4 : index
    %592 = memref.load %arg3[%c1_221, %c4_222] : memref<2x16xi32, #tpu.memory_space<smem>>
    memref.store %591, %arg3[%c1_221, %c4_222] : memref<2x16xi32, #tpu.memory_space<smem>>
    %c20_223 = arith.constant 20 : index
    %593 = arith.index_cast %591 : i32 to index
    %594 = memref.load %arg5[%c20_223, %593] : memref<32x128xi32, #tpu.memory_space<smem>>
    %c1_224 = arith.constant 1 : index
    %c3_225 = arith.constant 3 : index
    %595 = memref.load %arg3[%c1_224, %c3_225] : memref<2x16xi32, #tpu.memory_space<smem>>
    memref.store %594, %arg3[%c1_224, %c3_225] : memref<2x16xi32, #tpu.memory_space<smem>>
    %c19_226 = arith.constant 19 : index
    %596 = arith.index_cast %594 : i32 to index
    %597 = memref.load %arg5[%c19_226, %596] : memref<32x128xi32, #tpu.memory_space<smem>>
    %c1_227 = arith.constant 1 : index
    %c2_228 = arith.constant 2 : index
    %598 = memref.load %arg3[%c1_227, %c2_228] : memref<2x16xi32, #tpu.memory_space<smem>>
    memref.store %597, %arg3[%c1_227, %c2_228] : memref<2x16xi32, #tpu.memory_space<smem>>
    %c18_229 = arith.constant 18 : index
    %599 = arith.index_cast %597 : i32 to index
    %600 = memref.load %arg5[%c18_229, %599] : memref<32x128xi32, #tpu.memory_space<smem>>
    %c1_230 = arith.constant 1 : index
    %c1_231 = arith.constant 1 : index
    %601 = memref.load %arg3[%c1_230, %c1_231] : memref<2x16xi32, #tpu.memory_space<smem>>
    memref.store %600, %arg3[%c1_230, %c1_231] : memref<2x16xi32, #tpu.memory_space<smem>>
    %c17_232 = arith.constant 17 : index
    %602 = arith.index_cast %600 : i32 to index
    %603 = memref.load %arg5[%c17_232, %602] : memref<32x128xi32, #tpu.memory_space<smem>>
    %c1_233 = arith.constant 1 : index
    %c0_234 = arith.constant 0 : index
    %604 = memref.load %arg3[%c1_233, %c0_234] : memref<2x16xi32, #tpu.memory_space<smem>>
    memref.store %603, %arg3[%c1_233, %c0_234] : memref<2x16xi32, #tpu.memory_space<smem>>
    %c0_i32_235 = arith.constant 0 : i32
    %c1_236 = arith.constant 1 : index
    %c14_237 = arith.constant 14 : index
    %605 = memref.load %arg3[%c1_236, %c14_237] : memref<2x16xi32, #tpu.memory_space<smem>>
    memref.store %c0_i32_235, %arg3[%c1_236, %c14_237] : memref<2x16xi32, #tpu.memory_space<smem>>
    %c0_i32_238 = arith.constant 0 : i32
    %c1_239 = arith.constant 1 : index
    %c15_240 = arith.constant 15 : index
    %606 = memref.load %arg3[%c1_239, %c15_240] : memref<2x16xi32, #tpu.memory_space<smem>>
    memref.store %c0_i32_238, %arg3[%c1_239, %c15_240] : memref<2x16xi32, #tpu.memory_space<smem>>
    return
  }
}

</mosaic_0001>

<llo_original>
// kernel: _crf_forward.1
$region0: #{_crf_forward.1}
  #allocation0 [shape = 'u32[]', space=smem, size = 0x4, offset = 0x4, fixed_abs, tag = 'smem constant byte address 0x4 - core index']
  #allocation1 [shape = 'u32[72,128]{1,0:T(1,128)}', space=vmem, size = 0x9000, scoped, tag = 'internal scratch']
  #allocation2 [shape = 's32[32,128]{1,0:T(8,128)}', space=vmem, size = 0x4000, scoped, tag = 'scratch operand']
  #allocation3 [shape = 's32[32,128]{1,0:T(8,128)}', space=smem, size = 0x4000, scoped, tag = 'scratch operand']
  #allocation4 [shape = 's32[1]{0}', space=sflag, size = 0x4, scoped, tag = 'scratch operand']
  #allocation7 [shape = 's32[]', space=sflag, size = 0x4, offset = 0, fixed_abs, tag = 'sflag constant byte address 0x0 - dummy sync flag']
  #allocation8 [shape = 's32[]', space=sflag, size = 0x4, offset = 0, fixed_abs, tag = 'sflag constant byte address 0x0 - dummy sync flag']
  #allocation9 [shape = 'u32[]', space=smem, size = 0x4, offset = 0x44, fixed_abs, tag = 'smem constant byte address 0x44 - assertion arg 0']
  #allocation10 [shape = 'u32[]', space=smem, size = 0x4, offset = 0x48, fixed_abs, tag = 'smem constant byte address 0x48 - assertion arg 1']
  %s0 = inlined_call_operand.vmem [shape: f32[32,128], index: 0, kind: input, shape index: {}]
  %s1 = inlined_call_operand.vmem [shape: f32[128,32], index: 1, kind: input, shape index: {}]
  %s2 = inlined_call_operand.vmem [shape: f32[264,128], index: 2, kind: input, shape index: {}]
  %s3 = inlined_call_operand.hbm [shape: s32[2,16], index: 3, kind: output, shape index: {}]
  %s4 = sld [smem:[#allocation0]]
  $region26: #{_crf_forward.1} parent=0
    _
  %s6 = ssub.s32 1, %s4
  %s7 = scalar_select 0, %s6, %s4
  $region1: #{_crf_forward.1} parent=0
    #allocation5 [shape = 'u8[1024]{0}', space=smem, size = 0x400, scoped, tag = 'output window, operand 0, single buffered']
    #allocation6 [shape = 's32[1]{0}', space=sflag, size = 0x4, scoped, tag = 'scoped memory for _crf_forward.1']
    %8 = vsyncpa [#allocation6], 0
    // Predicated region
    $region2: #{_crf_forward.1} parent=1 // pred_check
      _
    $region3: #{_crf_forward.1} parent=1 // pred_check_branch
      %10 = sbr.rel (0) target = $region5
    $region4: #{_crf_forward.1} parent=1 // pred_region
      _
    $region5: #{_crf_forward.1} parent=1 // pred_fallthru
      _
    // Predicated region
    $region6: #{_crf_forward.1} parent=1 // pred_check
      _
    $region7: #{_crf_forward.1} parent=1 // pred_check_branch
      %12 = sbr.rel (0) target = $region9
    $region8: #{_crf_forward.1} parent=1 // pred_region
      _
    $region9: #{_crf_forward.1} parent=1 // pred_fallthru
      _
    // Predicated region
    $region10: #{_crf_forward.1} parent=1 // pred_check
      _
    $region11: #{_crf_forward.1} parent=1 // pred_check_branch
      %14 = sbr.rel (0) target = $region13
    $region12: #{_crf_forward.1} parent=1 // pred_region
      _
    $region13: #{_crf_forward.1} parent=1 // pred_fallthru
      _
    %v15 = vld [vmem:[%s2] sm:$0xff]
    %v16 = vld [vmem:[%s2 + $0x8] sm:$0xff]
    %v17 = vld [vmem:[%s2 + $0x10] sm:$0xff]
    %v18 = vld [vmem:[%s2 + $0x18] sm:$0xff]
    %v19 = vld [vmem:[%s2 + $0x20] sm:$0xff]
    %v20 = vld [vmem:[%s2 + $0x28] sm:$0xff]
    %v21 = vld [vmem:[%s2 + $0x30] sm:$0xff]
    %v22 = vld [vmem:[%s2 + $0x38] sm:$0xff]
    %v23 = vld [vmem:[%s2 + $0x40] sm:$0xff]
    %v24 = vld [vmem:[%s2 + $0x48] sm:$0xff]
    %v25 = vld [vmem:[%s2 + $0x50] sm:$0xff]
    %v26 = vld [vmem:[%s2 + $0x58] sm:$0xff]
    %v27 = vld [vmem:[%s2 + $0x60] sm:$0xff]
    %v28 = vld [vmem:[%s2 + $0x68] sm:$0xff]
    %v29 = vld [vmem:[%s2 + $0x70] sm:$0xff]
    %v30 = vld [vmem:[%s2 + $0x78] sm:$0xff]
    %v31 = vld [vmem:[%s2 + $0x80] sm:$0xff]
    %v32 = vld [vmem:[%s2 + $0x88] sm:$0xff]
    %v33 = vld [vmem:[%s2 + $0x90] sm:$0xff]
    %v34 = vld [vmem:[%s2 + $0x98] sm:$0xff]
    %v35 = vld [vmem:[%s2 + $0xa0] sm:$0xff]
    %v36 = vld [vmem:[%s2 + $0xa8] sm:$0xff]
    %v37 = vld [vmem:[%s2 + $0xb0] sm:$0xff]
    %v38 = vld [vmem:[%s2 + $0xb8] sm:$0xff]
    %v39 = vld [vmem:[%s2 + $0xc0] sm:$0xff]
    %v40 = vld [vmem:[%s2 + $0xc8] sm:$0xff]
    %v41 = vld [vmem:[%s2 + $0xd0] sm:$0xff]
    %v42 = vld [vmem:[%s2 + $0xd8] sm:$0xff]
    %v43 = vld [vmem:[%s2 + $0xe0] sm:$0x1]
    %v44 = vld [vmem:[%s2 + $0xe8] sm:$0xff]
    %v45 = vld [vmem:[%s2 + $0xf0] sm:$0xff]
    %v46 = vld [vmem:[%s2 + $0xf8] sm:$0xff]
    %v47 = vld [vmem:[%s2 + $0x100] sm:$0xff]
    %v48 = vld [vmem:[%s0] sm:$0xff]
    %v49 = vld [vmem:[%s0 + $0x8] sm:$0xff]
    %v50 = vld [vmem:[%s0 + $0x10] sm:$0xff]
    %v51 = vld [vmem:[%s0 + $0x18] sm:$0xff]
    %v52 = vperm.slane %v43, 0
    %53 = vmatpush.msra.mxu0 %v30
    %54 = vmatpush.msra.mxu0 %v29
    %55 = vmatpush.msra.mxu0 %v28
    %56 = vmatpush.msra.mxu0 %v27
    %57 = vmatpush.msra.mxu0 %v26
    %58 = vmatpush.msra.mxu0 %v25
    %59 = vmatpush.msra.mxu0 %v24
    %60 = vmatpush.msra.mxu0 %v23
    %61 = vmatpush.msra.mxu0 %v22
    %62 = vmatpush.msra.mxu0 %v21
    %63 = vmatpush.msra.mxu0 %v20
    %64 = vmatpush.msra.mxu0 %v19
    %65 = vmatpush.msra.mxu0 %v18
    %66 = vmatpush.msra.mxu0 %v17
    %67 = vmatpush.msra.mxu0 %v16
    %68 = vmatpush.msra.mxu0 %v15
    %69 = vmatmul.f32.gmra.mxu0 %v48
    %v70 = vpop.f32.mrf.mxu0
    %v71 = vadd.f32 %v52, %v70
    %72 = vmatmul.f32.gmra.mxu0 %v49
    %v73 = vpop.f32.mrf.mxu0
    %v74 = vadd.f32 %v52, %v73
    %75 = vmatmul.f32.gmra.mxu0 %v50
    %v76 = vpop.f32.mrf.mxu0
    %v77 = vadd.f32 %v52, %v76
    %78 = vmatmul.f32.gmra.mxu0 %v51
    %v79 = vpop.f32.mrf.mxu0
    %v80 = vadd.f32 %v52, %v79
    %81 = vdwg.mxu0
    %v82 = vld [vmem:[%s1] sm:$0xff]
    %v83 = vld [vmem:[%s1 + $0x8] sm:$0xff]
    %v84 = vld [vmem:[%s1 + $0x10] sm:$0xff]
    %v85 = vld [vmem:[%s1 + $0x18] sm:$0xff]
    %v86 = vld [vmem:[%s1 + $0x20] sm:$0xff]
    %v87 = vld [vmem:[%s1 + $0x28] sm:$0xff]
    %v88 = vld [vmem:[%s1 + $0x30] sm:$0xff]
    %v89 = vld [vmem:[%s1 + $0x38] sm:$0xff]
    %v90 = vld [vmem:[%s1 + $0x40] sm:$0xff]
    %v91 = vld [vmem:[%s1 + $0x48] sm:$0xff]
    %v92 = vld [vmem:[%s1 + $0x50] sm:$0xff]
    %v93 = vld [vmem:[%s1 + $0x58] sm:$0xff]
    %v94 = vld [vmem:[%s1 + $0x60] sm:$0xff]
    %v95 = vld [vmem:[%s1 + $0x68] sm:$0xff]
    %v96 = vld [vmem:[%s1 + $0x70] sm:$0xff]
    %v97 = vld [vmem:[%s1 + $0x78] sm:$0xff]
    %99 = vset.pattern.permute.xlu0 0
    %100 = vperm.xlu0 %99, %v44
    %v101 = vpop.permute.xlu0 %100
    %104 = vset.pattern.permute.xlu0 0
    %105 = vperm.xlu0 %104, %v45
    %v106 = vpop.permute.xlu0 %105
    %109 = vset.pattern.permute.xlu0 0
    %110 = vperm.xlu0 %109, %v46
    %v111 = vpop.permute.xlu0 %110
    %114 = vset.pattern.permute.xlu0 0
    %115 = vperm.xlu0 %114, %v47
    %v116 = vpop.permute.xlu0 %115
    %118 = vmatpush.msra.mxu0 %v97
    %119 = vmatpush.msra.mxu0 %v96
    %120 = vmatpush.msra.mxu0 %v95
    %121 = vmatpush.msra.mxu0 %v94
    %122 = vmatpush.msra.mxu0 %v93
    %123 = vmatpush.msra.mxu0 %v92
    %124 = vmatpush.msra.mxu0 %v91
    %125 = vmatpush.msra.mxu0 %v90
    %126 = vmatpush.msra.mxu0 %v89
    %127 = vmatpush.msra.mxu0 %v88
    %128 = vmatpush.msra.mxu0 %v87
    %129 = vmatpush.msra.mxu0 %v86
    %130 = vmatpush.msra.mxu0 %v85
    %131 = vmatpush.msra.mxu0 %v84
    %132 = vmatpush.msra.mxu0 %v83
    %133 = vmatpush.msra.mxu0 %v82
    %134 = vmatmul.f32.gmra.mxu0 %v31
    %v135 = vpop.f32.mrf.mxu0
    %v136 = vadd.f32 %v101, %v135
    %137 = vmatmul.f32.gmra.mxu0 %v32
    %v138 = vpop.f32.mrf.mxu0
    %v139 = vadd.f32 %v106, %v138
    %140 = vmatmul.f32.gmra.mxu0 %v33
    %v141 = vpop.f32.mrf.mxu0
    %v142 = vadd.f32 %v111, %v141
    %143 = vmatmul.f32.gmra.mxu0 %v34
    %v144 = vpop.f32.mrf.mxu0
    %v145 = vadd.f32 %v116, %v144
    %146 = vdwg.mxu0
    %v147 = vlaneseq
    %v148 = vshrl.u32 %v147, 7
    %v149 = vadd.s32 %v148, 8
    %v150 = vadd.s32 %v148, 16
    %v151 = vadd.s32 %v148, 24
    %v152 = vlaneseq
    %v153 = vand.u32 %v152, 127
    %155 = vset.pattern.permute.xlu0 0
    %156 = vperm.xlu0 %155, %v136
    %v157 = vpop.permute.xlu0 %156
    %160 = vset.pattern.permute.xlu0 0
    %161 = vperm.xlu0 %160, %v139
    %v162 = vpop.permute.xlu0 %161
    %165 = vset.pattern.permute.xlu0 0
    %166 = vperm.xlu0 %165, %v142
    %v167 = vpop.permute.xlu0 %166
    %170 = vset.pattern.permute.xlu0 0
    %171 = vperm.xlu0 %170, %v145
    %v172 = vpop.permute.xlu0 %171
    %v174 = vadd.f32 %v157, %v35
    %v175 = vadd.f32 %v162, %v36
    %v176 = vadd.f32 %v167, %v37
    %v177 = vadd.f32 %v172, %v38
    %v178 = vmax.f32 %v174, %v175
    %v179 = vmax.f32 %v176, %v177
    %v180 = vmax.f32 %v178, %v179
    %v181 = vrot.slane %v180, 4
    %v182 = vmax.f32 %v180, %v181
    %v183 = vrot.slane %v182, 2
    %v184 = vmax.f32 %v182, %v183
    %v185 = vrot.slane %v184, 1
    %v186 = vmax.f32 %v184, %v185
    %vm187 = vcmp.eq.f32.partialorder %v174, %v186
    %vm188 = vcmp.eq.f32.partialorder %v175, %v186
    %vm189 = vcmp.eq.f32.partialorder %v176, %v186
    %vm190 = vcmp.eq.f32.partialorder %v177, %v186
    %v191 = vsel %vm187, %v148, 32
    %v192 = vsel %vm188, %v149, 32
    %v193 = vsel %vm189, %v150, 32
    %v194 = vsel %vm190, %v151, 32
    %vm195 = vcmp.lt.s32.totalorder %v191, %v192
    %v196 = vsel %vm195, %v191, %v192
    %vm197 = vcmp.lt.s32.totalorder %v193, %v194
    %v198 = vsel %vm197, %v193, %v194
    %vm199 = vcmp.lt.s32.totalorder %v196, %v198
    %v200 = vsel %vm199, %v196, %v198
    %v201 = vrot.slane %v200, 4
    %vm202 = vcmp.lt.s32.totalorder %v200, %v201
    %v203 = vsel %vm202, %v200, %v201
    %v204 = vrot.slane %v203, 2
    %vm205 = vcmp.lt.s32.totalorder %v203, %v204
    %v206 = vsel %vm205, %v203, %v204
    %v207 = vrot.slane %v206, 1
    %vm208 = vcmp.lt.s32.totalorder %v206, %v207
    %v209 = vsel %vm208, %v206, %v207
    %210 = vst [vmem:[#allocation2 + $0x1] sm:$0x1] %v209
    %v211 = vperm.slane %v71, 0
    %v212 = vadd.f32 %v211, %v39
    %v213 = vadd.f32 %v211, %v40
    %v214 = vadd.f32 %v211, %v41
    %v215 = vadd.f32 %v211, %v42
    %216 = vmax.xlane.f32.xlu0 %v212
    %v217 = vpop.xlane.xlu0 %216
    %218 = vmax.xlane.f32.xlu0 %v213
    %v219 = vpop.xlane.xlu0 %218
    %220 = vmax.xlane.f32.xlu0 %v214
    %v221 = vpop.xlane.xlu0 %220
    %222 = vmax.xlane.f32.xlu0 %v215
    %v223 = vpop.xlane.xlu0 %222
    %v224 = vadd.f32 %v186, %v71
    %v225 = vadd.f32 %v217, %v136
    %v226 = vadd.f32 %v219, %v139
    %v227 = vadd.f32 %v221, %v142
    %v228 = vadd.f32 %v223, %v145
    %229 = vset.pattern.permute.xlu0 16
    %230 = vperm.xlu0 %229, %v136
    %v231 = vpop.permute.xlu0 %230
    %233 = vset.pattern.permute.xlu0 16
    %234 = vperm.xlu0 %233, %v139
    %v235 = vpop.permute.xlu0 %234
    %237 = vset.pattern.permute.xlu0 16
    %238 = vperm.xlu0 %237, %v142
    %v239 = vpop.permute.xlu0 %238
    %241 = vset.pattern.permute.xlu0 16
    %242 = vperm.xlu0 %241, %v145
    %v243 = vpop.permute.xlu0 %242
    %v245 = vadd.f32 %v231, %v35
    %v246 = vadd.f32 %v235, %v36
    %v247 = vadd.f32 %v239, %v37
    %v248 = vadd.f32 %v243, %v38
    %v249 = vmax.f32 %v245, %v246
    %v250 = vmax.f32 %v247, %v248
    %v251 = vmax.f32 %v249, %v250
    %v252 = vrot.slane %v251, 4
    %v253 = vmax.f32 %v251, %v252
    %v254 = vrot.slane %v253, 2
    %v255 = vmax.f32 %v253, %v254
    %v256 = vrot.slane %v255, 1
    %v257 = vmax.f32 %v255, %v256
    %vm258 = vcmp.eq.f32.partialorder %v245, %v257
    %vm259 = vcmp.eq.f32.partialorder %v246, %v257
    %vm260 = vcmp.eq.f32.partialorder %v247, %v257
    %vm261 = vcmp.eq.f32.partialorder %v248, %v257
    %v262 = vsel %vm258, %v148, 32
    %v263 = vsel %vm259, %v149, 32
    %v264 = vsel %vm260, %v150, 32
    %v265 = vsel %vm261, %v151, 32
    %vm266 = vcmp.lt.s32.totalorder %v262, %v263
    %v267 = vsel %vm266, %v262, %v263
    %vm268 = vcmp.lt.s32.totalorder %v264, %v265
    %v269 = vsel %vm268, %v264, %v265
    %vm270 = vcmp.lt.s32.totalorder %v267, %v269
    %v271 = vsel %vm270, %v267, %v269
    %v272 = vrot.slane %v271, 4
    %vm273 = vcmp.lt.s32.totalorder %v271, %v272
    %v274 = vsel %vm273, %v271, %v272
    %v275 = vrot.slane %v274, 2
    %vm276 = vcmp.lt.s32.totalorder %v274, %v275
    %v277 = vsel %vm276, %v274, %v275
    %v278 = vrot.slane %v277, 1
    %vm279 = vcmp.lt.s32.totalorder %v277, %v278
    %v280 = vsel %vm279, %v277, %v278
    %281 = vst [vmem:[#allocation2 + $0x11] sm:$0x1] %v280
    %v282 = vperm.slane %v77, 0
    %v283 = vadd.f32 %v282, %v39
    %v284 = vadd.f32 %v282, %v40
    %v285 = vadd.f32 %v282, %v41
    %v286 = vadd.f32 %v282, %v42
    %287 = vmax.xlane.f32.xlu0 %v283
    %v288 = vpop.xlane.xlu0 %287
    %289 = vmax.xlane.f32.xlu0 %v284
    %v290 = vpop.xlane.xlu0 %289
    %291 = vmax.xlane.f32.xlu0 %v285
    %v292 = vpop.xlane.xlu0 %291
    %293 = vmax.xlane.f32.xlu0 %v286
    %v294 = vpop.xlane.xlu0 %293
    %v295 = vadd.f32 %v257, %v77
    %v296 = vadd.f32 %v288, %v136
    %v297 = vadd.f32 %v290, %v139
    %v298 = vadd.f32 %v292, %v142
    %v299 = vadd.f32 %v294, %v145
    %301 = vset.pattern.permute.xlu0 1
    %302 = vperm.xlu0 %301, %v225
    %v303 = vpop.permute.xlu0 %302
    %306 = vset.pattern.permute.xlu0 1
    %307 = vperm.xlu0 %306, %v226
    %v308 = vpop.permute.xlu0 %307
    %311 = vset.pattern.permute.xlu0 1
    %312 = vperm.xlu0 %311, %v227
    %v313 = vpop.permute.xlu0 %312
    %316 = vset.pattern.permute.xlu0 1
    %317 = vperm.xlu0 %316, %v228
    %v318 = vpop.permute.xlu0 %317
    %v320 = vadd.f32 %v303, %v35
    %v321 = vadd.f32 %v308, %v36
    %v322 = vadd.f32 %v313, %v37
    %v323 = vadd.f32 %v318, %v38
    %v324 = vmax.f32 %v320, %v321
    %v325 = vmax.f32 %v322, %v323
    %v326 = vmax.f32 %v324, %v325
    %v327 = vrot.slane %v326, 4
    %v328 = vmax.f32 %v326, %v327
    %v329 = vrot.slane %v328, 2
    %v330 = vmax.f32 %v328, %v329
    %v331 = vrot.slane %v330, 1
    %v332 = vmax.f32 %v330, %v331
    %vm333 = vcmp.eq.f32.partialorder %v320, %v332
    %vm334 = vcmp.eq.f32.partialorder %v321, %v332
    %vm335 = vcmp.eq.f32.partialorder %v322, %v332
    %vm336 = vcmp.eq.f32.partialorder %v323, %v332
    %v337 = vsel %vm333, %v148, 32
    %v338 = vsel %vm334, %v149, 32
    %v339 = vsel %vm335, %v150, 32
    %v340 = vsel %vm336, %v151, 32
    %vm341 = vcmp.lt.s32.totalorder %v337, %v338
    %v342 = vsel %vm341, %v337, %v338
    %vm343 = vcmp.lt.s32.totalorder %v339, %v340
    %v344 = vsel %vm343, %v339, %v340
    %vm345 = vcmp.lt.s32.totalorder %v342, %v344
    %v346 = vsel %vm345, %v342, %v344
    %v347 = vrot.slane %v346, 4
    %vm348 = vcmp.lt.s32.totalorder %v346, %v347
    %v349 = vsel %vm348, %v346, %v347
    %v350 = vrot.slane %v349, 2
    %vm351 = vcmp.lt.s32.totalorder %v349, %v350
    %v352 = vsel %vm351, %v349, %v350
    %v353 = vrot.slane %v352, 1
    %vm354 = vcmp.lt.s32.totalorder %v352, %v353
    %v355 = vsel %vm354, %v352, %v353
    %356 = vst [vmem:[#allocation2 + $0x2] sm:$0x1] %v355
    %v357 = vperm.slane %v224, 1
    %v358 = vadd.f32 %v357, %v39
    %v359 = vadd.f32 %v357, %v40
    %v360 = vadd.f32 %v357, %v41
    %v361 = vadd.f32 %v357, %v42
    %362 = vmax.xlane.f32.xlu0 %v358
    %v363 = vpop.xlane.xlu0 %362
    %364 = vmax.xlane.f32.xlu0 %v359
    %v365 = vpop.xlane.xlu0 %364
    %366 = vmax.xlane.f32.xlu0 %v360
    %v367 = vpop.xlane.xlu0 %366
    %368 = vmax.xlane.f32.xlu0 %v361
    %v369 = vpop.xlane.xlu0 %368
    %v370 = vadd.f32 %v332, %v71
    %v371 = vadd.f32 %v363, %v136
    %v372 = vadd.f32 %v365, %v139
    %v373 = vadd.f32 %v367, %v142
    %v374 = vadd.f32 %v369, %v145
    %376 = vset.pattern.permute.xlu0 17
    %377 = vperm.xlu0 %376, %v296
    %v378 = vpop.permute.xlu0 %377
    %381 = vset.pattern.permute.xlu0 17
    %382 = vperm.xlu0 %381, %v297
    %v383 = vpop.permute.xlu0 %382
    %386 = vset.pattern.permute.xlu0 17
    %387 = vperm.xlu0 %386, %v298
    %v388 = vpop.permute.xlu0 %387
    %391 = vset.pattern.permute.xlu0 17
    %392 = vperm.xlu0 %391, %v299
    %v393 = vpop.permute.xlu0 %392
    %v395 = vadd.f32 %v378, %v35
    %v396 = vadd.f32 %v383, %v36
    %v397 = vadd.f32 %v388, %v37
    %v398 = vadd.f32 %v393, %v38
    %v399 = vmax.f32 %v395, %v396
    %v400 = vmax.f32 %v397, %v398
    %v401 = vmax.f32 %v399, %v400
    %v402 = vrot.slane %v401, 4
    %v403 = vmax.f32 %v401, %v402
    %v404 = vrot.slane %v403, 2
    %v405 = vmax.f32 %v403, %v404
    %v406 = vrot.slane %v405, 1
    %v407 = vmax.f32 %v405, %v406
    %vm408 = vcmp.eq.f32.partialorder %v395, %v407
    %vm409 = vcmp.eq.f32.partialorder %v396, %v407
    %vm410 = vcmp.eq.f32.partialorder %v397, %v407
    %vm411 = vcmp.eq.f32.partialorder %v398, %v407
    %v412 = vsel %vm408, %v148, 32
    %v413 = vsel %vm409, %v149, 32
    %v414 = vsel %vm410, %v150, 32
    %v415 = vsel %vm411, %v151, 32
    %vm416 = vcmp.lt.s32.totalorder %v412, %v413
    %v417 = vsel %vm416, %v412, %v413
    %vm418 = vcmp.lt.s32.totalorder %v414, %v415
    %v419 = vsel %vm418, %v414, %v415
    %vm420 = vcmp.lt.s32.totalorder %v417, %v419
    %v421 = vsel %vm420, %v417, %v419
    %v422 = vrot.slane %v421, 4
    %vm423 = vcmp.lt.s32.totalorder %v421, %v422
    %v424 = vsel %vm423, %v421, %v422
    %v425 = vrot.slane %v424, 2
    %vm426 = vcmp.lt.s32.totalorder %v424, %v425
    %v427 = vsel %vm426, %v424, %v425
    %v428 = vrot.slane %v427, 1
    %vm429 = vcmp.lt.s32.totalorder %v427, %v428
    %v430 = vsel %vm429, %v427, %v428
    %431 = vst [vmem:[#allocation2 + $0x12] sm:$0x1] %v430
    %v432 = vperm.slane %v295, 1
    %v433 = vadd.f32 %v432, %v39
    %v434 = vadd.f32 %v432, %v40
    %v435 = vadd.f32 %v432, %v41
    %v436 = vadd.f32 %v432, %v42
    %437 = vmax.xlane.f32.xlu0 %v433
    %v438 = vpop.xlane.xlu0 %437
    %439 = vmax.xlane.f32.xlu0 %v434
    %v440 = vpop.xlane.xlu0 %439
    %441 = vmax.xlane.f32.xlu0 %v435
    %v442 = vpop.xlane.xlu0 %441
    %443 = vmax.xlane.f32.xlu0 %v436
    %v444 = vpop.xlane.xlu0 %443
    %v445 = vadd.f32 %v407, %v77
    %v446 = vadd.f32 %v438, %v136
    %v447 = vadd.f32 %v440, %v139
    %v448 = vadd.f32 %v442, %v142
    %v449 = vadd.f32 %v444, %v145
    %451 = vset.pattern.permute.xlu0 2
    %452 = vperm.xlu0 %451, %v371
    %v453 = vpop.permute.xlu0 %452
    %456 = vset.pattern.permute.xlu0 2
    %457 = vperm.xlu0 %456, %v372
    %v458 = vpop.permute.xlu0 %457
    %461 = vset.pattern.permute.xlu0 2
    %462 = vperm.xlu0 %461, %v373
    %v463 = vpop.permute.xlu0 %462
    %466 = vset.pattern.permute.xlu0 2
    %467 = vperm.xlu0 %466, %v374
    %v468 = vpop.permute.xlu0 %467
    %v470 = vadd.f32 %v453, %v35
    %v471 = vadd.f32 %v458, %v36
    %v472 = vadd.f32 %v463, %v37
    %v473 = vadd.f32 %v468, %v38
    %v474 = vmax.f32 %v470, %v471
    %v475 = vmax.f32 %v472, %v473
    %v476 = vmax.f32 %v474, %v475
    %v477 = vrot.slane %v476, 4
    %v478 = vmax.f32 %v476, %v477
    %v479 = vrot.slane %v478, 2
    %v480 = vmax.f32 %v478, %v479
    %v481 = vrot.slane %v480, 1
    %v482 = vmax.f32 %v480, %v481
    %vm483 = vcmp.eq.f32.partialorder %v470, %v482
    %vm484 = vcmp.eq.f32.partialorder %v471, %v482
    %vm485 = vcmp.eq.f32.partialorder %v472, %v482
    %vm486 = vcmp.eq.f32.partialorder %v473, %v482
    %v487 = vsel %vm483, %v148, 32
    %v488 = vsel %vm484, %v149, 32
    %v489 = vsel %vm485, %v150, 32
    %v490 = vsel %vm486, %v151, 32
    %vm491 = vcmp.lt.s32.totalorder %v487, %v488
    %v492 = vsel %vm491, %v487, %v488
    %vm493 = vcmp.lt.s32.totalorder %v489, %v490
    %v494 = vsel %vm493, %v489, %v490
    %vm495 = vcmp.lt.s32.totalorder %v492, %v494
    %v496 = vsel %vm495, %v492, %v494
    %v497 = vrot.slane %v496, 4
    %vm498 = vcmp.lt.s32.totalorder %v496, %v497
    %v499 = vsel %vm498, %v496, %v497
    %v500 = vrot.slane %v499, 2
    %vm501 = vcmp.lt.s32.totalorder %v499, %v500
    %v502 = vsel %vm501, %v499, %v500
    %v503 = vrot.slane %v502, 1
    %vm504 = vcmp.lt.s32.totalorder %v502, %v503
    %v505 = vsel %vm504, %v502, %v503
    %506 = vst [vmem:[#allocation2 + $0x3] sm:$0x1] %v505
    %v507 = vperm.slane %v370, 2
    %v508 = vadd.f32 %v507, %v39
    %v509 = vadd.f32 %v507, %v40
    %v510 = vadd.f32 %v507, %v41
    %v511 = vadd.f32 %v507, %v42
    %512 = vmax.xlane.f32.xlu0 %v508
    %v513 = vpop.xlane.xlu0 %512
    %514 = vmax.xlane.f32.xlu0 %v509
    %v515 = vpop.xlane.xlu0 %514
    %516 = vmax.xlane.f32.xlu0 %v510
    %v517 = vpop.xlane.xlu0 %516
    %518 = vmax.xlane.f32.xlu0 %v511
    %v519 = vpop.xlane.xlu0 %518
    %v520 = vadd.f32 %v482, %v71
    %v521 = vadd.f32 %v513, %v136
    %v522 = vadd.f32 %v515, %v139
    %v523 = vadd.f32 %v517, %v142
    %v524 = vadd.f32 %v519, %v145
    %526 = vset.pattern.permute.xlu0 18
    %527 = vperm.xlu0 %526, %v446
    %v528 = vpop.permute.xlu0 %527
    %531 = vset.pattern.permute.xlu0 18
    %532 = vperm.xlu0 %531, %v447
    %v533 = vpop.permute.xlu0 %532
    %536 = vset.pattern.permute.xlu0 18
    %537 = vperm.xlu0 %536, %v448
    %v538 = vpop.permute.xlu0 %537
    %541 = vset.pattern.permute.xlu0 18
    %542 = vperm.xlu0 %541, %v449
    %v543 = vpop.permute.xlu0 %542
    %v545 = vadd.f32 %v528, %v35
    %v546 = vadd.f32 %v533, %v36
    %v547 = vadd.f32 %v538, %v37
    %v548 = vadd.f32 %v543, %v38
    %v549 = vmax.f32 %v545, %v546
    %v550 = vmax.f32 %v547, %v548
    %v551 = vmax.f32 %v549, %v550
    %v552 = vrot.slane %v551, 4
    %v553 = vmax.f32 %v551, %v552
    %v554 = vrot.slane %v553, 2
    %v555 = vmax.f32 %v553, %v554
    %v556 = vrot.slane %v555, 1
    %v557 = vmax.f32 %v555, %v556
    %vm558 = vcmp.eq.f32.partialorder %v545, %v557
    %vm559 = vcmp.eq.f32.partialorder %v546, %v557
    %vm560 = vcmp.eq.f32.partialorder %v547, %v557
    %vm561 = vcmp.eq.f32.partialorder %v548, %v557
    %v562 = vsel %vm558, %v148, 32
    %v563 = vsel %vm559, %v149, 32
    %v564 = vsel %vm560, %v150, 32
    %v565 = vsel %vm561, %v151, 32
    %vm566 = vcmp.lt.s32.totalorder %v562, %v563
    %v567 = vsel %vm566, %v562, %v563
    %vm568 = vcmp.lt.s32.totalorder %v564, %v565
    %v569 = vsel %vm568, %v564, %v565
    %vm570 = vcmp.lt.s32.totalorder %v567, %v569
    %v571 = vsel %vm570, %v567, %v569
    %v572 = vrot.slane %v571, 4
    %vm573 = vcmp.lt.s32.totalorder %v571, %v572
    %v574 = vsel %vm573, %v571, %v572
    %v575 = vrot.slane %v574, 2
    %vm576 = vcmp.lt.s32.totalorder %v574, %v575
    %v577 = vsel %vm576, %v574, %v575
    %v578 = vrot.slane %v577, 1
    %vm579 = vcmp.lt.s32.totalorder %v577, %v578
    %v580 = vsel %vm579, %v577, %v578
    %581 = vst [vmem:[#allocation2 + $0x13] sm:$0x1] %v580
    %v582 = vperm.slane %v445, 2
    %v583 = vadd.f32 %v582, %v39
    %v584 = vadd.f32 %v582, %v40
    %v585 = vadd.f32 %v582, %v41
    %v586 = vadd.f32 %v582, %v42
    %587 = vmax.xlane.f32.xlu0 %v583
    %v588 = vpop.xlane.xlu0 %587
    %589 = vmax.xlane.f32.xlu0 %v584
    %v590 = vpop.xlane.xlu0 %589
    %591 = vmax.xlane.f32.xlu0 %v585
    %v592 = vpop.xlane.xlu0 %591
    %593 = vmax.xlane.f32.xlu0 %v586
    %v594 = vpop.xlane.xlu0 %593
    %v595 = vadd.f32 %v557, %v77
    %v596 = vadd.f32 %v588, %v136
    %v597 = vadd.f32 %v590, %v139
    %v598 = vadd.f32 %v592, %v142
    %v599 = vadd.f32 %v594, %v145
    %601 = vset.pattern.permute.xlu0 3
    %602 = vperm.xlu0 %601, %v521
    %v603 = vpop.permute.xlu0 %602
    %606 = vset.pattern.permute.xlu0 3
    %607 = vperm.xlu0 %606, %v522
    %v608 = vpop.permute.xlu0 %607
    %611 = vset.pattern.permute.xlu0 3
    %612 = vperm.xlu0 %611, %v523
    %v613 = vpop.permute.xlu0 %612
    %616 = vset.pattern.permute.xlu0 3
    %617 = vperm.xlu0 %616, %v524
    %v618 = vpop.permute.xlu0 %617
    %v620 = vadd.f32 %v603, %v35
    %v621 = vadd.f32 %v608, %v36
    %v622 = vadd.f32 %v613, %v37
    %v623 = vadd.f32 %v618, %v38
    %v624 = vmax.f32 %v620, %v621
    %v625 = vmax.f32 %v622, %v623
    %v626 = vmax.f32 %v624, %v625
    %v627 = vrot.slane %v626, 4
    %v628 = vmax.f32 %v626, %v627
    %v629 = vrot.slane %v628, 2
    %v630 = vmax.f32 %v628, %v629
    %v631 = vrot.slane %v630, 1
    %v632 = vmax.f32 %v630, %v631
    %vm633 = vcmp.eq.f32.partialorder %v620, %v632
    %vm634 = vcmp.eq.f32.partialorder %v621, %v632
    %vm635 = vcmp.eq.f32.partialorder %v622, %v632
    %vm636 = vcmp.eq.f32.partialorder %v623, %v632
    %v637 = vsel %vm633, %v148, 32
    %v638 = vsel %vm634, %v149, 32
    %v639 = vsel %vm635, %v150, 32
    %v640 = vsel %vm636, %v151, 32
    %vm641 = vcmp.lt.s32.totalorder %v637, %v638
    %v642 = vsel %vm641, %v637, %v638
    %vm643 = vcmp.lt.s32.totalorder %v639, %v640
    %v644 = vsel %vm643, %v639, %v640
    %vm645 = vcmp.lt.s32.totalorder %v642, %v644
    %v646 = vsel %vm645, %v642, %v644
    %v647 = vrot.slane %v646, 4
    %vm648 = vcmp.lt.s32.totalorder %v646, %v647
    %v649 = vsel %vm648, %v646, %v647
    %v650 = vrot.slane %v649, 2
    %vm651 = vcmp.lt.s32.totalorder %v649, %v650
    %v652 = vsel %vm651, %v649, %v650
    %v653 = vrot.slane %v652, 1
    %vm654 = vcmp.lt.s32.totalorder %v652, %v653
    %v655 = vsel %vm654, %v652, %v653
    %656 = vst [vmem:[#allocation2 + $0x4] sm:$0x1] %v655
    %v657 = vperm.slane %v520, 3
    %v658 = vadd.f32 %v657, %v39
    %v659 = vadd.f32 %v657, %v40
    %v660 = vadd.f32 %v657, %v41
    %v661 = vadd.f32 %v657, %v42
    %662 = vmax.xlane.f32.xlu0 %v658
    %v663 = vpop.xlane.xlu0 %662
    %664 = vmax.xlane.f32.xlu0 %v659
    %v665 = vpop.xlane.xlu0 %664
    %666 = vmax.xlane.f32.xlu0 %v660
    %v667 = vpop.xlane.xlu0 %666
    %668 = vmax.xlane.f32.xlu0 %v661
    %v669 = vpop.xlane.xlu0 %668
    %v670 = vadd.f32 %v632, %v71
    %v671 = vadd.f32 %v663, %v136
    %v672 = vadd.f32 %v665, %v139
    %v673 = vadd.f32 %v667, %v142
    %v674 = vadd.f32 %v669, %v145
    %676 = vset.pattern.permute.xlu0 19
    %677 = vperm.xlu0 %676, %v596
    %v678 = vpop.permute.xlu0 %677
    %681 = vset.pattern.permute.xlu0 19
    %682 = vperm.xlu0 %681, %v597
    %v683 = vpop.permute.xlu0 %682
    %686 = vset.pattern.permute.xlu0 19
    %687 = vperm.xlu0 %686, %v598
    %v688 = vpop.permute.xlu0 %687
    %691 = vset.pattern.permute.xlu0 19
    %692 = vperm.xlu0 %691, %v599
    %v693 = vpop.permute.xlu0 %692
    %v695 = vadd.f32 %v678, %v35
    %v696 = vadd.f32 %v683, %v36
    %v697 = vadd.f32 %v688, %v37
    %v698 = vadd.f32 %v693, %v38
    %v699 = vmax.f32 %v695, %v696
    %v700 = vmax.f32 %v697, %v698
    %v701 = vmax.f32 %v699, %v700
    %v702 = vrot.slane %v701, 4
    %v703 = vmax.f32 %v701, %v702
    %v704 = vrot.slane %v703, 2
    %v705 = vmax.f32 %v703, %v704
    %v706 = vrot.slane %v705, 1
    %v707 = vmax.f32 %v705, %v706
    %vm708 = vcmp.eq.f32.partialorder %v695, %v707
    %vm709 = vcmp.eq.f32.partialorder %v696, %v707
    %vm710 = vcmp.eq.f32.partialorder %v697, %v707
    %vm711 = vcmp.eq.f32.partialorder %v698, %v707
    %v712 = vsel %vm708, %v148, 32
    %v713 = vsel %vm709, %v149, 32
    %v714 = vsel %vm710, %v150, 32
    %v715 = vsel %vm711, %v151, 32
    %vm716 = vcmp.lt.s32.totalorder %v712, %v713
    %v717 = vsel %vm716, %v712, %v713
    %vm718 = vcmp.lt.s32.totalorder %v714, %v715
    %v719 = vsel %vm718, %v714, %v715
    %vm720 = vcmp.lt.s32.totalorder %v717, %v719
    %v721 = vsel %vm720, %v717, %v719
    %v722 = vrot.slane %v721, 4
    %vm723 = vcmp.lt.s32.totalorder %v721, %v722
    %v724 = vsel %vm723, %v721, %v722
    %v725 = vrot.slane %v724, 2
    %vm726 = vcmp.lt.s32.totalorder %v724, %v725
    %v727 = vsel %vm726, %v724, %v725
    %v728 = vrot.slane %v727, 1
    %vm729 = vcmp.lt.s32.totalorder %v727, %v728
    %v730 = vsel %vm729, %v727, %v728
    %731 = vst [vmem:[#allocation2 + $0x14] sm:$0x1] %v730
    %v732 = vperm.slane %v595, 3
    %v733 = vadd.f32 %v732, %v39
    %v734 = vadd.f32 %v732, %v40
    %v735 = vadd.f32 %v732, %v41
    %v736 = vadd.f32 %v732, %v42
    %737 = vmax.xlane.f32.xlu0 %v733
    %v738 = vpop.xlane.xlu0 %737
    %739 = vmax.xlane.f32.xlu0 %v734
    %v740 = vpop.xlane.xlu0 %739
    %741 = vmax.xlane.f32.xlu0 %v735
    %v742 = vpop.xlane.xlu0 %741
    %743 = vmax.xlane.f32.xlu0 %v736
    %v744 = vpop.xlane.xlu0 %743
    %v745 = vadd.f32 %v707, %v77
    %v746 = vadd.f32 %v738, %v136
    %v747 = vadd.f32 %v740, %v139
    %v748 = vadd.f32 %v742, %v142
    %v749 = vadd.f32 %v744, %v145
    %751 = vset.pattern.permute.xlu0 4
    %752 = vperm.xlu0 %751, %v671
    %v753 = vpop.permute.xlu0 %752
    %756 = vset.pattern.permute.xlu0 4
    %757 = vperm.xlu0 %756, %v672
    %v758 = vpop.permute.xlu0 %757
    %761 = vset.pattern.permute.xlu0 4
    %762 = vperm.xlu0 %761, %v673
    %v763 = vpop.permute.xlu0 %762
    %766 = vset.pattern.permute.xlu0 4
    %767 = vperm.xlu0 %766, %v674
    %v768 = vpop.permute.xlu0 %767
    %v770 = vadd.f32 %v753, %v35
    %v771 = vadd.f32 %v758, %v36
    %v772 = vadd.f32 %v763, %v37
    %v773 = vadd.f32 %v768, %v38
    %v774 = vmax.f32 %v770, %v771
    %v775 = vmax.f32 %v772, %v773
    %v776 = vmax.f32 %v774, %v775
    %v777 = vrot.slane %v776, 4
    %v778 = vmax.f32 %v776, %v777
    %v779 = vrot.slane %v778, 2
    %v780 = vmax.f32 %v778, %v779
    %v781 = vrot.slane %v780, 1
    %v782 = vmax.f32 %v780, %v781
    %vm783 = vcmp.eq.f32.partialorder %v770, %v782
    %vm784 = vcmp.eq.f32.partialorder %v771, %v782
    %vm785 = vcmp.eq.f32.partialorder %v772, %v782
    %vm786 = vcmp.eq.f32.partialorder %v773, %v782
    %v787 = vsel %vm783, %v148, 32
    %v788 = vsel %vm784, %v149, 32
    %v789 = vsel %vm785, %v150, 32
    %v790 = vsel %vm786, %v151, 32
    %vm791 = vcmp.lt.s32.totalorder %v787, %v788
    %v792 = vsel %vm791, %v787, %v788
    %vm793 = vcmp.lt.s32.totalorder %v789, %v790
    %v794 = vsel %vm793, %v789, %v790
    %vm795 = vcmp.lt.s32.totalorder %v792, %v794
    %v796 = vsel %vm795, %v792, %v794
    %v797 = vrot.slane %v796, 4
    %vm798 = vcmp.lt.s32.totalorder %v796, %v797
    %v799 = vsel %vm798, %v796, %v797
    %v800 = vrot.slane %v799, 2
    %vm801 = vcmp.lt.s32.totalorder %v799, %v800
    %v802 = vsel %vm801, %v799, %v800
    %v803 = vrot.slane %v802, 1
    %vm804 = vcmp.lt.s32.totalorder %v802, %v803
    %v805 = vsel %vm804, %v802, %v803
    %806 = vst [vmem:[#allocation2 + $0x5] sm:$0x1] %v805
    %v807 = vperm.slane %v670, 4
    %v808 = vadd.f32 %v807, %v39
    %v809 = vadd.f32 %v807, %v40
    %v810 = vadd.f32 %v807, %v41
    %v811 = vadd.f32 %v807, %v42
    %812 = vmax.xlane.f32.xlu0 %v808
    %v813 = vpop.xlane.xlu0 %812
    %814 = vmax.xlane.f32.xlu0 %v809
    %v815 = vpop.xlane.xlu0 %814
    %816 = vmax.xlane.f32.xlu0 %v810
    %v817 = vpop.xlane.xlu0 %816
    %818 = vmax.xlane.f32.xlu0 %v811
    %v819 = vpop.xlane.xlu0 %818
    %v820 = vadd.f32 %v782, %v71
    %v821 = vadd.f32 %v813, %v136
    %v822 = vadd.f32 %v815, %v139
    %v823 = vadd.f32 %v817, %v142
    %v824 = vadd.f32 %v819, %v145
    %826 = vset.pattern.permute.xlu0 20
    %827 = vperm.xlu0 %826, %v746
    %v828 = vpop.permute.xlu0 %827
    %831 = vset.pattern.permute.xlu0 20
    %832 = vperm.xlu0 %831, %v747
    %v833 = vpop.permute.xlu0 %832
    %836 = vset.pattern.permute.xlu0 20
    %837 = vperm.xlu0 %836, %v748
    %v838 = vpop.permute.xlu0 %837
    %841 = vset.pattern.permute.xlu0 20
    %842 = vperm.xlu0 %841, %v749
    %v843 = vpop.permute.xlu0 %842
    %v845 = vadd.f32 %v828, %v35
    %v846 = vadd.f32 %v833, %v36
    %v847 = vadd.f32 %v838, %v37
    %v848 = vadd.f32 %v843, %v38
    %v849 = vmax.f32 %v845, %v846
    %v850 = vmax.f32 %v847, %v848
    %v851 = vmax.f32 %v849, %v850
    %v852 = vrot.slane %v851, 4
    %v853 = vmax.f32 %v851, %v852
    %v854 = vrot.slane %v853, 2
    %v855 = vmax.f32 %v853, %v854
    %v856 = vrot.slane %v855, 1
    %v857 = vmax.f32 %v855, %v856
    %vm858 = vcmp.eq.f32.partialorder %v845, %v857
    %vm859 = vcmp.eq.f32.partialorder %v846, %v857
    %vm860 = vcmp.eq.f32.partialorder %v847, %v857
    %vm861 = vcmp.eq.f32.partialorder %v848, %v857
    %v862 = vsel %vm858, %v148, 32
    %v863 = vsel %vm859, %v149, 32
    %v864 = vsel %vm860, %v150, 32
    %v865 = vsel %vm861, %v151, 32
    %vm866 = vcmp.lt.s32.totalorder %v862, %v863
    %v867 = vsel %vm866, %v862, %v863
    %vm868 = vcmp.lt.s32.totalorder %v864, %v865
    %v869 = vsel %vm868, %v864, %v865
    %vm870 = vcmp.lt.s32.totalorder %v867, %v869
    %v871 = vsel %vm870, %v867, %v869
    %v872 = vrot.slane %v871, 4
    %vm873 = vcmp.lt.s32.totalorder %v871, %v872
    %v874 = vsel %vm873, %v871, %v872
    %v875 = vrot.slane %v874, 2
    %vm876 = vcmp.lt.s32.totalorder %v874, %v875
    %v877 = vsel %vm876, %v874, %v875
    %v878 = vrot.slane %v877, 1
    %vm879 = vcmp.lt.s32.totalorder %v877, %v878
    %v880 = vsel %vm879, %v877, %v878
    %881 = vst [vmem:[#allocation2 + $0x15] sm:$0x1] %v880
    %v882 = vperm.slane %v745, 4
    %v883 = vadd.f32 %v882, %v39
    %v884 = vadd.f32 %v882, %v40
    %v885 = vadd.f32 %v882, %v41
    %v886 = vadd.f32 %v882, %v42
    %887 = vmax.xlane.f32.xlu0 %v883
    %v888 = vpop.xlane.xlu0 %887
    %889 = vmax.xlane.f32.xlu0 %v884
    %v890 = vpop.xlane.xlu0 %889
    %891 = vmax.xlane.f32.xlu0 %v885
    %v892 = vpop.xlane.xlu0 %891
    %893 = vmax.xlane.f32.xlu0 %v886
    %v894 = vpop.xlane.xlu0 %893
    %v895 = vadd.f32 %v857, %v77
    %v896 = vadd.f32 %v888, %v136
    %v897 = vadd.f32 %v890, %v139
    %v898 = vadd.f32 %v892, %v142
    %v899 = vadd.f32 %v894, %v145
    %901 = vset.pattern.permute.xlu0 5
    %902 = vperm.xlu0 %901, %v821
    %v903 = vpop.permute.xlu0 %902
    %906 = vset.pattern.permute.xlu0 5
    %907 = vperm.xlu0 %906, %v822
    %v908 = vpop.permute.xlu0 %907
    %911 = vset.pattern.permute.xlu0 5
    %912 = vperm.xlu0 %911, %v823
    %v913 = vpop.permute.xlu0 %912
    %916 = vset.pattern.permute.xlu0 5
    %917 = vperm.xlu0 %916, %v824
    %v918 = vpop.permute.xlu0 %917
    %v920 = vadd.f32 %v903, %v35
    %v921 = vadd.f32 %v908, %v36
    %v922 = vadd.f32 %v913, %v37
    %v923 = vadd.f32 %v918, %v38
    %v924 = vmax.f32 %v920, %v921
    %v925 = vmax.f32 %v922, %v923
    %v926 = vmax.f32 %v924, %v925
    %v927 = vrot.slane %v926, 4
    %v928 = vmax.f32 %v926, %v927
    %v929 = vrot.slane %v928, 2
    %v930 = vmax.f32 %v928, %v929
    %v931 = vrot.slane %v930, 1
    %v932 = vmax.f32 %v930, %v931
    %vm933 = vcmp.eq.f32.partialorder %v920, %v932
    %vm934 = vcmp.eq.f32.partialorder %v921, %v932
    %vm935 = vcmp.eq.f32.partialorder %v922, %v932
    %vm936 = vcmp.eq.f32.partialorder %v923, %v932
    %v937 = vsel %vm933, %v148, 32
    %v938 = vsel %vm934, %v149, 32
    %v939 = vsel %vm935, %v150, 32
    %v940 = vsel %vm936, %v151, 32
    %vm941 = vcmp.lt.s32.totalorder %v937, %v938
    %v942 = vsel %vm941, %v937, %v938
    %vm943 = vcmp.lt.s32.totalorder %v939, %v940
    %v944 = vsel %vm943, %v939, %v940
    %vm945 = vcmp.lt.s32.totalorder %v942, %v944
    %v946 = vsel %vm945, %v942, %v944
    %v947 = vrot.slane %v946, 4
    %vm948 = vcmp.lt.s32.totalorder %v946, %v947
    %v949 = vsel %vm948, %v946, %v947
    %v950 = vrot.slane %v949, 2
    %vm951 = vcmp.lt.s32.totalorder %v949, %v950
    %v952 = vsel %vm951, %v949, %v950
    %v953 = vrot.slane %v952, 1
    %vm954 = vcmp.lt.s32.totalorder %v952, %v953
    %v955 = vsel %vm954, %v952, %v953
    %956 = vst [vmem:[#allocation2 + $0x6] sm:$0x1] %v955
    %v957 = vperm.slane %v820, 5
    %v958 = vadd.f32 %v957, %v39
    %v959 = vadd.f32 %v957, %v40
    %v960 = vadd.f32 %v957, %v41
    %v961 = vadd.f32 %v957, %v42
    %962 = vmax.xlane.f32.xlu0 %v958
    %v963 = vpop.xlane.xlu0 %962
    %964 = vmax.xlane.f32.xlu0 %v959
    %v965 = vpop.xlane.xlu0 %964
    %966 = vmax.xlane.f32.xlu0 %v960
    %v967 = vpop.xlane.xlu0 %966
    %968 = vmax.xlane.f32.xlu0 %v961
    %v969 = vpop.xlane.xlu0 %968
    %v970 = vadd.f32 %v932, %v71
    %v971 = vadd.f32 %v963, %v136
    %v972 = vadd.f32 %v965, %v139
    %v973 = vadd.f32 %v967, %v142
    %v974 = vadd.f32 %v969, %v145
    %976 = vset.pattern.permute.xlu0 21
    %977 = vperm.xlu0 %976, %v896
    %v978 = vpop.permute.xlu0 %977
    %981 = vset.pattern.permute.xlu0 21
    %982 = vperm.xlu0 %981, %v897
    %v983 = vpop.permute.xlu0 %982
    %986 = vset.pattern.permute.xlu0 21
    %987 = vperm.xlu0 %986, %v898
    %v988 = vpop.permute.xlu0 %987
    %991 = vset.pattern.permute.xlu0 21
    %992 = vperm.xlu0 %991, %v899
    %v993 = vpop.permute.xlu0 %992
    %v995 = vadd.f32 %v978, %v35
    %v996 = vadd.f32 %v983, %v36
    %v997 = vadd.f32 %v988, %v37
    %v998 = vadd.f32 %v993, %v38
    %v999 = vmax.f32 %v995, %v996
    %v1000 = vmax.f32 %v997, %v998
    %v1001 = vmax.f32 %v999, %v1000
    %v1002 = vrot.slane %v1001, 4
    %v1003 = vmax.f32 %v1001, %v1002
    %v1004 = vrot.slane %v1003, 2
    %v1005 = vmax.f32 %v1003, %v1004
    %v1006 = vrot.slane %v1005, 1
    %v1007 = vmax.f32 %v1005, %v1006
    %vm1008 = vcmp.eq.f32.partialorder %v995, %v1007
    %vm1009 = vcmp.eq.f32.partialorder %v996, %v1007
    %vm1010 = vcmp.eq.f32.partialorder %v997, %v1007
    %vm1011 = vcmp.eq.f32.partialorder %v998, %v1007
    %v1012 = vsel %vm1008, %v148, 32
    %v1013 = vsel %vm1009, %v149, 32
    %v1014 = vsel %vm1010, %v150, 32
    %v1015 = vsel %vm1011, %v151, 32
    %vm1016 = vcmp.lt.s32.totalorder %v1012, %v1013
    %v1017 = vsel %vm1016, %v1012, %v1013
    %vm1018 = vcmp.lt.s32.totalorder %v1014, %v1015
    %v1019 = vsel %vm1018, %v1014, %v1015
    %vm1020 = vcmp.lt.s32.totalorder %v1017, %v1019
    %v1021 = vsel %vm1020, %v1017, %v1019
    %v1022 = vrot.slane %v1021, 4
    %vm1023 = vcmp.lt.s32.totalorder %v1021, %v1022
    %v1024 = vsel %vm1023, %v1021, %v1022
    %v1025 = vrot.slane %v1024, 2
    %vm1026 = vcmp.lt.s32.totalorder %v1024, %v1025
    %v1027 = vsel %vm1026, %v1024, %v1025
    %v1028 = vrot.slane %v1027, 1
    %vm1029 = vcmp.lt.s32.totalorder %v1027, %v1028
    %v1030 = vsel %vm1029, %v1027, %v1028
    %1031 = vst [vmem:[#allocation2 + $0x16] sm:$0x1] %v1030
    %v1032 = vperm.slane %v895, 5
    %v1033 = vadd.f32 %v1032, %v39
    %v1034 = vadd.f32 %v1032, %v40
    %v1035 = vadd.f32 %v1032, %v41
    %v1036 = vadd.f32 %v1032, %v42
    %1037 = vmax.xlane.f32.xlu0 %v1033
    %v1038 = vpop.xlane.xlu0 %1037
    %1039 = vmax.xlane.f32.xlu0 %v1034
    %v1040 = vpop.xlane.xlu0 %1039
    %1041 = vmax.xlane.f32.xlu0 %v1035
    %v1042 = vpop.xlane.xlu0 %1041
    %1043 = vmax.xlane.f32.xlu0 %v1036
    %v1044 = vpop.xlane.xlu0 %1043
    %v1045 = vadd.f32 %v1007, %v77
    %v1046 = vadd.f32 %v1038, %v136
    %v1047 = vadd.f32 %v1040, %v139
    %v1048 = vadd.f32 %v1042, %v142
    %v1049 = vadd.f32 %v1044, %v145
    %1051 = vset.pattern.permute.xlu0 6
    %1052 = vperm.xlu0 %1051, %v971
    %v1053 = vpop.permute.xlu0 %1052
    %1056 = vset.pattern.permute.xlu0 6
    %1057 = vperm.xlu0 %1056, %v972
    %v1058 = vpop.permute.xlu0 %1057
    %1061 = vset.pattern.permute.xlu0 6
    %1062 = vperm.xlu0 %1061, %v973
    %v1063 = vpop.permute.xlu0 %1062
    %1066 = vset.pattern.permute.xlu0 6
    %1067 = vperm.xlu0 %1066, %v974
    %v1068 = vpop.permute.xlu0 %1067
    %v1070 = vadd.f32 %v1053, %v35
    %v1071 = vadd.f32 %v1058, %v36
    %v1072 = vadd.f32 %v1063, %v37
    %v1073 = vadd.f32 %v1068, %v38
    %v1074 = vmax.f32 %v1070, %v1071
    %v1075 = vmax.f32 %v1072, %v1073
    %v1076 = vmax.f32 %v1074, %v1075
    %v1077 = vrot.slane %v1076, 4
    %v1078 = vmax.f32 %v1076, %v1077
    %v1079 = vrot.slane %v1078, 2
    %v1080 = vmax.f32 %v1078, %v1079
    %v1081 = vrot.slane %v1080, 1
    %v1082 = vmax.f32 %v1080, %v1081
    %vm1083 = vcmp.eq.f32.partialorder %v1070, %v1082
    %vm1084 = vcmp.eq.f32.partialorder %v1071, %v1082
    %vm1085 = vcmp.eq.f32.partialorder %v1072, %v1082
    %vm1086 = vcmp.eq.f32.partialorder %v1073, %v1082
    %v1087 = vsel %vm1083, %v148, 32
    %v1088 = vsel %vm1084, %v149, 32
    %v1089 = vsel %vm1085, %v150, 32
    %v1090 = vsel %vm1086, %v151, 32
    %vm1091 = vcmp.lt.s32.totalorder %v1087, %v1088
    %v1092 = vsel %vm1091, %v1087, %v1088
    %vm1093 = vcmp.lt.s32.totalorder %v1089, %v1090
    %v1094 = vsel %vm1093, %v1089, %v1090
    %vm1095 = vcmp.lt.s32.totalorder %v1092, %v1094
    %v1096 = vsel %vm1095, %v1092, %v1094
    %v1097 = vrot.slane %v1096, 4
    %vm1098 = vcmp.lt.s32.totalorder %v1096, %v1097
    %v1099 = vsel %vm1098, %v1096, %v1097
    %v1100 = vrot.slane %v1099, 2
    %vm1101 = vcmp.lt.s32.totalorder %v1099, %v1100
    %v1102 = vsel %vm1101, %v1099, %v1100
    %v1103 = vrot.slane %v1102, 1
    %vm1104 = vcmp.lt.s32.totalorder %v1102, %v1103
    %v1105 = vsel %vm1104, %v1102, %v1103
    %1106 = vst [vmem:[#allocation2 + $0x7] sm:$0x1] %v1105
    %v1107 = vperm.slane %v970, 6
    %v1108 = vadd.f32 %v1107, %v39
    %v1109 = vadd.f32 %v1107, %v40
    %v1110 = vadd.f32 %v1107, %v41
    %v1111 = vadd.f32 %v1107, %v42
    %1112 = vmax.xlane.f32.xlu0 %v1108
    %v1113 = vpop.xlane.xlu0 %1112
    %1114 = vmax.xlane.f32.xlu0 %v1109
    %v1115 = vpop.xlane.xlu0 %1114
    %1116 = vmax.xlane.f32.xlu0 %v1110
    %v1117 = vpop.xlane.xlu0 %1116
    %1118 = vmax.xlane.f32.xlu0 %v1111
    %v1119 = vpop.xlane.xlu0 %1118
    %v1120 = vadd.f32 %v1082, %v71
    %v1121 = vadd.f32 %v1113, %v136
    %v1122 = vadd.f32 %v1115, %v139
    %v1123 = vadd.f32 %v1117, %v142
    %v1124 = vadd.f32 %v1119, %v145
    %1126 = vset.pattern.permute.xlu0 22
    %1127 = vperm.xlu0 %1126, %v1046
    %v1128 = vpop.permute.xlu0 %1127
    %1131 = vset.pattern.permute.xlu0 22
    %1132 = vperm.xlu0 %1131, %v1047
    %v1133 = vpop.permute.xlu0 %1132
    %1136 = vset.pattern.permute.xlu0 22
    %1137 = vperm.xlu0 %1136, %v1048
    %v1138 = vpop.permute.xlu0 %1137
    %1141 = vset.pattern.permute.xlu0 22
    %1142 = vperm.xlu0 %1141, %v1049
    %v1143 = vpop.permute.xlu0 %1142
    %v1145 = vadd.f32 %v1128, %v35
    %v1146 = vadd.f32 %v1133, %v36
    %v1147 = vadd.f32 %v1138, %v37
    %v1148 = vadd.f32 %v1143, %v38
    %v1149 = vmax.f32 %v1145, %v1146
    %v1150 = vmax.f32 %v1147, %v1148
    %v1151 = vmax.f32 %v1149, %v1150
    %v1152 = vrot.slane %v1151, 4
    %v1153 = vmax.f32 %v1151, %v1152
    %v1154 = vrot.slane %v1153, 2
    %v1155 = vmax.f32 %v1153, %v1154
    %v1156 = vrot.slane %v1155, 1
    %v1157 = vmax.f32 %v1155, %v1156
    %vm1158 = vcmp.eq.f32.partialorder %v1145, %v1157
    %vm1159 = vcmp.eq.f32.partialorder %v1146, %v1157
    %vm1160 = vcmp.eq.f32.partialorder %v1147, %v1157
    %vm1161 = vcmp.eq.f32.partialorder %v1148, %v1157
    %v1162 = vsel %vm1158, %v148, 32
    %v1163 = vsel %vm1159, %v149, 32
    %v1164 = vsel %vm1160, %v150, 32
    %v1165 = vsel %vm1161, %v151, 32
    %vm1166 = vcmp.lt.s32.totalorder %v1162, %v1163
    %v1167 = vsel %vm1166, %v1162, %v1163
    %vm1168 = vcmp.lt.s32.totalorder %v1164, %v1165
    %v1169 = vsel %vm1168, %v1164, %v1165
    %vm1170 = vcmp.lt.s32.totalorder %v1167, %v1169
    %v1171 = vsel %vm1170, %v1167, %v1169
    %v1172 = vrot.slane %v1171, 4
    %vm1173 = vcmp.lt.s32.totalorder %v1171, %v1172
    %v1174 = vsel %vm1173, %v1171, %v1172
    %v1175 = vrot.slane %v1174, 2
    %vm1176 = vcmp.lt.s32.totalorder %v1174, %v1175
    %v1177 = vsel %vm1176, %v1174, %v1175
    %v1178 = vrot.slane %v1177, 1
    %vm1179 = vcmp.lt.s32.totalorder %v1177, %v1178
    %v1180 = vsel %vm1179, %v1177, %v1178
    %1181 = vst [vmem:[#allocation2 + $0x17] sm:$0x1] %v1180
    %v1182 = vperm.slane %v1045, 6
    %v1183 = vadd.f32 %v1182, %v39
    %v1184 = vadd.f32 %v1182, %v40
    %v1185 = vadd.f32 %v1182, %v41
    %v1186 = vadd.f32 %v1182, %v42
    %1187 = vmax.xlane.f32.xlu0 %v1183
    %v1188 = vpop.xlane.xlu0 %1187
    %1189 = vmax.xlane.f32.xlu0 %v1184
    %v1190 = vpop.xlane.xlu0 %1189
    %1191 = vmax.xlane.f32.xlu0 %v1185
    %v1192 = vpop.xlane.xlu0 %1191
    %1193 = vmax.xlane.f32.xlu0 %v1186
    %v1194 = vpop.xlane.xlu0 %1193
    %v1195 = vadd.f32 %v1157, %v77
    %v1196 = vadd.f32 %v1188, %v136
    %v1197 = vadd.f32 %v1190, %v139
    %v1198 = vadd.f32 %v1192, %v142
    %v1199 = vadd.f32 %v1194, %v145
    %1201 = vset.pattern.permute.xlu0 7
    %1202 = vperm.xlu0 %1201, %v1121
    %v1203 = vpop.permute.xlu0 %1202
    %1206 = vset.pattern.permute.xlu0 7
    %1207 = vperm.xlu0 %1206, %v1122
    %v1208 = vpop.permute.xlu0 %1207
    %1211 = vset.pattern.permute.xlu0 7
    %1212 = vperm.xlu0 %1211, %v1123
    %v1213 = vpop.permute.xlu0 %1212
    %1216 = vset.pattern.permute.xlu0 7
    %1217 = vperm.xlu0 %1216, %v1124
    %v1218 = vpop.permute.xlu0 %1217
    %v1220 = vadd.f32 %v1203, %v35
    %v1221 = vadd.f32 %v1208, %v36
    %v1222 = vadd.f32 %v1213, %v37
    %v1223 = vadd.f32 %v1218, %v38
    %v1224 = vmax.f32 %v1220, %v1221
    %v1225 = vmax.f32 %v1222, %v1223
    %v1226 = vmax.f32 %v1224, %v1225
    %v1227 = vrot.slane %v1226, 4
    %v1228 = vmax.f32 %v1226, %v1227
    %v1229 = vrot.slane %v1228, 2
    %v1230 = vmax.f32 %v1228, %v1229
    %v1231 = vrot.slane %v1230, 1
    %v1232 = vmax.f32 %v1230, %v1231
    %vm1233 = vcmp.eq.f32.partialorder %v1220, %v1232
    %vm1234 = vcmp.eq.f32.partialorder %v1221, %v1232
    %vm1235 = vcmp.eq.f32.partialorder %v1222, %v1232
    %vm1236 = vcmp.eq.f32.partialorder %v1223, %v1232
    %v1237 = vsel %vm1233, %v148, 32
    %v1238 = vsel %vm1234, %v149, 32
    %v1239 = vsel %vm1235, %v150, 32
    %v1240 = vsel %vm1236, %v151, 32
    %vm1241 = vcmp.lt.s32.totalorder %v1237, %v1238
    %v1242 = vsel %vm1241, %v1237, %v1238
    %vm1243 = vcmp.lt.s32.totalorder %v1239, %v1240
    %v1244 = vsel %vm1243, %v1239, %v1240
    %vm1245 = vcmp.lt.s32.totalorder %v1242, %v1244
    %v1246 = vsel %vm1245, %v1242, %v1244
    %v1247 = vrot.slane %v1246, 4
    %vm1248 = vcmp.lt.s32.totalorder %v1246, %v1247
    %v1249 = vsel %vm1248, %v1246, %v1247
    %v1250 = vrot.slane %v1249, 2
    %vm1251 = vcmp.lt.s32.totalorder %v1249, %v1250
    %v1252 = vsel %vm1251, %v1249, %v1250
    %v1253 = vrot.slane %v1252, 1
    %vm1254 = vcmp.lt.s32.totalorder %v1252, %v1253
    %v1255 = vsel %vm1254, %v1252, %v1253
    %1256 = vst [vmem:[#allocation2 + $0x8] sm:$0x1] %v1255
    %v1257 = vperm.slane %v1120, 7
    %v1258 = vadd.f32 %v1257, %v39
    %v1259 = vadd.f32 %v1257, %v40
    %v1260 = vadd.f32 %v1257, %v41
    %v1261 = vadd.f32 %v1257, %v42
    %1262 = vmax.xlane.f32.xlu0 %v1258
    %v1263 = vpop.xlane.xlu0 %1262
    %1264 = vmax.xlane.f32.xlu0 %v1259
    %v1265 = vpop.xlane.xlu0 %1264
    %1266 = vmax.xlane.f32.xlu0 %v1260
    %v1267 = vpop.xlane.xlu0 %1266
    %1268 = vmax.xlane.f32.xlu0 %v1261
    %v1269 = vpop.xlane.xlu0 %1268
    %v1270 = vadd.f32 %v1232, %v74
    %v1271 = vadd.f32 %v1263, %v136
    %v1272 = vadd.f32 %v1265, %v139
    %v1273 = vadd.f32 %v1267, %v142
    %v1274 = vadd.f32 %v1269, %v145
    %1276 = vset.pattern.permute.xlu0 23
    %1277 = vperm.xlu0 %1276, %v1196
    %v1278 = vpop.permute.xlu0 %1277
    %1281 = vset.pattern.permute.xlu0 23
    %1282 = vperm.xlu0 %1281, %v1197
    %v1283 = vpop.permute.xlu0 %1282
    %1286 = vset.pattern.permute.xlu0 23
    %1287 = vperm.xlu0 %1286, %v1198
    %v1288 = vpop.permute.xlu0 %1287
    %1291 = vset.pattern.permute.xlu0 23
    %1292 = vperm.xlu0 %1291, %v1199
    %v1293 = vpop.permute.xlu0 %1292
    %v1295 = vadd.f32 %v1278, %v35
    %v1296 = vadd.f32 %v1283, %v36
    %v1297 = vadd.f32 %v1288, %v37
    %v1298 = vadd.f32 %v1293, %v38
    %v1299 = vmax.f32 %v1295, %v1296
    %v1300 = vmax.f32 %v1297, %v1298
    %v1301 = vmax.f32 %v1299, %v1300
    %v1302 = vrot.slane %v1301, 4
    %v1303 = vmax.f32 %v1301, %v1302
    %v1304 = vrot.slane %v1303, 2
    %v1305 = vmax.f32 %v1303, %v1304
    %v1306 = vrot.slane %v1305, 1
    %v1307 = vmax.f32 %v1305, %v1306
    %vm1308 = vcmp.eq.f32.partialorder %v1295, %v1307
    %vm1309 = vcmp.eq.f32.partialorder %v1296, %v1307
    %vm1310 = vcmp.eq.f32.partialorder %v1297, %v1307
    %vm1311 = vcmp.eq.f32.partialorder %v1298, %v1307
    %v1312 = vsel %vm1308, %v148, 32
    %v1313 = vsel %vm1309, %v149, 32
    %v1314 = vsel %vm1310, %v150, 32
    %v1315 = vsel %vm1311, %v151, 32
    %vm1316 = vcmp.lt.s32.totalorder %v1312, %v1313
    %v1317 = vsel %vm1316, %v1312, %v1313
    %vm1318 = vcmp.lt.s32.totalorder %v1314, %v1315
    %v1319 = vsel %vm1318, %v1314, %v1315
    %vm1320 = vcmp.lt.s32.totalorder %v1317, %v1319
    %v1321 = vsel %vm1320, %v1317, %v1319
    %v1322 = vrot.slane %v1321, 4
    %vm1323 = vcmp.lt.s32.totalorder %v1321, %v1322
    %v1324 = vsel %vm1323, %v1321, %v1322
    %v1325 = vrot.slane %v1324, 2
    %vm1326 = vcmp.lt.s32.totalorder %v1324, %v1325
    %v1327 = vsel %vm1326, %v1324, %v1325
    %v1328 = vrot.slane %v1327, 1
    %vm1329 = vcmp.lt.s32.totalorder %v1327, %v1328
    %v1330 = vsel %vm1329, %v1327, %v1328
    %1331 = vst [vmem:[#allocation2 + $0x18] sm:$0x1] %v1330
    %v1332 = vperm.slane %v1195, 7
    %v1333 = vadd.f32 %v1332, %v39
    %v1334 = vadd.f32 %v1332, %v40
    %v1335 = vadd.f32 %v1332, %v41
    %v1336 = vadd.f32 %v1332, %v42
    %1337 = vmax.xlane.f32.xlu0 %v1333
    %v1338 = vpop.xlane.xlu0 %1337
    %1339 = vmax.xlane.f32.xlu0 %v1334
    %v1340 = vpop.xlane.xlu0 %1339
    %1341 = vmax.xlane.f32.xlu0 %v1335
    %v1342 = vpop.xlane.xlu0 %1341
    %1343 = vmax.xlane.f32.xlu0 %v1336
    %v1344 = vpop.xlane.xlu0 %1343
    %v1345 = vadd.f32 %v1307, %v80
    %v1346 = vadd.f32 %v1338, %v136
    %v1347 = vadd.f32 %v1340, %v139
    %v1348 = vadd.f32 %v1342, %v142
    %v1349 = vadd.f32 %v1344, %v145
    %1351 = vset.pattern.permute.xlu0 8
    %1352 = vperm.xlu0 %1351, %v1271
    %v1353 = vpop.permute.xlu0 %1352
    %1356 = vset.pattern.permute.xlu0 8
    %1357 = vperm.xlu0 %1356, %v1272
    %v1358 = vpop.permute.xlu0 %1357
    %1361 = vset.pattern.permute.xlu0 8
    %1362 = vperm.xlu0 %1361, %v1273
    %v1363 = vpop.permute.xlu0 %1362
    %1366 = vset.pattern.permute.xlu0 8
    %1367 = vperm.xlu0 %1366, %v1274
    %v1368 = vpop.permute.xlu0 %1367
    %v1370 = vadd.f32 %v1353, %v35
    %v1371 = vadd.f32 %v1358, %v36
    %v1372 = vadd.f32 %v1363, %v37
    %v1373 = vadd.f32 %v1368, %v38
    %v1374 = vmax.f32 %v1370, %v1371
    %v1375 = vmax.f32 %v1372, %v1373
    %v1376 = vmax.f32 %v1374, %v1375
    %v1377 = vrot.slane %v1376, 4
    %v1378 = vmax.f32 %v1376, %v1377
    %v1379 = vrot.slane %v1378, 2
    %v1380 = vmax.f32 %v1378, %v1379
    %v1381 = vrot.slane %v1380, 1
    %v1382 = vmax.f32 %v1380, %v1381
    %vm1383 = vcmp.eq.f32.partialorder %v1370, %v1382
    %vm1384 = vcmp.eq.f32.partialorder %v1371, %v1382
    %vm1385 = vcmp.eq.f32.partialorder %v1372, %v1382
    %vm1386 = vcmp.eq.f32.partialorder %v1373, %v1382
    %v1387 = vsel %vm1383, %v148, 32
    %v1388 = vsel %vm1384, %v149, 32
    %v1389 = vsel %vm1385, %v150, 32
    %v1390 = vsel %vm1386, %v151, 32
    %vm1391 = vcmp.lt.s32.totalorder %v1387, %v1388
    %v1392 = vsel %vm1391, %v1387, %v1388
    %vm1393 = vcmp.lt.s32.totalorder %v1389, %v1390
    %v1394 = vsel %vm1393, %v1389, %v1390
    %vm1395 = vcmp.lt.s32.totalorder %v1392, %v1394
    %v1396 = vsel %vm1395, %v1392, %v1394
    %v1397 = vrot.slane %v1396, 4
    %vm1398 = vcmp.lt.s32.totalorder %v1396, %v1397
    %v1399 = vsel %vm1398, %v1396, %v1397
    %v1400 = vrot.slane %v1399, 2
    %vm1401 = vcmp.lt.s32.totalorder %v1399, %v1400
    %v1402 = vsel %vm1401, %v1399, %v1400
    %v1403 = vrot.slane %v1402, 1
    %vm1404 = vcmp.lt.s32.totalorder %v1402, %v1403
    %v1405 = vsel %vm1404, %v1402, %v1403
    %1406 = vst [vmem:[#allocation2 + $0x9] sm:$0x1] %v1405
    %v1407 = vperm.slane %v1270, 0
    %v1408 = vadd.f32 %v1407, %v39
    %v1409 = vadd.f32 %v1407, %v40
    %v1410 = vadd.f32 %v1407, %v41
    %v1411 = vadd.f32 %v1407, %v42
    %1412 = vmax.xlane.f32.xlu0 %v1408
    %v1413 = vpop.xlane.xlu0 %1412
    %1414 = vmax.xlane.f32.xlu0 %v1409
    %v1415 = vpop.xlane.xlu0 %1414
    %1416 = vmax.xlane.f32.xlu0 %v1410
    %v1417 = vpop.xlane.xlu0 %1416
    %1418 = vmax.xlane.f32.xlu0 %v1411
    %v1419 = vpop.xlane.xlu0 %1418
    %v1420 = vadd.f32 %v1382, %v74
    %v1421 = vadd.f32 %v1413, %v136
    %v1422 = vadd.f32 %v1415, %v139
    %v1423 = vadd.f32 %v1417, %v142
    %v1424 = vadd.f32 %v1419, %v145
    %1426 = vset.pattern.permute.xlu0 24
    %1427 = vperm.xlu0 %1426, %v1346
    %v1428 = vpop.permute.xlu0 %1427
    %1431 = vset.pattern.permute.xlu0 24
    %1432 = vperm.xlu0 %1431, %v1347
    %v1433 = vpop.permute.xlu0 %1432
    %1436 = vset.pattern.permute.xlu0 24
    %1437 = vperm.xlu0 %1436, %v1348
    %v1438 = vpop.permute.xlu0 %1437
    %1441 = vset.pattern.permute.xlu0 24
    %1442 = vperm.xlu0 %1441, %v1349
    %v1443 = vpop.permute.xlu0 %1442
    %v1445 = vadd.f32 %v1428, %v35
    %v1446 = vadd.f32 %v1433, %v36
    %v1447 = vadd.f32 %v1438, %v37
    %v1448 = vadd.f32 %v1443, %v38
    %v1449 = vmax.f32 %v1445, %v1446
    %v1450 = vmax.f32 %v1447, %v1448
    %v1451 = vmax.f32 %v1449, %v1450
    %v1452 = vrot.slane %v1451, 4
    %v1453 = vmax.f32 %v1451, %v1452
    %v1454 = vrot.slane %v1453, 2
    %v1455 = vmax.f32 %v1453, %v1454
    %v1456 = vrot.slane %v1455, 1
    %v1457 = vmax.f32 %v1455, %v1456
    %vm1458 = vcmp.eq.f32.partialorder %v1445, %v1457
    %vm1459 = vcmp.eq.f32.partialorder %v1446, %v1457
    %vm1460 = vcmp.eq.f32.partialorder %v1447, %v1457
    %vm1461 = vcmp.eq.f32.partialorder %v1448, %v1457
    %v1462 = vsel %vm1458, %v148, 32
    %v1463 = vsel %vm1459, %v149, 32
    %v1464 = vsel %vm1460, %v150, 32
    %v1465 = vsel %vm1461, %v151, 32
    %vm1466 = vcmp.lt.s32.totalorder %v1462, %v1463
    %v1467 = vsel %vm1466, %v1462, %v1463
    %vm1468 = vcmp.lt.s32.totalorder %v1464, %v1465
    %v1469 = vsel %vm1468, %v1464, %v1465
    %vm1470 = vcmp.lt.s32.totalorder %v1467, %v1469
    %v1471 = vsel %vm1470, %v1467, %v1469
    %v1472 = vrot.slane %v1471, 4
    %vm1473 = vcmp.lt.s32.totalorder %v1471, %v1472
    %v1474 = vsel %vm1473, %v1471, %v1472
    %v1475 = vrot.slane %v1474, 2
    %vm1476 = vcmp.lt.s32.totalorder %v1474, %v1475
    %v1477 = vsel %vm1476, %v1474, %v1475
    %v1478 = vrot.slane %v1477, 1
    %vm1479 = vcmp.lt.s32.totalorder %v1477, %v1478
    %v1480 = vsel %vm1479, %v1477, %v1478
    %1481 = vst [vmem:[#allocation2 + $0x19] sm:$0x1] %v1480
    %v1482 = vperm.slane %v1345, 0
    %v1483 = vadd.f32 %v1482, %v39
    %v1484 = vadd.f32 %v1482, %v40
    %v1485 = vadd.f32 %v1482, %v41
    %v1486 = vadd.f32 %v1482, %v42
    %1487 = vmax.xlane.f32.xlu0 %v1483
    %v1488 = vpop.xlane.xlu0 %1487
    %1489 = vmax.xlane.f32.xlu0 %v1484
    %v1490 = vpop.xlane.xlu0 %1489
    %1491 = vmax.xlane.f32.xlu0 %v1485
    %v1492 = vpop.xlane.xlu0 %1491
    %1493 = vmax.xlane.f32.xlu0 %v1486
    %v1494 = vpop.xlane.xlu0 %1493
    %v1495 = vadd.f32 %v1457, %v80
    %v1496 = vadd.f32 %v1488, %v136
    %v1497 = vadd.f32 %v1490, %v139
    %v1498 = vadd.f32 %v1492, %v142
    %v1499 = vadd.f32 %v1494, %v145
    %1501 = vset.pattern.permute.xlu0 9
    %1502 = vperm.xlu0 %1501, %v1421
    %v1503 = vpop.permute.xlu0 %1502
    %1506 = vset.pattern.permute.xlu0 9
    %1507 = vperm.xlu0 %1506, %v1422
    %v1508 = vpop.permute.xlu0 %1507
    %1511 = vset.pattern.permute.xlu0 9
    %1512 = vperm.xlu0 %1511, %v1423
    %v1513 = vpop.permute.xlu0 %1512
    %1516 = vset.pattern.permute.xlu0 9
    %1517 = vperm.xlu0 %1516, %v1424
    %v1518 = vpop.permute.xlu0 %1517
    %v1520 = vadd.f32 %v1503, %v35
    %v1521 = vadd.f32 %v1508, %v36
    %v1522 = vadd.f32 %v1513, %v37
    %v1523 = vadd.f32 %v1518, %v38
    %v1524 = vmax.f32 %v1520, %v1521
    %v1525 = vmax.f32 %v1522, %v1523
    %v1526 = vmax.f32 %v1524, %v1525
    %v1527 = vrot.slane %v1526, 4
    %v1528 = vmax.f32 %v1526, %v1527
    %v1529 = vrot.slane %v1528, 2
    %v1530 = vmax.f32 %v1528, %v1529
    %v1531 = vrot.slane %v1530, 1
    %v1532 = vmax.f32 %v1530, %v1531
    %vm1533 = vcmp.eq.f32.partialorder %v1520, %v1532
    %vm1534 = vcmp.eq.f32.partialorder %v1521, %v1532
    %vm1535 = vcmp.eq.f32.partialorder %v1522, %v1532
    %vm1536 = vcmp.eq.f32.partialorder %v1523, %v1532
    %v1537 = vsel %vm1533, %v148, 32
    %v1538 = vsel %vm1534, %v149, 32
    %v1539 = vsel %vm1535, %v150, 32
    %v1540 = vsel %vm1536, %v151, 32
    %vm1541 = vcmp.lt.s32.totalorder %v1537, %v1538
    %v1542 = vsel %vm1541, %v1537, %v1538
    %vm1543 = vcmp.lt.s32.totalorder %v1539, %v1540
    %v1544 = vsel %vm1543, %v1539, %v1540
    %vm1545 = vcmp.lt.s32.totalorder %v1542, %v1544
    %v1546 = vsel %vm1545, %v1542, %v1544
    %v1547 = vrot.slane %v1546, 4
    %vm1548 = vcmp.lt.s32.totalorder %v1546, %v1547
    %v1549 = vsel %vm1548, %v1546, %v1547
    %v1550 = vrot.slane %v1549, 2
    %vm1551 = vcmp.lt.s32.totalorder %v1549, %v1550
    %v1552 = vsel %vm1551, %v1549, %v1550
    %v1553 = vrot.slane %v1552, 1
    %vm1554 = vcmp.lt.s32.totalorder %v1552, %v1553
    %v1555 = vsel %vm1554, %v1552, %v1553
    %1556 = vst [vmem:[#allocation2 + $0xa] sm:$0x1] %v1555
    %v1557 = vperm.slane %v1420, 1
    %v1558 = vadd.f32 %v1557, %v39
    %v1559 = vadd.f32 %v1557, %v40
    %v1560 = vadd.f32 %v1557, %v41
    %v1561 = vadd.f32 %v1557, %v42
    %1562 = vmax.xlane.f32.xlu0 %v1558
    %v1563 = vpop.xlane.xlu0 %1562
    %1564 = vmax.xlane.f32.xlu0 %v1559
    %v1565 = vpop.xlane.xlu0 %1564
    %1566 = vmax.xlane.f32.xlu0 %v1560
    %v1567 = vpop.xlane.xlu0 %1566
    %1568 = vmax.xlane.f32.xlu0 %v1561
    %v1569 = vpop.xlane.xlu0 %1568
    %v1570 = vadd.f32 %v1532, %v74
    %v1571 = vadd.f32 %v1563, %v136
    %v1572 = vadd.f32 %v1565, %v139
    %v1573 = vadd.f32 %v1567, %v142
    %v1574 = vadd.f32 %v1569, %v145
    %1576 = vset.pattern.permute.xlu0 25
    %1577 = vperm.xlu0 %1576, %v1496
    %v1578 = vpop.permute.xlu0 %1577
    %1581 = vset.pattern.permute.xlu0 25
    %1582 = vperm.xlu0 %1581, %v1497
    %v1583 = vpop.permute.xlu0 %1582
    %1586 = vset.pattern.permute.xlu0 25
    %1587 = vperm.xlu0 %1586, %v1498
    %v1588 = vpop.permute.xlu0 %1587
    %1591 = vset.pattern.permute.xlu0 25
    %1592 = vperm.xlu0 %1591, %v1499
    %v1593 = vpop.permute.xlu0 %1592
    %v1595 = vadd.f32 %v1578, %v35
    %v1596 = vadd.f32 %v1583, %v36
    %v1597 = vadd.f32 %v1588, %v37
    %v1598 = vadd.f32 %v1593, %v38
    %v1599 = vmax.f32 %v1595, %v1596
    %v1600 = vmax.f32 %v1597, %v1598
    %v1601 = vmax.f32 %v1599, %v1600
    %v1602 = vrot.slane %v1601, 4
    %v1603 = vmax.f32 %v1601, %v1602
    %v1604 = vrot.slane %v1603, 2
    %v1605 = vmax.f32 %v1603, %v1604
    %v1606 = vrot.slane %v1605, 1
    %v1607 = vmax.f32 %v1605, %v1606
    %vm1608 = vcmp.eq.f32.partialorder %v1595, %v1607
    %vm1609 = vcmp.eq.f32.partialorder %v1596, %v1607
    %vm1610 = vcmp.eq.f32.partialorder %v1597, %v1607
    %vm1611 = vcmp.eq.f32.partialorder %v1598, %v1607
    %v1612 = vsel %vm1608, %v148, 32
    %v1613 = vsel %vm1609, %v149, 32
    %v1614 = vsel %vm1610, %v150, 32
    %v1615 = vsel %vm1611, %v151, 32
    %vm1616 = vcmp.lt.s32.totalorder %v1612, %v1613
    %v1617 = vsel %vm1616, %v1612, %v1613
    %vm1618 = vcmp.lt.s32.totalorder %v1614, %v1615
    %v1619 = vsel %vm1618, %v1614, %v1615
    %vm1620 = vcmp.lt.s32.totalorder %v1617, %v1619
    %v1621 = vsel %vm1620, %v1617, %v1619
    %v1622 = vrot.slane %v1621, 4
    %vm1623 = vcmp.lt.s32.totalorder %v1621, %v1622
    %v1624 = vsel %vm1623, %v1621, %v1622
    %v1625 = vrot.slane %v1624, 2
    %vm1626 = vcmp.lt.s32.totalorder %v1624, %v1625
    %v1627 = vsel %vm1626, %v1624, %v1625
    %v1628 = vrot.slane %v1627, 1
    %vm1629 = vcmp.lt.s32.totalorder %v1627, %v1628
    %v1630 = vsel %vm1629, %v1627, %v1628
    %1631 = vst [vmem:[#allocation2 + $0x1a] sm:$0x1] %v1630
    %v1632 = vperm.slane %v1495, 1
    %v1633 = vadd.f32 %v1632, %v39
    %v1634 = vadd.f32 %v1632, %v40
    %v1635 = vadd.f32 %v1632, %v41
    %v1636 = vadd.f32 %v1632, %v42
    %1637 = vmax.xlane.f32.xlu0 %v1633
    %v1638 = vpop.xlane.xlu0 %1637
    %1639 = vmax.xlane.f32.xlu0 %v1634
    %v1640 = vpop.xlane.xlu0 %1639
    %1641 = vmax.xlane.f32.xlu0 %v1635
    %v1642 = vpop.xlane.xlu0 %1641
    %1643 = vmax.xlane.f32.xlu0 %v1636
    %v1644 = vpop.xlane.xlu0 %1643
    %v1645 = vadd.f32 %v1607, %v80
    %v1646 = vadd.f32 %v1638, %v136
    %v1647 = vadd.f32 %v1640, %v139
    %v1648 = vadd.f32 %v1642, %v142
    %v1649 = vadd.f32 %v1644, %v145
    %1651 = vset.pattern.permute.xlu0 10
    %1652 = vperm.xlu0 %1651, %v1571
    %v1653 = vpop.permute.xlu0 %1652
    %1656 = vset.pattern.permute.xlu0 10
    %1657 = vperm.xlu0 %1656, %v1572
    %v1658 = vpop.permute.xlu0 %1657
    %1661 = vset.pattern.permute.xlu0 10
    %1662 = vperm.xlu0 %1661, %v1573
    %v1663 = vpop.permute.xlu0 %1662
    %1666 = vset.pattern.permute.xlu0 10
    %1667 = vperm.xlu0 %1666, %v1574
    %v1668 = vpop.permute.xlu0 %1667
    %v1670 = vadd.f32 %v1653, %v35
    %v1671 = vadd.f32 %v1658, %v36
    %v1672 = vadd.f32 %v1663, %v37
    %v1673 = vadd.f32 %v1668, %v38
    %v1674 = vmax.f32 %v1670, %v1671
    %v1675 = vmax.f32 %v1672, %v1673
    %v1676 = vmax.f32 %v1674, %v1675
    %v1677 = vrot.slane %v1676, 4
    %v1678 = vmax.f32 %v1676, %v1677
    %v1679 = vrot.slane %v1678, 2
    %v1680 = vmax.f32 %v1678, %v1679
    %v1681 = vrot.slane %v1680, 1
    %v1682 = vmax.f32 %v1680, %v1681
    %vm1683 = vcmp.eq.f32.partialorder %v1670, %v1682
    %vm1684 = vcmp.eq.f32.partialorder %v1671, %v1682
    %vm1685 = vcmp.eq.f32.partialorder %v1672, %v1682
    %vm1686 = vcmp.eq.f32.partialorder %v1673, %v1682
    %v1687 = vsel %vm1683, %v148, 32
    %v1688 = vsel %vm1684, %v149, 32
    %v1689 = vsel %vm1685, %v150, 32
    %v1690 = vsel %vm1686, %v151, 32
    %vm1691 = vcmp.lt.s32.totalorder %v1687, %v1688
    %v1692 = vsel %vm1691, %v1687, %v1688
    %vm1693 = vcmp.lt.s32.totalorder %v1689, %v1690
    %v1694 = vsel %vm1693, %v1689, %v1690
    %vm1695 = vcmp.lt.s32.totalorder %v1692, %v1694
    %v1696 = vsel %vm1695, %v1692, %v1694
    %v1697 = vrot.slane %v1696, 4
    %vm1698 = vcmp.lt.s32.totalorder %v1696, %v1697
    %v1699 = vsel %vm1698, %v1696, %v1697
    %v1700 = vrot.slane %v1699, 2
    %vm1701 = vcmp.lt.s32.totalorder %v1699, %v1700
    %v1702 = vsel %vm1701, %v1699, %v1700
    %v1703 = vrot.slane %v1702, 1
    %vm1704 = vcmp.lt.s32.totalorder %v1702, %v1703
    %v1705 = vsel %vm1704, %v1702, %v1703
    %1706 = vst [vmem:[#allocation2 + $0xb] sm:$0x1] %v1705
    %v1707 = vperm.slane %v1570, 2
    %v1708 = vadd.f32 %v1707, %v39
    %v1709 = vadd.f32 %v1707, %v40
    %v1710 = vadd.f32 %v1707, %v41
    %v1711 = vadd.f32 %v1707, %v42
    %1712 = vmax.xlane.f32.xlu0 %v1708
    %v1713 = vpop.xlane.xlu0 %1712
    %1714 = vmax.xlane.f32.xlu0 %v1709
    %v1715 = vpop.xlane.xlu0 %1714
    %1716 = vmax.xlane.f32.xlu0 %v1710
    %v1717 = vpop.xlane.xlu0 %1716
    %1718 = vmax.xlane.f32.xlu0 %v1711
    %v1719 = vpop.xlane.xlu0 %1718
    %v1720 = vadd.f32 %v1682, %v74
    %v1721 = vadd.f32 %v1713, %v136
    %v1722 = vadd.f32 %v1715, %v139
    %v1723 = vadd.f32 %v1717, %v142
    %v1724 = vadd.f32 %v1719, %v145
    %1726 = vset.pattern.permute.xlu0 26
    %1727 = vperm.xlu0 %1726, %v1646
    %v1728 = vpop.permute.xlu0 %1727
    %1731 = vset.pattern.permute.xlu0 26
    %1732 = vperm.xlu0 %1731, %v1647
    %v1733 = vpop.permute.xlu0 %1732
    %1736 = vset.pattern.permute.xlu0 26
    %1737 = vperm.xlu0 %1736, %v1648
    %v1738 = vpop.permute.xlu0 %1737
    %1741 = vset.pattern.permute.xlu0 26
    %1742 = vperm.xlu0 %1741, %v1649
    %v1743 = vpop.permute.xlu0 %1742
    %v1745 = vadd.f32 %v1728, %v35
    %v1746 = vadd.f32 %v1733, %v36
    %v1747 = vadd.f32 %v1738, %v37
    %v1748 = vadd.f32 %v1743, %v38
    %v1749 = vmax.f32 %v1745, %v1746
    %v1750 = vmax.f32 %v1747, %v1748
    %v1751 = vmax.f32 %v1749, %v1750
    %v1752 = vrot.slane %v1751, 4
    %v1753 = vmax.f32 %v1751, %v1752
    %v1754 = vrot.slane %v1753, 2
    %v1755 = vmax.f32 %v1753, %v1754
    %v1756 = vrot.slane %v1755, 1
    %v1757 = vmax.f32 %v1755, %v1756
    %vm1758 = vcmp.eq.f32.partialorder %v1745, %v1757
    %vm1759 = vcmp.eq.f32.partialorder %v1746, %v1757
    %vm1760 = vcmp.eq.f32.partialorder %v1747, %v1757
    %vm1761 = vcmp.eq.f32.partialorder %v1748, %v1757
    %v1762 = vsel %vm1758, %v148, 32
    %v1763 = vsel %vm1759, %v149, 32
    %v1764 = vsel %vm1760, %v150, 32
    %v1765 = vsel %vm1761, %v151, 32
    %vm1766 = vcmp.lt.s32.totalorder %v1762, %v1763
    %v1767 = vsel %vm1766, %v1762, %v1763
    %vm1768 = vcmp.lt.s32.totalorder %v1764, %v1765
    %v1769 = vsel %vm1768, %v1764, %v1765
    %vm1770 = vcmp.lt.s32.totalorder %v1767, %v1769
    %v1771 = vsel %vm1770, %v1767, %v1769
    %v1772 = vrot.slane %v1771, 4
    %vm1773 = vcmp.lt.s32.totalorder %v1771, %v1772
    %v1774 = vsel %vm1773, %v1771, %v1772
    %v1775 = vrot.slane %v1774, 2
    %vm1776 = vcmp.lt.s32.totalorder %v1774, %v1775
    %v1777 = vsel %vm1776, %v1774, %v1775
    %v1778 = vrot.slane %v1777, 1
    %vm1779 = vcmp.lt.s32.totalorder %v1777, %v1778
    %v1780 = vsel %vm1779, %v1777, %v1778
    %1781 = vst [vmem:[#allocation2 + $0x1b] sm:$0x1] %v1780
    %v1782 = vperm.slane %v1645, 2
    %v1783 = vadd.f32 %v1782, %v39
    %v1784 = vadd.f32 %v1782, %v40
    %v1785 = vadd.f32 %v1782, %v41
    %v1786 = vadd.f32 %v1782, %v42
    %1787 = vmax.xlane.f32.xlu0 %v1783
    %v1788 = vpop.xlane.xlu0 %1787
    %1789 = vmax.xlane.f32.xlu0 %v1784
    %v1790 = vpop.xlane.xlu0 %1789
    %1791 = vmax.xlane.f32.xlu0 %v1785
    %v1792 = vpop.xlane.xlu0 %1791
    %1793 = vmax.xlane.f32.xlu0 %v1786
    %v1794 = vpop.xlane.xlu0 %1793
    %v1795 = vadd.f32 %v1757, %v80
    %v1796 = vadd.f32 %v1788, %v136
    %v1797 = vadd.f32 %v1790, %v139
    %v1798 = vadd.f32 %v1792, %v142
    %v1799 = vadd.f32 %v1794, %v145
    %1801 = vset.pattern.permute.xlu0 11
    %1802 = vperm.xlu0 %1801, %v1721
    %v1803 = vpop.permute.xlu0 %1802
    %1806 = vset.pattern.permute.xlu0 11
    %1807 = vperm.xlu0 %1806, %v1722
    %v1808 = vpop.permute.xlu0 %1807
    %1811 = vset.pattern.permute.xlu0 11
    %1812 = vperm.xlu0 %1811, %v1723
    %v1813 = vpop.permute.xlu0 %1812
    %1816 = vset.pattern.permute.xlu0 11
    %1817 = vperm.xlu0 %1816, %v1724
    %v1818 = vpop.permute.xlu0 %1817
    %v1820 = vadd.f32 %v1803, %v35
    %v1821 = vadd.f32 %v1808, %v36
    %v1822 = vadd.f32 %v1813, %v37
    %v1823 = vadd.f32 %v1818, %v38
    %v1824 = vmax.f32 %v1820, %v1821
    %v1825 = vmax.f32 %v1822, %v1823
    %v1826 = vmax.f32 %v1824, %v1825
    %v1827 = vrot.slane %v1826, 4
    %v1828 = vmax.f32 %v1826, %v1827
    %v1829 = vrot.slane %v1828, 2
    %v1830 = vmax.f32 %v1828, %v1829
    %v1831 = vrot.slane %v1830, 1
    %v1832 = vmax.f32 %v1830, %v1831
    %vm1833 = vcmp.eq.f32.partialorder %v1820, %v1832
    %vm1834 = vcmp.eq.f32.partialorder %v1821, %v1832
    %vm1835 = vcmp.eq.f32.partialorder %v1822, %v1832
    %vm1836 = vcmp.eq.f32.partialorder %v1823, %v1832
    %v1837 = vsel %vm1833, %v148, 32
    %v1838 = vsel %vm1834, %v149, 32
    %v1839 = vsel %vm1835, %v150, 32
    %v1840 = vsel %vm1836, %v151, 32
    %vm1841 = vcmp.lt.s32.totalorder %v1837, %v1838
    %v1842 = vsel %vm1841, %v1837, %v1838
    %vm1843 = vcmp.lt.s32.totalorder %v1839, %v1840
    %v1844 = vsel %vm1843, %v1839, %v1840
    %vm1845 = vcmp.lt.s32.totalorder %v1842, %v1844
    %v1846 = vsel %vm1845, %v1842, %v1844
    %v1847 = vrot.slane %v1846, 4
    %vm1848 = vcmp.lt.s32.totalorder %v1846, %v1847
    %v1849 = vsel %vm1848, %v1846, %v1847
    %v1850 = vrot.slane %v1849, 2
    %vm1851 = vcmp.lt.s32.totalorder %v1849, %v1850
    %v1852 = vsel %vm1851, %v1849, %v1850
    %v1853 = vrot.slane %v1852, 1
    %vm1854 = vcmp.lt.s32.totalorder %v1852, %v1853
    %v1855 = vsel %vm1854, %v1852, %v1853
    %1856 = vst [vmem:[#allocation2 + $0xc] sm:$0x1] %v1855
    %v1857 = vperm.slane %v1720, 3
    %v1858 = vadd.f32 %v1857, %v39
    %v1859 = vadd.f32 %v1857, %v40
    %v1860 = vadd.f32 %v1857, %v41
    %v1861 = vadd.f32 %v1857, %v42
    %1862 = vmax.xlane.f32.xlu0 %v1858
    %v1863 = vpop.xlane.xlu0 %1862
    %1864 = vmax.xlane.f32.xlu0 %v1859
    %v1865 = vpop.xlane.xlu0 %1864
    %1866 = vmax.xlane.f32.xlu0 %v1860
    %v1867 = vpop.xlane.xlu0 %1866
    %1868 = vmax.xlane.f32.xlu0 %v1861
    %v1869 = vpop.xlane.xlu0 %1868
    %v1870 = vadd.f32 %v1863, %v136
    %v1871 = vadd.f32 %v1865, %v139
    %v1872 = vadd.f32 %v1867, %v142
    %v1873 = vadd.f32 %v1869, %v145
    %1875 = vset.pattern.permute.xlu0 27
    %1876 = vperm.xlu0 %1875, %v1796
    %v1877 = vpop.permute.xlu0 %1876
    %1880 = vset.pattern.permute.xlu0 27
    %1881 = vperm.xlu0 %1880, %v1797
    %v1882 = vpop.permute.xlu0 %1881
    %1885 = vset.pattern.permute.xlu0 27
    %1886 = vperm.xlu0 %1885, %v1798
    %v1887 = vpop.permute.xlu0 %1886
    %1890 = vset.pattern.permute.xlu0 27
    %1891 = vperm.xlu0 %1890, %v1799
    %v1892 = vpop.permute.xlu0 %1891
    %v1894 = vadd.f32 %v1877, %v35
    %v1895 = vadd.f32 %v1882, %v36
    %v1896 = vadd.f32 %v1887, %v37
    %v1897 = vadd.f32 %v1892, %v38
    %v1898 = vmax.f32 %v1894, %v1895
    %v1899 = vmax.f32 %v1896, %v1897
    %v1900 = vmax.f32 %v1898, %v1899
    %v1901 = vrot.slane %v1900, 4
    %v1902 = vmax.f32 %v1900, %v1901
    %v1903 = vrot.slane %v1902, 2
    %v1904 = vmax.f32 %v1902, %v1903
    %v1905 = vrot.slane %v1904, 1
    %v1906 = vmax.f32 %v1904, %v1905
    %vm1907 = vcmp.eq.f32.partialorder %v1894, %v1906
    %vm1908 = vcmp.eq.f32.partialorder %v1895, %v1906
    %vm1909 = vcmp.eq.f32.partialorder %v1896, %v1906
    %vm1910 = vcmp.eq.f32.partialorder %v1897, %v1906
    %v1911 = vsel %vm1907, %v148, 32
    %v1912 = vsel %vm1908, %v149, 32
    %v1913 = vsel %vm1909, %v150, 32
    %v1914 = vsel %vm1910, %v151, 32
    %vm1915 = vcmp.lt.s32.totalorder %v1911, %v1912
    %v1916 = vsel %vm1915, %v1911, %v1912
    %vm1917 = vcmp.lt.s32.totalorder %v1913, %v1914
    %v1918 = vsel %vm1917, %v1913, %v1914
    %vm1919 = vcmp.lt.s32.totalorder %v1916, %v1918
    %v1920 = vsel %vm1919, %v1916, %v1918
    %v1921 = vrot.slane %v1920, 4
    %vm1922 = vcmp.lt.s32.totalorder %v1920, %v1921
    %v1923 = vsel %vm1922, %v1920, %v1921
    %v1924 = vrot.slane %v1923, 2
    %vm1925 = vcmp.lt.s32.totalorder %v1923, %v1924
    %v1926 = vsel %vm1925, %v1923, %v1924
    %v1927 = vrot.slane %v1926, 1
    %vm1928 = vcmp.lt.s32.totalorder %v1926, %v1927
    %v1929 = vsel %vm1928, %v1926, %v1927
    %1930 = vst [vmem:[#allocation2 + $0x1c] sm:$0x1] %v1929
    %v1931 = vperm.slane %v1795, 3
    %v1932 = vadd.f32 %v1931, %v39
    %v1933 = vadd.f32 %v1931, %v40
    %v1934 = vadd.f32 %v1931, %v41
    %v1935 = vadd.f32 %v1931, %v42
    %1936 = vmax.xlane.f32.xlu0 %v1932
    %v1937 = vpop.xlane.xlu0 %1936
    %1938 = vmax.xlane.f32.xlu0 %v1933
    %v1939 = vpop.xlane.xlu0 %1938
    %1940 = vmax.xlane.f32.xlu0 %v1934
    %v1941 = vpop.xlane.xlu0 %1940
    %1942 = vmax.xlane.f32.xlu0 %v1935
    %v1943 = vpop.xlane.xlu0 %1942
    %v1944 = vadd.f32 %v1937, %v136
    %v1945 = vadd.f32 %v1939, %v139
    %v1946 = vadd.f32 %v1941, %v142
    %v1947 = vadd.f32 %v1943, %v145
    %1949 = vset.pattern.permute.xlu0 12
    %1950 = vperm.xlu0 %1949, %v1870
    %v1951 = vpop.permute.xlu0 %1950
    %1954 = vset.pattern.permute.xlu0 12
    %1955 = vperm.xlu0 %1954, %v1871
    %v1956 = vpop.permute.xlu0 %1955
    %1959 = vset.pattern.permute.xlu0 12
    %1960 = vperm.xlu0 %1959, %v1872
    %v1961 = vpop.permute.xlu0 %1960
    %1964 = vset.pattern.permute.xlu0 12
    %1965 = vperm.xlu0 %1964, %v1873
    %v1966 = vpop.permute.xlu0 %1965
    %v1968 = vadd.f32 %v1951, %v35
    %v1969 = vadd.f32 %v1956, %v36
    %v1970 = vadd.f32 %v1961, %v37
    %v1971 = vadd.f32 %v1966, %v38
    %v1972 = vmax.f32 %v1968, %v1969
    %v1973 = vmax.f32 %v1970, %v1971
    %v1974 = vmax.f32 %v1972, %v1973
    %v1975 = vrot.slane %v1974, 4
    %v1976 = vmax.f32 %v1974, %v1975
    %v1977 = vrot.slane %v1976, 2
    %v1978 = vmax.f32 %v1976, %v1977
    %v1979 = vrot.slane %v1978, 1
    %v1980 = vmax.f32 %v1978, %v1979
    %vm1981 = vcmp.eq.f32.partialorder %v1968, %v1980
    %vm1982 = vcmp.eq.f32.partialorder %v1969, %v1980
    %vm1983 = vcmp.eq.f32.partialorder %v1970, %v1980
    %vm1984 = vcmp.eq.f32.partialorder %v1971, %v1980
    %v1985 = vsel %vm1981, %v148, 32
    %v1986 = vsel %vm1982, %v149, 32
    %v1987 = vsel %vm1983, %v150, 32
    %v1988 = vsel %vm1984, %v151, 32
    %vm1989 = vcmp.lt.s32.totalorder %v1985, %v1986
    %v1990 = vsel %vm1989, %v1985, %v1986
    %vm1991 = vcmp.lt.s32.totalorder %v1987, %v1988
    %v1992 = vsel %vm1991, %v1987, %v1988
    %vm1993 = vcmp.lt.s32.totalorder %v1990, %v1992
    %v1994 = vsel %vm1993, %v1990, %v1992
    %v1995 = vrot.slane %v1994, 4
    %vm1996 = vcmp.lt.s32.totalorder %v1994, %v1995
    %v1997 = vsel %vm1996, %v1994, %v1995
    %v1998 = vrot.slane %v1997, 2
    %vm1999 = vcmp.lt.s32.totalorder %v1997, %v1998
    %v2000 = vsel %vm1999, %v1997, %v1998
    %v2001 = vrot.slane %v2000, 1
    %vm2002 = vcmp.lt.s32.totalorder %v2000, %v2001
    %v2003 = vsel %vm2002, %v2000, %v2001
    %2004 = vst [vmem:[#allocation2 + $0xd] sm:$0x1] %v2003
    %v2005 = vadd.f32 %v1980, %v74
    %2007 = vset.pattern.permute.xlu0 28
    %2008 = vperm.xlu0 %2007, %v1944
    %v2009 = vpop.permute.xlu0 %2008
    %2012 = vset.pattern.permute.xlu0 28
    %2013 = vperm.xlu0 %2012, %v1945
    %v2014 = vpop.permute.xlu0 %2013
    %2017 = vset.pattern.permute.xlu0 28
    %2018 = vperm.xlu0 %2017, %v1946
    %v2019 = vpop.permute.xlu0 %2018
    %2022 = vset.pattern.permute.xlu0 28
    %2023 = vperm.xlu0 %2022, %v1947
    %v2024 = vpop.permute.xlu0 %2023
    %v2026 = vadd.f32 %v2009, %v35
    %v2027 = vadd.f32 %v2014, %v36
    %v2028 = vadd.f32 %v2019, %v37
    %v2029 = vadd.f32 %v2024, %v38
    %v2030 = vmax.f32 %v2026, %v2027
    %v2031 = vmax.f32 %v2028, %v2029
    %v2032 = vmax.f32 %v2030, %v2031
    %v2033 = vrot.slane %v2032, 4
    %v2034 = vmax.f32 %v2032, %v2033
    %v2035 = vrot.slane %v2034, 2
    %v2036 = vmax.f32 %v2034, %v2035
    %v2037 = vrot.slane %v2036, 1
    %v2038 = vmax.f32 %v2036, %v2037
    %vm2039 = vcmp.eq.f32.partialorder %v2026, %v2038
    %vm2040 = vcmp.eq.f32.partialorder %v2027, %v2038
    %vm2041 = vcmp.eq.f32.partialorder %v2028, %v2038
    %vm2042 = vcmp.eq.f32.partialorder %v2029, %v2038
    %v2043 = vsel %vm2039, %v148, 32
    %v2044 = vsel %vm2040, %v149, 32
    %v2045 = vsel %vm2041, %v150, 32
    %v2046 = vsel %vm2042, %v151, 32
    %vm2047 = vcmp.lt.s32.totalorder %v2043, %v2044
    %v2048 = vsel %vm2047, %v2043, %v2044
    %vm2049 = vcmp.lt.s32.totalorder %v2045, %v2046
    %v2050 = vsel %vm2049, %v2045, %v2046
    %vm2051 = vcmp.lt.s32.totalorder %v2048, %v2050
    %v2052 = vsel %vm2051, %v2048, %v2050
    %v2053 = vrot.slane %v2052, 4
    %vm2054 = vcmp.lt.s32.totalorder %v2052, %v2053
    %v2055 = vsel %vm2054, %v2052, %v2053
    %v2056 = vrot.slane %v2055, 2
    %vm2057 = vcmp.lt.s32.totalorder %v2055, %v2056
    %v2058 = vsel %vm2057, %v2055, %v2056
    %v2059 = vrot.slane %v2058, 1
    %vm2060 = vcmp.lt.s32.totalorder %v2058, %v2059
    %v2061 = vsel %vm2060, %v2058, %v2059
    %2062 = vst [vmem:[#allocation2 + $0x1d] sm:$0x1] %v2061
    %v2063 = vadd.f32 %v2038, %v80
    %vm2064 = vcmask 1045509
    %v2065 = vsel %vm2064, %v2005, -inf
    %2066 = vmax.xlane.f32.xlu0 %v2065
    %v2067 = vpop.xlane.xlu0 %2066
    %vm2068 = vcmp.eq.f32.partialorder %v2005, %v2067
    %v2069 = vsel %vm2068, %v153, 128
    %v2070 = vsel %vm2064, %v2069, 2147483647
    %v2071 = vand.u32 %v2070, 65535
    %v2072 = vshra.s32 %v2070, 16
    %v2073 = vcvt.s32.f32 %v2071
    %v2074 = vcvt.s32.f32 %v2072
    %2075 = vmin.xlane.f32.xlu0 %v2074
    %v2076 = vpop.xlane.xlu0 %2075
    %vm2077 = vcmp.eq.f32.partialorder %v2074, %v2076
    %v2078 = vsel %vm2077, %v2073, inf
    %2079 = vmin.xlane.f32.xlu0 %v2078
    %v2080 = vpop.xlane.xlu0 %2079
    %v2081 = vcvt.f32.s32 %v2080
    %v2082 = vcvt.f32.s32 %v2076
    %v2083 = vshll.u32 %v2082, 16
    %v2084 = vadd.s32 %v2083, %v2081
    %2085 = vst [vmem:[#allocation2 - $0x5] sm:$0x20] %v2084
    %v2086 = vsel %vm2064, %v2063, -inf
    %2087 = vmax.xlane.f32.xlu0 %v2086
    %v2088 = vpop.xlane.xlu0 %2087
    %vm2089 = vcmp.eq.f32.partialorder %v2063, %v2088
    %v2090 = vsel %vm2089, %v153, 128
    %v2091 = vsel %vm2064, %v2090, 2147483647
    %v2092 = vand.u32 %v2091, 65535
    %v2093 = vshra.s32 %v2091, 16
    %v2094 = vcvt.s32.f32 %v2092
    %v2095 = vcvt.s32.f32 %v2093
    %2096 = vmin.xlane.f32.xlu0 %v2095
    %v2097 = vpop.xlane.xlu0 %2096
    %vm2098 = vcmp.eq.f32.partialorder %v2095, %v2097
    %v2099 = vsel %vm2098, %v2094, inf
    %2100 = vmin.xlane.f32.xlu0 %v2099
    %v2101 = vpop.xlane.xlu0 %2100
    %v2102 = vcvt.f32.s32 %v2101
    %v2103 = vcvt.f32.s32 %v2097
    %v2104 = vshll.u32 %v2103, 16
    %v2105 = vadd.s32 %v2104, %v2102
    %2106 = vst [vmem:[#allocation2 + $0xb] sm:$0x20] %v2105
    // Predicated region
    $region14: #{_crf_forward.1} parent=1 // pred_check
      _
    $region15: #{_crf_forward.1} parent=1 // pred_check_branch
      %2108 = sbr.rel target = $region17
    $region16: #{_crf_forward.1} parent=1 // pred_region
      %2109 = sst [smem:[#allocation9]] [#allocation8]
      %2110 = sst [smem:[#allocation10]] [#allocation7]
    $region17: #{_crf_forward.1} parent=1 // pred_fallthru
      _
    %2112 = shalt.err (0)
    %s2114 = sshll.u32 [#allocation2], 4
    %s2115 = int_to_ptr.vmem [resolvable:$true] %s2114
    %2117 = dma.vmem_to_smem %s2115, 512, [#allocation3], [#allocation4]
    %s2118 = smul.u32 32, 1
    %s2119 = sshll.u32 %s2118, 4
    %2120 = dma.done [#allocation4], %s2119
    %2121 = sfence
    %s2122 = sld [smem:[#allocation3]]
    %s2123 = scalar_lea.smem [#allocation5], 13
    %2124 = sst [smem:[%s2123]] %s2122
    %s2125 = sshra.s32 %s2122, 7
    %s2126 = sand.u32 %s2122, 127
    %s2127 = sadd.s32 %s2125, 13
    %s2128 = smul.u32 %s2127, 128
    %s2129 = sshra.s32 %s2122, 7
    %s2130 = sand.u32 %s2122, 127
    %s2131 = sadd.s32 %s2128, %s2130
    %s2132 = sld [smem:[#allocation3 + %s2131]]
    %s2133 = scalar_lea.smem [#allocation5], 12
    %2134 = sst [smem:[%s2133]] %s2132
    %s2135 = sshra.s32 %s2132, 7
    %s2136 = sand.u32 %s2132, 127
    %s2137 = sadd.s32 %s2135, 12
    %s2138 = smul.u32 %s2137, 128
    %s2139 = sshra.s32 %s2132, 7
    %s2140 = sand.u32 %s2132, 127
    %s2141 = sadd.s32 %s2138, %s2140
    %s2142 = sld [smem:[#allocation3 + %s2141]]
    %s2143 = scalar_lea.smem [#allocation5], 11
    %2144 = sst [smem:[%s2143]] %s2142
    %s2145 = sshra.s32 %s2142, 7
    %s2146 = sand.u32 %s2142, 127
    %s2147 = sadd.s32 %s2145, 11
    %s2148 = smul.u32 %s2147, 128
    %s2149 = sshra.s32 %s2142, 7
    %s2150 = sand.u32 %s2142, 127
    %s2151 = sadd.s32 %s2148, %s2150
    %s2152 = sld [smem:[#allocation3 + %s2151]]
    %s2153 = scalar_lea.smem [#allocation5], 10
    %2154 = sst [smem:[%s2153]] %s2152
    %s2155 = sshra.s32 %s2152, 7
    %s2156 = sand.u32 %s2152, 127
    %s2157 = sadd.s32 %s2155, 10
    %s2158 = smul.u32 %s2157, 128
    %s2159 = sshra.s32 %s2152, 7
    %s2160 = sand.u32 %s2152, 127
    %s2161 = sadd.s32 %s2158, %s2160
    %s2162 = sld [smem:[#allocation3 + %s2161]]
    %s2163 = scalar_lea.smem [#allocation5], 9
    %2164 = sst [smem:[%s2163]] %s2162
    %s2165 = sshra.s32 %s2162, 7
    %s2166 = sand.u32 %s2162, 127
    %s2167 = sadd.s32 %s2165, 9
    %s2168 = smul.u32 %s2167, 128
    %s2169 = sshra.s32 %s2162, 7
    %s2170 = sand.u32 %s2162, 127
    %s2171 = sadd.s32 %s2168, %s2170
    %s2172 = sld [smem:[#allocation3 + %s2171]]
    %s2173 = scalar_lea.smem [#allocation5], 8
    %2174 = sst [smem:[%s2173]] %s2172
    %s2175 = sshra.s32 %s2172, 7
    %s2176 = sand.u32 %s2172, 127
    %s2177 = sadd.s32 %s2175, 8
    %s2178 = smul.u32 %s2177, 128
    %s2179 = sshra.s32 %s2172, 7
    %s2180 = sand.u32 %s2172, 127
    %s2181 = sadd.s32 %s2178, %s2180
    %s2182 = sld [smem:[#allocation3 + %s2181]]
    %s2183 = scalar_lea.smem [#allocation5], 7
    %2184 = sst [smem:[%s2183]] %s2182
    %s2185 = sshra.s32 %s2182, 7
    %s2186 = sand.u32 %s2182, 127
    %s2187 = sadd.s32 %s2185, 7
    %s2188 = smul.u32 %s2187, 128
    %s2189 = sshra.s32 %s2182, 7
    %s2190 = sand.u32 %s2182, 127
    %s2191 = sadd.s32 %s2188, %s2190
    %s2192 = sld [smem:[#allocation3 + %s2191]]
    %s2193 = scalar_lea.smem [#allocation5], 6
    %2194 = sst [smem:[%s2193]] %s2192
    %s2195 = sshra.s32 %s2192, 7
    %s2196 = sand.u32 %s2192, 127
    %s2197 = sadd.s32 %s2195, 6
    %s2198 = smul.u32 %s2197, 128
    %s2199 = sshra.s32 %s2192, 7
    %s2200 = sand.u32 %s2192, 127
    %s2201 = sadd.s32 %s2198, %s2200
    %s2202 = sld [smem:[#allocation3 + %s2201]]
    %s2203 = scalar_lea.smem [#allocation5], 5
    %2204 = sst [smem:[%s2203]] %s2202
    %s2205 = sshra.s32 %s2202, 7
    %s2206 = sand.u32 %s2202, 127
    %s2207 = sadd.s32 %s2205, 5
    %s2208 = smul.u32 %s2207, 128
    %s2209 = sshra.s32 %s2202, 7
    %s2210 = sand.u32 %s2202, 127
    %s2211 = sadd.s32 %s2208, %s2210
    %s2212 = sld [smem:[#allocation3 + %s2211]]
    %s2213 = scalar_lea.smem [#allocation5], 4
    %2214 = sst [smem:[%s2213]] %s2212
    %s2215 = sshra.s32 %s2212, 7
    %s2216 = sand.u32 %s2212, 127
    %s2217 = sadd.s32 %s2215, 4
    %s2218 = smul.u32 %s2217, 128
    %s2219 = sshra.s32 %s2212, 7
    %s2220 = sand.u32 %s2212, 127
    %s2221 = sadd.s32 %s2218, %s2220
    %s2222 = sld [smem:[#allocation3 + %s2221]]
    %s2223 = scalar_lea.smem [#allocation5], 3
    %2224 = sst [smem:[%s2223]] %s2222
    %s2225 = sshra.s32 %s2222, 7
    %s2226 = sand.u32 %s2222, 127
    %s2227 = sadd.s32 %s2225, 3
    %s2228 = smul.u32 %s2227, 128
    %s2229 = sshra.s32 %s2222, 7
    %s2230 = sand.u32 %s2222, 127
    %s2231 = sadd.s32 %s2228, %s2230
    %s2232 = sld [smem:[#allocation3 + %s2231]]
    %s2233 = scalar_lea.smem [#allocation5], 2
    %2234 = sst [smem:[%s2233]] %s2232
    %s2235 = sshra.s32 %s2232, 7
    %s2236 = sand.u32 %s2232, 127
    %s2237 = sadd.s32 %s2235, 2
    %s2238 = smul.u32 %s2237, 128
    %s2239 = sshra.s32 %s2232, 7
    %s2240 = sand.u32 %s2232, 127
    %s2241 = sadd.s32 %s2238, %s2240
    %s2242 = sld [smem:[#allocation3 + %s2241]]
    %s2243 = scalar_lea.smem [#allocation5], 1
    %2244 = sst [smem:[%s2243]] %s2242
    %s2245 = sshra.s32 %s2242, 7
    %s2246 = sand.u32 %s2242, 127
    %s2247 = sadd.s32 %s2245, 1
    %s2248 = smul.u32 %s2247, 128
    %s2249 = sshra.s32 %s2242, 7
    %s2250 = sand.u32 %s2242, 127
    %s2251 = sadd.s32 %s2248, %s2250
    %s2252 = sld [smem:[#allocation3 + %s2251]]
    %s2253 = scalar_lea.smem [#allocation5], 0
    %2254 = sst [smem:[%s2253]] %s2252
    %s2255 = scalar_lea.smem [#allocation5], 14
    %2256 = sst [smem:[%s2255]] 0
    %s2257 = scalar_lea.smem [#allocation5], 15
    %2258 = sst [smem:[%s2257]] 0
    %s2259 = sld [smem:[#allocation3 + $0x800]]
    %s2260 = scalar_lea.smem [#allocation5], 141
    %2261 = sst [smem:[%s2260]] %s2259
    %s2262 = sshra.s32 %s2259, 7
    %s2263 = sand.u32 %s2259, 127
    %s2264 = sadd.s32 %s2262, 29
    %s2265 = smul.u32 %s2264, 128
    %s2266 = sshra.s32 %s2259, 7
    %s2267 = sand.u32 %s2259, 127
    %s2268 = sadd.s32 %s2265, %s2267
    %s2269 = sld [smem:[#allocation3 + %s2268]]
    %s2270 = scalar_lea.smem [#allocation5], 140
    %2271 = sst [smem:[%s2270]] %s2269
    %s2272 = sshra.s32 %s2269, 7
    %s2273 = sand.u32 %s2269, 127
    %s2274 = sadd.s32 %s2272, 28
    %s2275 = smul.u32 %s2274, 128
    %s2276 = sshra.s32 %s2269, 7
    %s2277 = sand.u32 %s2269, 127
    %s2278 = sadd.s32 %s2275, %s2277
    %s2279 = sld [smem:[#allocation3 + %s2278]]
    %s2280 = scalar_lea.smem [#allocation5], 139
    %2281 = sst [smem:[%s2280]] %s2279
    %s2282 = sshra.s32 %s2279, 7
    %s2283 = sand.u32 %s2279, 127
    %s2284 = sadd.s32 %s2282, 27
    %s2285 = smul.u32 %s2284, 128
    %s2286 = sshra.s32 %s2279, 7
    %s2287 = sand.u32 %s2279, 127
    %s2288 = sadd.s32 %s2285, %s2287
    %s2289 = sld [smem:[#allocation3 + %s2288]]
    %s2290 = scalar_lea.smem [#allocation5], 138
    %2291 = sst [smem:[%s2290]] %s2289
    %s2292 = sshra.s32 %s2289, 7
    %s2293 = sand.u32 %s2289, 127
    %s2294 = sadd.s32 %s2292, 26
    %s2295 = smul.u32 %s2294, 128
    %s2296 = sshra.s32 %s2289, 7
    %s2297 = sand.u32 %s2289, 127
    %s2298 = sadd.s32 %s2295, %s2297
    %s2299 = sld [smem:[#allocation3 + %s2298]]
    %s2300 = scalar_lea.smem [#allocation5], 137
    %2301 = sst [smem:[%s2300]] %s2299
    %s2302 = sshra.s32 %s2299, 7
    %s2303 = sand.u32 %s2299, 127
    %s2304 = sadd.s32 %s2302, 25
    %s2305 = smul.u32 %s2304, 128
    %s2306 = sshra.s32 %s2299, 7
    %s2307 = sand.u32 %s2299, 127
    %s2308 = sadd.s32 %s2305, %s2307
    %s2309 = sld [smem:[#allocation3 + %s2308]]
    %s2310 = scalar_lea.smem [#allocation5], 136
    %2311 = sst [smem:[%s2310]] %s2309
    %s2312 = sshra.s32 %s2309, 7
    %s2313 = sand.u32 %s2309, 127
    %s2314 = sadd.s32 %s2312, 24
    %s2315 = smul.u32 %s2314, 128
    %s2316 = sshra.s32 %s2309, 7
    %s2317 = sand.u32 %s2309, 127
    %s2318 = sadd.s32 %s2315, %s2317
    %s2319 = sld [smem:[#allocation3 + %s2318]]
    %s2320 = scalar_lea.smem [#allocation5], 135
    %2321 = sst [smem:[%s2320]] %s2319
    %s2322 = sshra.s32 %s2319, 7
    %s2323 = sand.u32 %s2319, 127
    %s2324 = sadd.s32 %s2322, 23
    %s2325 = smul.u32 %s2324, 128
    %s2326 = sshra.s32 %s2319, 7
    %s2327 = sand.u32 %s2319, 127
    %s2328 = sadd.s32 %s2325, %s2327
    %s2329 = sld [smem:[#allocation3 + %s2328]]
    %s2330 = scalar_lea.smem [#allocation5], 134
    %2331 = sst [smem:[%s2330]] %s2329
    %s2332 = sshra.s32 %s2329, 7
    %s2333 = sand.u32 %s2329, 127
    %s2334 = sadd.s32 %s2332, 22
    %s2335 = smul.u32 %s2334, 128
    %s2336 = sshra.s32 %s2329, 7
    %s2337 = sand.u32 %s2329, 127
    %s2338 = sadd.s32 %s2335, %s2337
    %s2339 = sld [smem:[#allocation3 + %s2338]]
    %s2340 = scalar_lea.smem [#allocation5], 133
    %2341 = sst [smem:[%s2340]] %s2339
    %s2342 = sshra.s32 %s2339, 7
    %s2343 = sand.u32 %s2339, 127
    %s2344 = sadd.s32 %s2342, 21
    %s2345 = smul.u32 %s2344, 128
    %s2346 = sshra.s32 %s2339, 7
    %s2347 = sand.u32 %s2339, 127
    %s2348 = sadd.s32 %s2345, %s2347
    %s2349 = sld [smem:[#allocation3 + %s2348]]
    %s2350 = scalar_lea.smem [#allocation5], 132
    %2351 = sst [smem:[%s2350]] %s2349
    %s2352 = sshra.s32 %s2349, 7
    %s2353 = sand.u32 %s2349, 127
    %s2354 = sadd.s32 %s2352, 20
    %s2355 = smul.u32 %s2354, 128
    %s2356 = sshra.s32 %s2349, 7
    %s2357 = sand.u32 %s2349, 127
    %s2358 = sadd.s32 %s2355, %s2357
    %s2359 = sld [smem:[#allocation3 + %s2358]]
    %s2360 = scalar_lea.smem [#allocation5], 131
    %2361 = sst [smem:[%s2360]] %s2359
    %s2362 = sshra.s32 %s2359, 7
    %s2363 = sand.u32 %s2359, 127
    %s2364 = sadd.s32 %s2362, 19
    %s2365 = smul.u32 %s2364, 128
    %s2366 = sshra.s32 %s2359, 7
    %s2367 = sand.u32 %s2359, 127
    %s2368 = sadd.s32 %s2365, %s2367
    %s2369 = sld [smem:[#allocation3 + %s2368]]
    %s2370 = scalar_lea.smem [#allocation5], 130
    %2371 = sst [smem:[%s2370]] %s2369
    %s2372 = sshra.s32 %s2369, 7
    %s2373 = sand.u32 %s2369, 127
    %s2374 = sadd.s32 %s2372, 18
    %s2375 = smul.u32 %s2374, 128
    %s2376 = sshra.s32 %s2369, 7
    %s2377 = sand.u32 %s2369, 127
    %s2378 = sadd.s32 %s2375, %s2377
    %s2379 = sld [smem:[#allocation3 + %s2378]]
    %s2380 = scalar_lea.smem [#allocation5], 129
    %2381 = sst [smem:[%s2380]] %s2379
    %s2382 = sshra.s32 %s2379, 7
    %s2383 = sand.u32 %s2379, 127
    %s2384 = sadd.s32 %s2382, 17
    %s2385 = smul.u32 %s2384, 128
    %s2386 = sshra.s32 %s2379, 7
    %s2387 = sand.u32 %s2379, 127
    %s2388 = sadd.s32 %s2385, %s2387
    %s2389 = sld [smem:[#allocation3 + %s2388]]
    %s2390 = scalar_lea.smem [#allocation5], 128
    %2391 = sst [smem:[%s2390]] %s2389
    %s2392 = scalar_lea.smem [#allocation5], 142
    %2393 = sst [smem:[%s2392]] 0
    %s2394 = scalar_lea.smem [#allocation5], 143
    %2395 = sst [smem:[%s2394]] 0
    // Predicated region
    $region18: #{_crf_forward.1} parent=1 // pred_check
      _
    $region19: #{_crf_forward.1} parent=1 // pred_check_branch
      %2397 = sbr.rel (0) target = $region21
    $region20: #{_crf_forward.1} parent=1 // pred_region
      %2399 = vsyncadd [#allocation6], 0
      %s2401 = sshll.u32 %s3, 4
      %s2402 = int_to_ptr.hbm [resolvable:$true] %s2401
      %2404 = dma.smem_to_hbm [#allocation5], 32, %s2402, [#allocation6]
    $region21: #{_crf_forward.1} parent=1 // pred_fallthru
      _
    // Predicated region
    $region22: #{_crf_forward.1} parent=1 // pred_check
      _
    $region23: #{_crf_forward.1} parent=1 // pred_check_branch
      %2406 = sbr.rel (0) target = $region25
    $region24: #{_crf_forward.1} parent=1 // pred_region
      %2408 = dma.done [#allocation6], 32
    $region25: #{_crf_forward.1} parent=1 // pred_fallthru
      _
    %2409 = sfence
    %2410 = vsyncpa [#allocation6], 1
  %2411 = vsyncmov [#allocation4]
  %s2412 = vpop.sfrf %2411
  %p2413 = scmp.eq.s32.totalorder %s2412, 0
  %p2414 = pneg %p2413
  %2416 = shalt.err (%p2414)

</llo_original>
